<compile_context>
chip_gen: v7x
topology: tpu7x:2x2x1
jax: 0.10.0
libtpu: 0.0.40
codegen_flags: <defaults>
</compile_context>

<pallas_src>
import jax
import jax.numpy as jnp
from jax.experimental import pallas as pl
from jax.experimental.pallas import tpu as pltpu  # noqa: F401  (TPU backend)

# ----------------------------- small config -----------------------------------
B, S, H = 2, 8, 32          # batch, seq, hidden
NH = 4                      # attention heads
DH = H // NH                # head dim
FF = 64                     # feed-forward dim (4*H)
L = 2                       # transformer layers
VOCAB = 100
MAXPOS = 64

# Row indices inside the packed per-layer vector block (L, 8, H).
_BO, _L1G, _L1B, _B2, _L2G, _L2B = range(6)


# ----------------------------- kernel helpers ----------------------------------
def _layernorm(x, g, b, eps=1e-12):
    mu = jnp.mean(x, axis=-1, keepdims=True)
    var = jnp.mean((x - mu) ** 2, axis=-1, keepdims=True)
    return (x - mu) * jax.lax.rsqrt(var + eps) * g + b


# --------------------------- fused forward kernel ------------------------------
def fused_encoder_kernel(
        emb_ref, bias_ref, embln_ref,
        wqkv_ref, bqkv_ref, wo_ref, w1_ref, b1_ref, w2_ref, vecs_ref,
        headw_ref, headb_ref,
        hs_ref, att_ref, qa_ref, feat_ref):
    f32 = jnp.float32
    bf16 = jnp.bfloat16
    scale = 1.0 / (DH ** 0.5)

    # Embedding LayerNorm; hidden state lives as (B*S, H) for all dense math.
    eln = embln_ref[...]                                              # (2, H): [gamma; beta]
    h = _layernorm(emb_ref[...], eln[0:1], eln[1:2])                  # (B*S, H) f32
    hs_ref[0] = h

    bias = bias_ref[...]                                              # (B, 1, S) additive mask

    for l in range(L):                      # static unroll (L=2); weights indexed statically
        vl = vecs_ref[l]                    # (8, H) packed per-layer vectors (rows 0..5 used)
        hb = h.astype(bf16)

        # Fused QKV projection: one MXU matmul instead of three.
        qkv = jnp.dot(hb, wqkv_ref[l], preferred_element_type=f32) + bqkv_ref[l]   # (B*S, 3H)
        q3 = (qkv[:, :H] * scale).reshape(B, S, H)     # fold 1/sqrt(DH) into q once
        k3 = qkv[:, H:2 * H].reshape(B, S, H)
        v3 = qkv[:, 2 * H:].reshape(B, S, H)

        ctx_parts = []
        # Static head loop; each score/context matmul is batched over the full B.
        # (Full (B,NH) batching would need in-kernel 4-D transposes on data that
        #  already fits in a couple of vregs — no win at this size.)
        for hd in range(NH):
            sl = slice(hd * DH, (hd + 1) * DH)
            qh = q3[:, :, sl].astype(bf16)
            kh = k3[:, :, sl].astype(bf16)
            vh = v3[:, :, sl].astype(bf16)
            s = jnp.einsum('bqd,bkd->bqk', qh, kh,
                           preferred_element_type=f32) + bias        # (B, S, S)
            m = jnp.max(s, axis=-1, keepdims=True)
            e = jnp.exp(s - m)
            p = e * pl.reciprocal(jnp.sum(e, axis=-1, keepdims=True), approx=True)
            att_ref[l * NH + hd] = p                                  # (B, S, S) block
            ctx_parts.append(jnp.einsum('bqk,bkd->bqd', p.astype(bf16), vh,
                                        preferred_element_type=f32))
        ctx = jnp.concatenate(ctx_parts, axis=-1).reshape(B * S, H)

        attn_out = jnp.dot(ctx.astype(bf16), wo_ref[l],
                           preferred_element_type=f32) + vl[_BO:_BO + 1]
        sa = _layernorm(attn_out + h, vl[_L1G:_L1G + 1], vl[_L1B:_L1B + 1])

        ff = jnp.dot(sa.astype(bf16), w1_ref[l],
                     preferred_element_type=f32) + b1_ref[l]
        # TODO(synk): HF DistilBERT uses erf-based GELU; tanh-approximate GELU used
        # here because erf is not guaranteed to lower in Mosaic.
        ff = jax.nn.gelu(ff, approximate=True)
        ff = jnp.dot(ff.astype(bf16), w2_ref[l],
                     preferred_element_type=f32) + vl[_B2:_B2 + 1]
        h = _layernorm(ff + sa, vl[_L2G:_L2G + 1], vl[_L2B:_L2B + 1])
        hs_ref[l + 1] = h

    # Fused epilogue: [pooler | QA head] in one matmul  (B*S, H) @ (H, H+2).
    head = jnp.dot(h.astype(bf16), headw_ref[...],
                   preferred_element_type=f32) + headb_ref[...]       # (B*S, H+2)
    qa_ref[...] = head[:, H:]                                         # start/end logits
    feat_ref[...] = head[:, :H].reshape(B, S, H)[:, 0, :]             # pooled [CLS]


# ------------------------------ parameters -------------------------------------
def init_params(key):
    kw, kp, kqkv, ko, kf1, kf2, khw = jax.random.split(key, 7)
    bf16 = jnp.bfloat16

    def w(k, shape):
        return jax.random.normal(k, shape, jnp.float32) * 0.02

    ones_row = jnp.ones((1, H), jnp.float32)
    zeros_row = jnp.zeros((1, H), jnp.float32)
    # Packed per-layer vector block (padded to 8 sublanes):
    # rows = [bo, ln1_g, ln1_b, b2, ln2_g, ln2_b, pad, pad]
    vec_layer = jnp.concatenate(
        [zeros_row, ones_row, zeros_row, zeros_row, ones_row, zeros_row,
         zeros_row, zeros_row], axis=0)                               # (8, H)

    params = {
        "word_emb": w(kw, (VOCAB, H)),
        "pos_emb": w(kp, (MAXPOS, H)),
        "emb_ln": jnp.concatenate([ones_row, zeros_row], axis=0),    # (2, H) [gamma; beta]
        "w_qkv": w(kqkv, (L, H, 3 * H)).astype(bf16),                 # fused [Wq|Wk|Wv]
        "b_qkv": jnp.zeros((L, 1, 3 * H), jnp.float32),
        "w_o": w(ko, (L, H, H)).astype(bf16),
        "w_ff1": w(kf1, (L, H, FF)).astype(bf16),
        "b_ff1": jnp.zeros((L, 1, FF), jnp.float32),
        "w_ff2": w(kf2, (L, FF, H)).astype(bf16),
        "vecs": jnp.tile(vec_layer[None], (L, 1, 1)),                 # (L, 8, H)
        "head_w": w(khw, (H, H + 2)).astype(bf16),                    # [pool_w | qa_w]
        "head_b": jnp.zeros((1, H + 2), jnp.float32),                 # [pool_b | qa_b]
    }
    return params


# ------------------------------ QA loss (glue) ----------------------------------
def _qa_loss(logits, positions, ignored_index):
    pos = jnp.clip(positions, 0, ignored_index)
    valid = pos < ignored_index
    pos_c = jnp.where(valid, pos, 0)
    logp = jax.nn.log_softmax(logits, axis=-1)
    nll = -jnp.take_along_axis(logp, pos_c[:, None], axis=-1)[:, 0]
    nll = jnp.where(valid, nll, 0.0)
    denom = jnp.maximum(jnp.sum(valid.astype(jnp.float32)), 1.0)
    return jnp.sum(nll) / denom


# ------------------------------ full forward ------------------------------------
def distilbert_encoder_forward(params, x, mask=None,
                               start_positions=None, end_positions=None):
    # Embedding gather + position add is plain-JAX glue (gather has no clean
    # Pallas equivalent at this size); everything downstream is one fused kernel.
    emb = jnp.take(params["word_emb"], x, axis=0) + params["pos_emb"][:S][None, :, :]
    emb2 = emb.reshape(B * S, H).astype(jnp.float32)

    if mask is None:
        mask = jnp.ones((B, S), jnp.float32)
    # Additive attention-mask bias: 0 for keep, -1e9 for padded keys.
    bias = (mask.astype(jnp.float32) - 1.0).reshape(B, 1, S) * 1e9

    out_shape = (
        jax.ShapeDtypeStruct((L + 1, B * S, H), jnp.float32),  # hidden states
        jax.ShapeDtypeStruct((L * NH, B, S, S), jnp.float32),  # attention probs
        jax.ShapeDtypeStruct((B * S, 2), jnp.float32),         # qa logits
        jax.ShapeDtypeStruct((B, H), jnp.float32),             # pooled feat
    )

    hs_all, att_all, qa_flat, feat = pl.pallas_call(
        fused_encoder_kernel,
        out_shape=out_shape,
    )(emb2, bias, params["emb_ln"],
      params["w_qkv"], params["b_qkv"], params["w_o"],
      params["w_ff1"], params["b_ff1"], params["w_ff2"], params["vecs"],
      params["head_w"], params["head_b"])

    hs4 = hs_all.reshape(L + 1, B, S, H)
    hidden_states = tuple(hs4[i] for i in range(L + 1))
    att5 = att_all.reshape(L, NH, B, S, S).transpose(0, 2, 1, 3, 4)
    attentions = tuple(att5[i] for i in range(L))

    qa = qa_flat.reshape(B, S, 2)
    start_logits = qa[..., 0]
    end_logits = qa[..., 1]

    loss = None
    if start_positions is not None and end_positions is not None:
        loss = 0.5 * (_qa_loss(start_logits, start_positions, S)
                      + _qa_loss(end_logits, end_positions, S))

    outputs = {
        "loss": loss,
        "start_logits": start_logits,
        "end_logits": end_logits,
        "hidden_states": hidden_states,
        "attentions": attentions,
    }
    return feat, outputs


# ---------------------------------- main ----------------------------------------
if __name__ == "__main__":
    root = jax.random.PRNGKey(0)
    k_param, k_tok = jax.random.split(root)

    params = init_params(k_param)

    # Token ids and attention mask (sample 1 has 2 padded positions).
    x = jax.random.randint(k_tok, (B, S), 0, VOCAB, dtype=jnp.int32)
    mask = jnp.array([[1] * S, [1] * (S - 2) + [0, 0]], dtype=jnp.float32)
    start_positions = jnp.array([1, 2], dtype=jnp.int32)
    end_positions = jnp.array([3, 5], dtype=jnp.int32)

    fwd = jax.jit(distilbert_encoder_forward)
    feat, outputs = fwd(params, x, mask, start_positions, end_positions)

    jax.block_until_ready(feat)
    jax.block_until_ready(outputs["loss"])
    jax.block_until_ready(outputs["start_logits"])

    assert feat.shape == (B, H)
    assert outputs["start_logits"].shape == (B, S)
    assert outputs["end_logits"].shape == (B, S)
    assert len(outputs["hidden_states"]) == L + 1
    assert outputs["hidden_states"][0].shape == (B, S, H)
    assert len(outputs["attentions"]) == L
    assert outputs["attentions"][0].shape == (B, NH, S, S)
    assert bool(jnp.isfinite(outputs["loss"]))
    assert bool(jnp.all(jnp.isfinite(feat)))
    print("KERNEL_OK")
</pallas_src>

<mosaic_0001>
module attributes {stable_mosaic.version = 11 : i64} {
  func.func @fused_encoder_kernel(%arg0: memref<16x32xf32, #tpu.memory_space<vmem>>, %arg1: memref<2x1x8xf32, #tpu.memory_space<vmem>>, %arg2: memref<2x32xf32, #tpu.memory_space<vmem>>, %arg3: memref<2x32x96xbf16, #tpu.memory_space<vmem>>, %arg4: memref<2x1x96xf32, #tpu.memory_space<vmem>>, %arg5: memref<2x32x32xbf16, #tpu.memory_space<vmem>>, %arg6: memref<2x32x64xbf16, #tpu.memory_space<vmem>>, %arg7: memref<2x1x64xf32, #tpu.memory_space<vmem>>, %arg8: memref<2x64x32xbf16, #tpu.memory_space<vmem>>, %arg9: memref<2x8x32xf32, #tpu.memory_space<vmem>>, %arg10: memref<32x34xbf16, #tpu.memory_space<vmem>>, %arg11: memref<1x34xf32, #tpu.memory_space<vmem>>, %arg12: memref<3x16x32xf32, #tpu.memory_space<vmem>>, %arg13: memref<8x2x8x8xf32, #tpu.memory_space<vmem>>, %arg14: memref<16x2xf32, #tpu.memory_space<vmem>>, %arg15: memref<2x32xf32, #tpu.memory_space<vmem>>) attributes {dimension_semantics = [], scalar_prefetch = 0 : i64, scratch_operands = 0 : i64, tpu.core_type = #tpu.core_type<tc>} {
    %c0 = arith.constant 0 : index
    %c0_0 = arith.constant 0 : index
    %0 = vector.load %arg2[%c0, %c0_0] : memref<2x32xf32, #tpu.memory_space<vmem>>, vector<2x32xf32>
    %c0_1 = arith.constant 0 : index
    %c0_2 = arith.constant 0 : index
    %1 = vector.load %arg0[%c0_1, %c0_2] : memref<16x32xf32, #tpu.memory_space<vmem>>, vector<16x32xf32>
    %2 = vector.extract_strided_slice %0 {offsets = [0, 0], sizes = [1, 32], strides = [1, 1]} : vector<2x32xf32> to vector<1x32xf32>
    %3 = vector.extract_strided_slice %0 {offsets = [1, 0], sizes = [1, 32], strides = [1, 1]} : vector<2x32xf32> to vector<1x32xf32>
    %cst = arith.constant dense<0.000000e+00> : vector<16xf32>
    %4 = vector.multi_reduction <add>, %1, %cst [1] : vector<16x32xf32> to vector<16xf32>
    %5 = vector.shape_cast %4 : vector<16xf32> to vector<16x1xf32>
    %cst_3 = arith.constant 3.200000e+01 : f32
    %6 = vector.broadcast %cst_3 : f32 to vector<16x1xf32>
    %7 = arith.divf %5, %6 : vector<16x1xf32>
    %8 = vector.broadcast %7 : vector<16x1xf32> to vector<16x32xf32>
    %9 = arith.subf %1, %8 : vector<16x32xf32>
    %10 = arith.mulf %9, %9 : vector<16x32xf32>
    %cst_4 = arith.constant dense<0.000000e+00> : vector<16xf32>
    %11 = vector.multi_reduction <add>, %10, %cst_4 [1] : vector<16x32xf32> to vector<16xf32>
    %12 = vector.shape_cast %11 : vector<16xf32> to vector<16x1xf32>
    %cst_5 = arith.constant 3.200000e+01 : f32
    %13 = vector.broadcast %cst_5 : f32 to vector<16x1xf32>
    %14 = arith.divf %12, %13 : vector<16x1xf32>
    %15 = vector.broadcast %7 : vector<16x1xf32> to vector<16x32xf32>
    %16 = arith.subf %1, %15 : vector<16x32xf32>
    %cst_6 = arith.constant 9.99999996E-13 : f32
    %17 = vector.broadcast %cst_6 : f32 to vector<16x1xf32>
    %18 = arith.addf %14, %17 : vector<16x1xf32>
    %19 = math.rsqrt %18 : vector<16x1xf32>
    %20 = vector.broadcast %19 : vector<16x1xf32> to vector<16x32xf32>
    %21 = arith.mulf %16, %20 : vector<16x32xf32>
    %22 = vector.broadcast %2 : vector<1x32xf32> to vector<16x32xf32>
    %23 = arith.mulf %21, %22 : vector<16x32xf32>
    %24 = vector.broadcast %3 : vector<1x32xf32> to vector<16x32xf32>
    %25 = arith.addf %23, %24 : vector<16x32xf32>
    %c0_7 = arith.constant 0 : index
    %c0_8 = arith.constant 0 : index
    %c0_9 = arith.constant 0 : index
    %26 = vector.load %arg12[%c0_7, %c0_8, %c0_9] : memref<3x16x32xf32, #tpu.memory_space<vmem>>, vector<1x16x32xf32>
    %27 = vector.shape_cast %26 : vector<1x16x32xf32> to vector<16x32xf32>
    %28 = vector.shape_cast %25 : vector<16x32xf32> to vector<1x16x32xf32>
    tpu.vector_store %arg12[%c0_7, %c0_8, %c0_9], %28 {strides = array<i32>} : memref<3x16x32xf32, #tpu.memory_space<vmem>>, vector<1x16x32xf32>,
    %c0_10 = arith.constant 0 : index
    %c0_11 = arith.constant 0 : index
    %c0_12 = arith.constant 0 : index
    %29 = vector.load %arg1[%c0_10, %c0_11, %c0_12] : memref<2x1x8xf32, #tpu.memory_space<vmem>>, vector<2x1x8xf32>
    %c0_13 = arith.constant 0 : index
    %c0_14 = arith.constant 0 : index
    %c0_15 = arith.constant 0 : index
    %30 = vector.load %arg9[%c0_13, %c0_14, %c0_15] : memref<2x8x32xf32, #tpu.memory_space<vmem>>, vector<1x8x32xf32>
    %31 = vector.shape_cast %30 : vector<1x8x32xf32> to vector<8x32xf32>
    %32 = arith.truncf %25 : vector<16x32xf32> to vector<16x32xbf16>
    %c0_16 = arith.constant 0 : index
    %c0_17 = arith.constant 0 : index
    %c0_18 = arith.constant 0 : index
    %33 = vector.load %arg3[%c0_16, %c0_17, %c0_18] : memref<2x32x96xbf16, #tpu.memory_space<vmem>>, vector<1x32x96xbf16>
    %34 = vector.shape_cast %33 : vector<1x32x96xbf16> to vector<32x96xbf16>
    %cst_19 = arith.constant dense<0.000000e+00> : vector<16x96xf32>
    %35 = tpu.matmul %32, %34, %cst_19 {dimension_numbers = #tpu.dot_dimension_numbers<[1], [0], [0], [1], [0, 0, 1, 1], [], []>} : vector<16x32xbf16>, vector<32x96xbf16>, vector<16x96xf32> -> vector<16x96xf32>
    %c0_20 = arith.constant 0 : index
    %c0_21 = arith.constant 0 : index
    %c0_22 = arith.constant 0 : index
    %36 = vector.load %arg4[%c0_20, %c0_21, %c0_22] : memref<2x1x96xf32, #tpu.memory_space<vmem>>, vector<1x1x96xf32>
    %37 = vector.shape_cast %36 : vector<1x1x96xf32> to vector<1x96xf32>
    %38 = vector.broadcast %37 : vector<1x96xf32> to vector<16x96xf32>
    %39 = arith.addf %35, %38 : vector<16x96xf32>
    %40 = vector.extract_strided_slice %39 {offsets = [0, 0], sizes = [16, 32], strides = [1, 1]} : vector<16x96xf32> to vector<16x32xf32>
    %cst_23 = arith.constant 0.353553385 : f32
    %41 = vector.broadcast %cst_23 : f32 to vector<16x32xf32>
    %42 = arith.mulf %40, %41 : vector<16x32xf32>
    %43 = vector.shape_cast %42 : vector<16x32xf32> to vector<2x8x32xf32>
    %44 = vector.extract_strided_slice %39 {offsets = [0, 32], sizes = [16, 32], strides = [1, 1]} : vector<16x96xf32> to vector<16x32xf32>
    %45 = vector.shape_cast %44 : vector<16x32xf32> to vector<2x8x32xf32>
    %46 = vector.extract_strided_slice %39 {offsets = [0, 64], sizes = [16, 32], strides = [1, 1]} : vector<16x96xf32> to vector<16x32xf32>
    %47 = vector.shape_cast %46 : vector<16x32xf32> to vector<2x8x32xf32>
    %48 = vector.extract_strided_slice %43 {offsets = [0, 0, 0], sizes = [2, 8, 8], strides = [1, 1, 1]} : vector<2x8x32xf32> to vector<2x8x8xf32>
    %49 = arith.truncf %48 : vector<2x8x8xf32> to vector<2x8x8xbf16>
    %50 = vector.extract_strided_slice %45 {offsets = [0, 0, 0], sizes = [2, 8, 8], strides = [1, 1, 1]} : vector<2x8x32xf32> to vector<2x8x8xf32>
    %51 = arith.truncf %50 : vector<2x8x8xf32> to vector<2x8x8xbf16>
    %52 = vector.extract_strided_slice %47 {offsets = [0, 0, 0], sizes = [2, 8, 8], strides = [1, 1, 1]} : vector<2x8x32xf32> to vector<2x8x8xf32>
    %53 = arith.truncf %52 : vector<2x8x8xf32> to vector<2x8x8xbf16>
    "tpu.trace_start"() <{level = 10 : i32, message = "bqd,bkd->bqk"}> : () -> ()
    %cst_24 = arith.constant dense<0.000000e+00> : vector<2x8x8xf32>
    %54 = tpu.matmul %49, %51, %cst_24 {dimension_numbers = #tpu.dot_dimension_numbers<[2], [2], [1], [1], [0, 0, 0, 1, 1, 1], [0], [0]>} : vector<2x8x8xbf16>, vector<2x8x8xbf16>, vector<2x8x8xf32> -> vector<2x8x8xf32>
    "tpu.trace_stop"() : () -> ()
    %55 = vector.broadcast %29 : vector<2x1x8xf32> to vector<2x8x8xf32>
    %56 = arith.addf %54, %55 : vector<2x8x8xf32>
    %cst_25 = arith.constant dense<0xFF800000> : vector<2x8xf32>
    %57 = vector.multi_reduction <maximumf>, %56, %cst_25 [2] : vector<2x8x8xf32> to vector<2x8xf32>
    %58 = vector.shape_cast %57 : vector<2x8xf32> to vector<2x8x1xf32>
    %59 = vector.broadcast %58 : vector<2x8x1xf32> to vector<2x8x8xf32>
    %60 = arith.subf %56, %59 : vector<2x8x8xf32>
    %61 = math.exp %60 : vector<2x8x8xf32>
    %cst_26 = arith.constant dense<0.000000e+00> : vector<2x8xf32>
    %62 = vector.multi_reduction <add>, %61, %cst_26 [2] : vector<2x8x8xf32> to vector<2x8xf32>
    %63 = vector.shape_cast %62 : vector<2x8xf32> to vector<2x8x1xf32>
    %64 = tpu.reciprocal %63 {approx = true} : vector<2x8x1xf32> -> vector<2x8x1xf32>
    %65 = vector.broadcast %64 : vector<2x8x1xf32> to vector<2x8x8xf32>
    %66 = arith.mulf %61, %65 : vector<2x8x8xf32>
    %c0_27 = arith.constant 0 : index
    %c0_28 = arith.constant 0 : index
    %c0_29 = arith.constant 0 : index
    %c0_30 = arith.constant 0 : index
    %67 = vector.load %arg13[%c0_27, %c0_28, %c0_29, %c0_30] : memref<8x2x8x8xf32, #tpu.memory_space<vmem>>, vector<1x2x8x8xf32>
    %68 = vector.shape_cast %67 : vector<1x2x8x8xf32> to vector<2x8x8xf32>
    %69 = vector.shape_cast %66 : vector<2x8x8xf32> to vector<1x2x8x8xf32>
    tpu.vector_store %arg13[%c0_27, %c0_28, %c0_29, %c0_30], %69 {strides = array<i32>} : memref<8x2x8x8xf32, #tpu.memory_space<vmem>>, vector<1x2x8x8xf32>,
    %70 = arith.truncf %66 : vector<2x8x8xf32> to vector<2x8x8xbf16>
    "tpu.trace_start"() <{level = 10 : i32, message = "bqk,bkd->bqd"}> : () -> ()
    %cst_31 = arith.constant dense<0.000000e+00> : vector<2x8x8xf32>
    %71 = tpu.matmul %70, %53, %cst_31 {dimension_numbers = #tpu.dot_dimension_numbers<[2], [1], [1], [2], [0, 0, 0, 1, 1, 2], [0], [0]>} : vector<2x8x8xbf16>, vector<2x8x8xbf16>, vector<2x8x8xf32> -> vector<2x8x8xf32>
    "tpu.trace_stop"() : () -> ()
    %72 = vector.extract_strided_slice %43 {offsets = [0, 0, 8], sizes = [2, 8, 8], strides = [1, 1, 1]} : vector<2x8x32xf32> to vector<2x8x8xf32>
    %73 = arith.truncf %72 : vector<2x8x8xf32> to vector<2x8x8xbf16>
    %74 = vector.extract_strided_slice %45 {offsets = [0, 0, 8], sizes = [2, 8, 8], strides = [1, 1, 1]} : vector<2x8x32xf32> to vector<2x8x8xf32>
    %75 = arith.truncf %74 : vector<2x8x8xf32> to vector<2x8x8xbf16>
    %76 = vector.extract_strided_slice %47 {offsets = [0, 0, 8], sizes = [2, 8, 8], strides = [1, 1, 1]} : vector<2x8x32xf32> to vector<2x8x8xf32>
    %77 = arith.truncf %76 : vector<2x8x8xf32> to vector<2x8x8xbf16>
    "tpu.trace_start"() <{level = 10 : i32, message = "bqd,bkd->bqk"}> : () -> ()
    %cst_32 = arith.constant dense<0.000000e+00> : vector<2x8x8xf32>
    %78 = tpu.matmul %73, %75, %cst_32 {dimension_numbers = #tpu.dot_dimension_numbers<[2], [2], [1], [1], [0, 0, 0, 1, 1, 1], [0], [0]>} : vector<2x8x8xbf16>, vector<2x8x8xbf16>, vector<2x8x8xf32> -> vector<2x8x8xf32>
    "tpu.trace_stop"() : () -> ()
    %79 = vector.broadcast %29 : vector<2x1x8xf32> to vector<2x8x8xf32>
    %80 = arith.addf %78, %79 : vector<2x8x8xf32>
    %cst_33 = arith.constant dense<0xFF800000> : vector<2x8xf32>
    %81 = vector.multi_reduction <maximumf>, %80, %cst_33 [2] : vector<2x8x8xf32> to vector<2x8xf32>
    %82 = vector.shape_cast %81 : vector<2x8xf32> to vector<2x8x1xf32>
    %83 = vector.broadcast %82 : vector<2x8x1xf32> to vector<2x8x8xf32>
    %84 = arith.subf %80, %83 : vector<2x8x8xf32>
    %85 = math.exp %84 : vector<2x8x8xf32>
    %cst_34 = arith.constant dense<0.000000e+00> : vector<2x8xf32>
    %86 = vector.multi_reduction <add>, %85, %cst_34 [2] : vector<2x8x8xf32> to vector<2x8xf32>
    %87 = vector.shape_cast %86 : vector<2x8xf32> to vector<2x8x1xf32>
    %88 = tpu.reciprocal %87 {approx = true} : vector<2x8x1xf32> -> vector<2x8x1xf32>
    %89 = vector.broadcast %88 : vector<2x8x1xf32> to vector<2x8x8xf32>
    %90 = arith.mulf %85, %89 : vector<2x8x8xf32>
    %c1 = arith.constant 1 : index
    %c0_35 = arith.constant 0 : index
    %c0_36 = arith.constant 0 : index
    %c0_37 = arith.constant 0 : index
    %91 = vector.load %arg13[%c1, %c0_35, %c0_36, %c0_37] : memref<8x2x8x8xf32, #tpu.memory_space<vmem>>, vector<1x2x8x8xf32>
    %92 = vector.shape_cast %91 : vector<1x2x8x8xf32> to vector<2x8x8xf32>
    %93 = vector.shape_cast %90 : vector<2x8x8xf32> to vector<1x2x8x8xf32>
    tpu.vector_store %arg13[%c1, %c0_35, %c0_36, %c0_37], %93 {strides = array<i32>} : memref<8x2x8x8xf32, #tpu.memory_space<vmem>>, vector<1x2x8x8xf32>,
    %94 = arith.truncf %90 : vector<2x8x8xf32> to vector<2x8x8xbf16>
    "tpu.trace_start"() <{level = 10 : i32, message = "bqk,bkd->bqd"}> : () -> ()
    %cst_38 = arith.constant dense<0.000000e+00> : vector<2x8x8xf32>
    %95 = tpu.matmul %94, %77, %cst_38 {dimension_numbers = #tpu.dot_dimension_numbers<[2], [1], [1], [2], [0, 0, 0, 1, 1, 2], [0], [0]>} : vector<2x8x8xbf16>, vector<2x8x8xbf16>, vector<2x8x8xf32> -> vector<2x8x8xf32>
    "tpu.trace_stop"() : () -> ()
    %96 = vector.extract_strided_slice %43 {offsets = [0, 0, 16], sizes = [2, 8, 8], strides = [1, 1, 1]} : vector<2x8x32xf32> to vector<2x8x8xf32>
    %97 = arith.truncf %96 : vector<2x8x8xf32> to vector<2x8x8xbf16>
    %98 = vector.extract_strided_slice %45 {offsets = [0, 0, 16], sizes = [2, 8, 8], strides = [1, 1, 1]} : vector<2x8x32xf32> to vector<2x8x8xf32>
    %99 = arith.truncf %98 : vector<2x8x8xf32> to vector<2x8x8xbf16>
    %100 = vector.extract_strided_slice %47 {offsets = [0, 0, 16], sizes = [2, 8, 8], strides = [1, 1, 1]} : vector<2x8x32xf32> to vector<2x8x8xf32>
    %101 = arith.truncf %100 : vector<2x8x8xf32> to vector<2x8x8xbf16>
    "tpu.trace_start"() <{level = 10 : i32, message = "bqd,bkd->bqk"}> : () -> ()
    %cst_39 = arith.constant dense<0.000000e+00> : vector<2x8x8xf32>
    %102 = tpu.matmul %97, %99, %cst_39 {dimension_numbers = #tpu.dot_dimension_numbers<[2], [2], [1], [1], [0, 0, 0, 1, 1, 1], [0], [0]>} : vector<2x8x8xbf16>, vector<2x8x8xbf16>, vector<2x8x8xf32> -> vector<2x8x8xf32>
    "tpu.trace_stop"() : () -> ()
    %103 = vector.broadcast %29 : vector<2x1x8xf32> to vector<2x8x8xf32>
    %104 = arith.addf %102, %103 : vector<2x8x8xf32>
    %cst_40 = arith.constant dense<0xFF800000> : vector<2x8xf32>
    %105 = vector.multi_reduction <maximumf>, %104, %cst_40 [2] : vector<2x8x8xf32> to vector<2x8xf32>
    %106 = vector.shape_cast %105 : vector<2x8xf32> to vector<2x8x1xf32>
    %107 = vector.broadcast %106 : vector<2x8x1xf32> to vector<2x8x8xf32>
    %108 = arith.subf %104, %107 : vector<2x8x8xf32>
    %109 = math.exp %108 : vector<2x8x8xf32>
    %cst_41 = arith.constant dense<0.000000e+00> : vector<2x8xf32>
    %110 = vector.multi_reduction <add>, %109, %cst_41 [2] : vector<2x8x8xf32> to vector<2x8xf32>
    %111 = vector.shape_cast %110 : vector<2x8xf32> to vector<2x8x1xf32>
    %112 = tpu.reciprocal %111 {approx = true} : vector<2x8x1xf32> -> vector<2x8x1xf32>
    %113 = vector.broadcast %112 : vector<2x8x1xf32> to vector<2x8x8xf32>
    %114 = arith.mulf %109, %113 : vector<2x8x8xf32>
    %c2 = arith.constant 2 : index
    %c0_42 = arith.constant 0 : index
    %c0_43 = arith.constant 0 : index
    %c0_44 = arith.constant 0 : index
    %115 = vector.load %arg13[%c2, %c0_42, %c0_43, %c0_44] : memref<8x2x8x8xf32, #tpu.memory_space<vmem>>, vector<1x2x8x8xf32>
    %116 = vector.shape_cast %115 : vector<1x2x8x8xf32> to vector<2x8x8xf32>
    %117 = vector.shape_cast %114 : vector<2x8x8xf32> to vector<1x2x8x8xf32>
    tpu.vector_store %arg13[%c2, %c0_42, %c0_43, %c0_44], %117 {strides = array<i32>} : memref<8x2x8x8xf32, #tpu.memory_space<vmem>>, vector<1x2x8x8xf32>,
    %118 = arith.truncf %114 : vector<2x8x8xf32> to vector<2x8x8xbf16>
    "tpu.trace_start"() <{level = 10 : i32, message = "bqk,bkd->bqd"}> : () -> ()
    %cst_45 = arith.constant dense<0.000000e+00> : vector<2x8x8xf32>
    %119 = tpu.matmul %118, %101, %cst_45 {dimension_numbers = #tpu.dot_dimension_numbers<[2], [1], [1], [2], [0, 0, 0, 1, 1, 2], [0], [0]>} : vector<2x8x8xbf16>, vector<2x8x8xbf16>, vector<2x8x8xf32> -> vector<2x8x8xf32>
    "tpu.trace_stop"() : () -> ()
    %120 = vector.extract_strided_slice %43 {offsets = [0, 0, 24], sizes = [2, 8, 8], strides = [1, 1, 1]} : vector<2x8x32xf32> to vector<2x8x8xf32>
    %121 = arith.truncf %120 : vector<2x8x8xf32> to vector<2x8x8xbf16>
    %122 = vector.extract_strided_slice %45 {offsets = [0, 0, 24], sizes = [2, 8, 8], strides = [1, 1, 1]} : vector<2x8x32xf32> to vector<2x8x8xf32>
    %123 = arith.truncf %122 : vector<2x8x8xf32> to vector<2x8x8xbf16>
    %124 = vector.extract_strided_slice %47 {offsets = [0, 0, 24], sizes = [2, 8, 8], strides = [1, 1, 1]} : vector<2x8x32xf32> to vector<2x8x8xf32>
    %125 = arith.truncf %124 : vector<2x8x8xf32> to vector<2x8x8xbf16>
    "tpu.trace_start"() <{level = 10 : i32, message = "bqd,bkd->bqk"}> : () -> ()
    %cst_46 = arith.constant dense<0.000000e+00> : vector<2x8x8xf32>
    %126 = tpu.matmul %121, %123, %cst_46 {dimension_numbers = #tpu.dot_dimension_numbers<[2], [2], [1], [1], [0, 0, 0, 1, 1, 1], [0], [0]>} : vector<2x8x8xbf16>, vector<2x8x8xbf16>, vector<2x8x8xf32> -> vector<2x8x8xf32>
    "tpu.trace_stop"() : () -> ()
    %127 = vector.broadcast %29 : vector<2x1x8xf32> to vector<2x8x8xf32>
    %128 = arith.addf %126, %127 : vector<2x8x8xf32>
    %cst_47 = arith.constant dense<0xFF800000> : vector<2x8xf32>
    %129 = vector.multi_reduction <maximumf>, %128, %cst_47 [2] : vector<2x8x8xf32> to vector<2x8xf32>
    %130 = vector.shape_cast %129 : vector<2x8xf32> to vector<2x8x1xf32>
    %131 = vector.broadcast %130 : vector<2x8x1xf32> to vector<2x8x8xf32>
    %132 = arith.subf %128, %131 : vector<2x8x8xf32>
    %133 = math.exp %132 : vector<2x8x8xf32>
    %cst_48 = arith.constant dense<0.000000e+00> : vector<2x8xf32>
    %134 = vector.multi_reduction <add>, %133, %cst_48 [2] : vector<2x8x8xf32> to vector<2x8xf32>
    %135 = vector.shape_cast %134 : vector<2x8xf32> to vector<2x8x1xf32>
    %136 = tpu.reciprocal %135 {approx = true} : vector<2x8x1xf32> -> vector<2x8x1xf32>
    %137 = vector.broadcast %136 : vector<2x8x1xf32> to vector<2x8x8xf32>
    %138 = arith.mulf %133, %137 : vector<2x8x8xf32>
    %c3 = arith.constant 3 : index
    %c0_49 = arith.constant 0 : index
    %c0_50 = arith.constant 0 : index
    %c0_51 = arith.constant 0 : index
    %139 = vector.load %arg13[%c3, %c0_49, %c0_50, %c0_51] : memref<8x2x8x8xf32, #tpu.memory_space<vmem>>, vector<1x2x8x8xf32>
    %140 = vector.shape_cast %139 : vector<1x2x8x8xf32> to vector<2x8x8xf32>
    %141 = vector.shape_cast %138 : vector<2x8x8xf32> to vector<1x2x8x8xf32>
    tpu.vector_store %arg13[%c3, %c0_49, %c0_50, %c0_51], %141 {strides = array<i32>} : memref<8x2x8x8xf32, #tpu.memory_space<vmem>>, vector<1x2x8x8xf32>,
    %142 = arith.truncf %138 : vector<2x8x8xf32> to vector<2x8x8xbf16>
    "tpu.trace_start"() <{level = 10 : i32, message = "bqk,bkd->bqd"}> : () -> ()
    %cst_52 = arith.constant dense<0.000000e+00> : vector<2x8x8xf32>
    %143 = tpu.matmul %142, %125, %cst_52 {dimension_numbers = #tpu.dot_dimension_numbers<[2], [1], [1], [2], [0, 0, 0, 1, 1, 2], [0], [0]>} : vector<2x8x8xbf16>, vector<2x8x8xbf16>, vector<2x8x8xf32> -> vector<2x8x8xf32>
    "tpu.trace_stop"() : () -> ()
    %144 = tpu.concatenate %71, %95, %119, %143 in 2 : vector<2x8x8xf32>, vector<2x8x8xf32>, vector<2x8x8xf32>, vector<2x8x8xf32> -> vector<2x8x32xf32>
    %145 = vector.shape_cast %144 : vector<2x8x32xf32> to vector<16x32xf32>
    %146 = arith.truncf %145 : vector<16x32xf32> to vector<16x32xbf16>
    %c0_53 = arith.constant 0 : index
    %c0_54 = arith.constant 0 : index
    %c0_55 = arith.constant 0 : index
    %147 = vector.load %arg5[%c0_53, %c0_54, %c0_55] : memref<2x32x32xbf16, #tpu.memory_space<vmem>>, vector<1x32x32xbf16>
    %148 = vector.shape_cast %147 : vector<1x32x32xbf16> to vector<32x32xbf16>
    %cst_56 = arith.constant dense<0.000000e+00> : vector<16x32xf32>
    %149 = tpu.matmul %146, %148, %cst_56 {dimension_numbers = #tpu.dot_dimension_numbers<[1], [0], [0], [1], [0, 0, 1, 1], [], []>} : vector<16x32xbf16>, vector<32x32xbf16>, vector<16x32xf32> -> vector<16x32xf32>
    %150 = vector.extract_strided_slice %31 {offsets = [0, 0], sizes = [1, 32], strides = [1, 1]} : vector<8x32xf32> to vector<1x32xf32>
    %151 = vector.broadcast %150 : vector<1x32xf32> to vector<16x32xf32>
    %152 = arith.addf %149, %151 : vector<16x32xf32>
    %153 = arith.addf %152, %25 : vector<16x32xf32>
    %154 = vector.extract_strided_slice %31 {offsets = [1, 0], sizes = [1, 32], strides = [1, 1]} : vector<8x32xf32> to vector<1x32xf32>
    %155 = vector.extract_strided_slice %31 {offsets = [2, 0], sizes = [1, 32], strides = [1, 1]} : vector<8x32xf32> to vector<1x32xf32>
    %cst_57 = arith.constant dense<0.000000e+00> : vector<16xf32>
    %156 = vector.multi_reduction <add>, %153, %cst_57 [1] : vector<16x32xf32> to vector<16xf32>
    %157 = vector.shape_cast %156 : vector<16xf32> to vector<16x1xf32>
    %cst_58 = arith.constant 3.200000e+01 : f32
    %158 = vector.broadcast %cst_58 : f32 to vector<16x1xf32>
    %159 = arith.divf %157, %158 : vector<16x1xf32>
    %160 = vector.broadcast %159 : vector<16x1xf32> to vector<16x32xf32>
    %161 = arith.subf %153, %160 : vector<16x32xf32>
    %162 = arith.mulf %161, %161 : vector<16x32xf32>
    %cst_59 = arith.constant dense<0.000000e+00> : vector<16xf32>
    %163 = vector.multi_reduction <add>, %162, %cst_59 [1] : vector<16x32xf32> to vector<16xf32>
    %164 = vector.shape_cast %163 : vector<16xf32> to vector<16x1xf32>
    %cst_60 = arith.constant 3.200000e+01 : f32
    %165 = vector.broadcast %cst_60 : f32 to vector<16x1xf32>
    %166 = arith.divf %164, %165 : vector<16x1xf32>
    %167 = vector.broadcast %159 : vector<16x1xf32> to vector<16x32xf32>
    %168 = arith.subf %153, %167 : vector<16x32xf32>
    %cst_61 = arith.constant 9.99999996E-13 : f32
    %169 = vector.broadcast %cst_61 : f32 to vector<16x1xf32>
    %170 = arith.addf %166, %169 : vector<16x1xf32>
    %171 = math.rsqrt %170 : vector<16x1xf32>
    %172 = vector.broadcast %171 : vector<16x1xf32> to vector<16x32xf32>
    %173 = arith.mulf %168, %172 : vector<16x32xf32>
    %174 = vector.broadcast %154 : vector<1x32xf32> to vector<16x32xf32>
    %175 = arith.mulf %173, %174 : vector<16x32xf32>
    %176 = vector.broadcast %155 : vector<1x32xf32> to vector<16x32xf32>
    %177 = arith.addf %175, %176 : vector<16x32xf32>
    %178 = arith.truncf %177 : vector<16x32xf32> to vector<16x32xbf16>
    %c0_62 = arith.constant 0 : index
    %c0_63 = arith.constant 0 : index
    %c0_64 = arith.constant 0 : index
    %179 = vector.load %arg6[%c0_62, %c0_63, %c0_64] : memref<2x32x64xbf16, #tpu.memory_space<vmem>>, vector<1x32x64xbf16>
    %180 = vector.shape_cast %179 : vector<1x32x64xbf16> to vector<32x64xbf16>
    %cst_65 = arith.constant dense<0.000000e+00> : vector<16x64xf32>
    %181 = tpu.matmul %178, %180, %cst_65 {dimension_numbers = #tpu.dot_dimension_numbers<[1], [0], [0], [1], [0, 0, 1, 1], [], []>} : vector<16x32xbf16>, vector<32x64xbf16>, vector<16x64xf32> -> vector<16x64xf32>
    %c0_66 = arith.constant 0 : index
    %c0_67 = arith.constant 0 : index
    %c0_68 = arith.constant 0 : index
    %182 = vector.load %arg7[%c0_66, %c0_67, %c0_68] : memref<2x1x64xf32, #tpu.memory_space<vmem>>, vector<1x1x64xf32>
    %183 = vector.shape_cast %182 : vector<1x1x64xf32> to vector<1x64xf32>
    %184 = vector.broadcast %183 : vector<1x64xf32> to vector<16x64xf32>
    %185 = arith.addf %181, %184 : vector<16x64xf32>
    %186 = arith.mulf %185, %185 : vector<16x64xf32>
    %187 = arith.mulf %185, %186 : vector<16x64xf32>
    %cst_69 = arith.constant 4.471500e-02 : f32
    %188 = vector.broadcast %cst_69 : f32 to vector<16x64xf32>
    %189 = arith.mulf %188, %187 : vector<16x64xf32>
    %190 = arith.addf %185, %189 : vector<16x64xf32>
    %cst_70 = arith.constant 0.797884583 : f32
    %191 = vector.broadcast %cst_70 : f32 to vector<16x64xf32>
    %192 = arith.mulf %191, %190 : vector<16x64xf32>
    %193 = math.tanh %192 : vector<16x64xf32>
    %cst_71 = arith.constant 1.000000e+00 : f32
    %194 = vector.broadcast %cst_71 : f32 to vector<16x64xf32>
    %195 = arith.addf %194, %193 : vector<16x64xf32>
    %cst_72 = arith.constant 5.000000e-01 : f32
    %196 = vector.broadcast %cst_72 : f32 to vector<16x64xf32>
    %197 = arith.mulf %196, %195 : vector<16x64xf32>
    %198 = arith.mulf %185, %197 : vector<16x64xf32>
    %199 = arith.truncf %198 : vector<16x64xf32> to vector<16x64xbf16>
    %c0_73 = arith.constant 0 : index
    %c0_74 = arith.constant 0 : index
    %c0_75 = arith.constant 0 : index
    %200 = vector.load %arg8[%c0_73, %c0_74, %c0_75] : memref<2x64x32xbf16, #tpu.memory_space<vmem>>, vector<1x64x32xbf16>
    %201 = vector.shape_cast %200 : vector<1x64x32xbf16> to vector<64x32xbf16>
    %cst_76 = arith.constant dense<0.000000e+00> : vector<16x32xf32>
    %202 = tpu.matmul %199, %201, %cst_76 {dimension_numbers = #tpu.dot_dimension_numbers<[1], [0], [0], [1], [0, 0, 1, 1], [], []>} : vector<16x64xbf16>, vector<64x32xbf16>, vector<16x32xf32> -> vector<16x32xf32>
    %203 = vector.extract_strided_slice %31 {offsets = [3, 0], sizes = [1, 32], strides = [1, 1]} : vector<8x32xf32> to vector<1x32xf32>
    %204 = vector.broadcast %203 : vector<1x32xf32> to vector<16x32xf32>
    %205 = arith.addf %202, %204 : vector<16x32xf32>
    %206 = arith.addf %205, %177 : vector<16x32xf32>
    %207 = vector.extract_strided_slice %31 {offsets = [4, 0], sizes = [1, 32], strides = [1, 1]} : vector<8x32xf32> to vector<1x32xf32>
    %208 = vector.extract_strided_slice %31 {offsets = [5, 0], sizes = [1, 32], strides = [1, 1]} : vector<8x32xf32> to vector<1x32xf32>
    %cst_77 = arith.constant dense<0.000000e+00> : vector<16xf32>
    %209 = vector.multi_reduction <add>, %206, %cst_77 [1] : vector<16x32xf32> to vector<16xf32>
    %210 = vector.shape_cast %209 : vector<16xf32> to vector<16x1xf32>
    %cst_78 = arith.constant 3.200000e+01 : f32
    %211 = vector.broadcast %cst_78 : f32 to vector<16x1xf32>
    %212 = arith.divf %210, %211 : vector<16x1xf32>
    %213 = vector.broadcast %212 : vector<16x1xf32> to vector<16x32xf32>
    %214 = arith.subf %206, %213 : vector<16x32xf32>
    %215 = arith.mulf %214, %214 : vector<16x32xf32>
    %cst_79 = arith.constant dense<0.000000e+00> : vector<16xf32>
    %216 = vector.multi_reduction <add>, %215, %cst_79 [1] : vector<16x32xf32> to vector<16xf32>
    %217 = vector.shape_cast %216 : vector<16xf32> to vector<16x1xf32>
    %cst_80 = arith.constant 3.200000e+01 : f32
    %218 = vector.broadcast %cst_80 : f32 to vector<16x1xf32>
    %219 = arith.divf %217, %218 : vector<16x1xf32>
    %220 = vector.broadcast %212 : vector<16x1xf32> to vector<16x32xf32>
    %221 = arith.subf %206, %220 : vector<16x32xf32>
    %cst_81 = arith.constant 9.99999996E-13 : f32
    %222 = vector.broadcast %cst_81 : f32 to vector<16x1xf32>
    %223 = arith.addf %219, %222 : vector<16x1xf32>
    %224 = math.rsqrt %223 : vector<16x1xf32>
    %225 = vector.broadcast %224 : vector<16x1xf32> to vector<16x32xf32>
    %226 = arith.mulf %221, %225 : vector<16x32xf32>
    %227 = vector.broadcast %207 : vector<1x32xf32> to vector<16x32xf32>
    %228 = arith.mulf %226, %227 : vector<16x32xf32>
    %229 = vector.broadcast %208 : vector<1x32xf32> to vector<16x32xf32>
    %230 = arith.addf %228, %229 : vector<16x32xf32>
    %c1_82 = arith.constant 1 : index
    %c0_83 = arith.constant 0 : index
    %c0_84 = arith.constant 0 : index
    %231 = vector.load %arg12[%c1_82, %c0_83, %c0_84] : memref<3x16x32xf32, #tpu.memory_space<vmem>>, vector<1x16x32xf32>
    %232 = vector.shape_cast %231 : vector<1x16x32xf32> to vector<16x32xf32>
    %233 = vector.shape_cast %230 : vector<16x32xf32> to vector<1x16x32xf32>
    tpu.vector_store %arg12[%c1_82, %c0_83, %c0_84], %233 {strides = array<i32>} : memref<3x16x32xf32, #tpu.memory_space<vmem>>, vector<1x16x32xf32>,
    %c1_85 = arith.constant 1 : index
    %c0_86 = arith.constant 0 : index
    %c0_87 = arith.constant 0 : index
    %234 = vector.load %arg9[%c1_85, %c0_86, %c0_87] : memref<2x8x32xf32, #tpu.memory_space<vmem>>, vector<1x8x32xf32>
    %235 = vector.shape_cast %234 : vector<1x8x32xf32> to vector<8x32xf32>
    %236 = arith.truncf %230 : vector<16x32xf32> to vector<16x32xbf16>
    %c1_88 = arith.constant 1 : index
    %c0_89 = arith.constant 0 : index
    %c0_90 = arith.constant 0 : index
    %237 = vector.load %arg3[%c1_88, %c0_89, %c0_90] : memref<2x32x96xbf16, #tpu.memory_space<vmem>>, vector<1x32x96xbf16>
    %238 = vector.shape_cast %237 : vector<1x32x96xbf16> to vector<32x96xbf16>
    %cst_91 = arith.constant dense<0.000000e+00> : vector<16x96xf32>
    %239 = tpu.matmul %236, %238, %cst_91 {dimension_numbers = #tpu.dot_dimension_numbers<[1], [0], [0], [1], [0, 0, 1, 1], [], []>} : vector<16x32xbf16>, vector<32x96xbf16>, vector<16x96xf32> -> vector<16x96xf32>
    %c1_92 = arith.constant 1 : index
    %c0_93 = arith.constant 0 : index
    %c0_94 = arith.constant 0 : index
    %240 = vector.load %arg4[%c1_92, %c0_93, %c0_94] : memref<2x1x96xf32, #tpu.memory_space<vmem>>, vector<1x1x96xf32>
    %241 = vector.shape_cast %240 : vector<1x1x96xf32> to vector<1x96xf32>
    %242 = vector.broadcast %241 : vector<1x96xf32> to vector<16x96xf32>
    %243 = arith.addf %239, %242 : vector<16x96xf32>
    %244 = vector.extract_strided_slice %243 {offsets = [0, 0], sizes = [16, 32], strides = [1, 1]} : vector<16x96xf32> to vector<16x32xf32>
    %cst_95 = arith.constant 0.353553385 : f32
    %245 = vector.broadcast %cst_95 : f32 to vector<16x32xf32>
    %246 = arith.mulf %244, %245 : vector<16x32xf32>
    %247 = vector.shape_cast %246 : vector<16x32xf32> to vector<2x8x32xf32>
    %248 = vector.extract_strided_slice %243 {offsets = [0, 32], sizes = [16, 32], strides = [1, 1]} : vector<16x96xf32> to vector<16x32xf32>
    %249 = vector.shape_cast %248 : vector<16x32xf32> to vector<2x8x32xf32>
    %250 = vector.extract_strided_slice %243 {offsets = [0, 64], sizes = [16, 32], strides = [1, 1]} : vector<16x96xf32> to vector<16x32xf32>
    %251 = vector.shape_cast %250 : vector<16x32xf32> to vector<2x8x32xf32>
    %252 = vector.extract_strided_slice %247 {offsets = [0, 0, 0], sizes = [2, 8, 8], strides = [1, 1, 1]} : vector<2x8x32xf32> to vector<2x8x8xf32>
    %253 = arith.truncf %252 : vector<2x8x8xf32> to vector<2x8x8xbf16>
    %254 = vector.extract_strided_slice %249 {offsets = [0, 0, 0], sizes = [2, 8, 8], strides = [1, 1, 1]} : vector<2x8x32xf32> to vector<2x8x8xf32>
    %255 = arith.truncf %254 : vector<2x8x8xf32> to vector<2x8x8xbf16>
    %256 = vector.extract_strided_slice %251 {offsets = [0, 0, 0], sizes = [2, 8, 8], strides = [1, 1, 1]} : vector<2x8x32xf32> to vector<2x8x8xf32>
    %257 = arith.truncf %256 : vector<2x8x8xf32> to vector<2x8x8xbf16>
    "tpu.trace_start"() <{level = 10 : i32, message = "bqd,bkd->bqk"}> : () -> ()
    %cst_96 = arith.constant dense<0.000000e+00> : vector<2x8x8xf32>
    %258 = tpu.matmul %253, %255, %cst_96 {dimension_numbers = #tpu.dot_dimension_numbers<[2], [2], [1], [1], [0, 0, 0, 1, 1, 1], [0], [0]>} : vector<2x8x8xbf16>, vector<2x8x8xbf16>, vector<2x8x8xf32> -> vector<2x8x8xf32>
    "tpu.trace_stop"() : () -> ()
    %259 = vector.broadcast %29 : vector<2x1x8xf32> to vector<2x8x8xf32>
    %260 = arith.addf %258, %259 : vector<2x8x8xf32>
    %cst_97 = arith.constant dense<0xFF800000> : vector<2x8xf32>
    %261 = vector.multi_reduction <maximumf>, %260, %cst_97 [2] : vector<2x8x8xf32> to vector<2x8xf32>
    %262 = vector.shape_cast %261 : vector<2x8xf32> to vector<2x8x1xf32>
    %263 = vector.broadcast %262 : vector<2x8x1xf32> to vector<2x8x8xf32>
    %264 = arith.subf %260, %263 : vector<2x8x8xf32>
    %265 = math.exp %264 : vector<2x8x8xf32>
    %cst_98 = arith.constant dense<0.000000e+00> : vector<2x8xf32>
    %266 = vector.multi_reduction <add>, %265, %cst_98 [2] : vector<2x8x8xf32> to vector<2x8xf32>
    %267 = vector.shape_cast %266 : vector<2x8xf32> to vector<2x8x1xf32>
    %268 = tpu.reciprocal %267 {approx = true} : vector<2x8x1xf32> -> vector<2x8x1xf32>
    %269 = vector.broadcast %268 : vector<2x8x1xf32> to vector<2x8x8xf32>
    %270 = arith.mulf %265, %269 : vector<2x8x8xf32>
    %c4 = arith.constant 4 : index
    %c0_99 = arith.constant 0 : index
    %c0_100 = arith.constant 0 : index
    %c0_101 = arith.constant 0 : index
    %271 = vector.load %arg13[%c4, %c0_99, %c0_100, %c0_101] : memref<8x2x8x8xf32, #tpu.memory_space<vmem>>, vector<1x2x8x8xf32>
    %272 = vector.shape_cast %271 : vector<1x2x8x8xf32> to vector<2x8x8xf32>
    %273 = vector.shape_cast %270 : vector<2x8x8xf32> to vector<1x2x8x8xf32>
    tpu.vector_store %arg13[%c4, %c0_99, %c0_100, %c0_101], %273 {strides = array<i32>} : memref<8x2x8x8xf32, #tpu.memory_space<vmem>>, vector<1x2x8x8xf32>,
    %274 = arith.truncf %270 : vector<2x8x8xf32> to vector<2x8x8xbf16>
    "tpu.trace_start"() <{level = 10 : i32, message = "bqk,bkd->bqd"}> : () -> ()
    %cst_102 = arith.constant dense<0.000000e+00> : vector<2x8x8xf32>
    %275 = tpu.matmul %274, %257, %cst_102 {dimension_numbers = #tpu.dot_dimension_numbers<[2], [1], [1], [2], [0, 0, 0, 1, 1, 2], [0], [0]>} : vector<2x8x8xbf16>, vector<2x8x8xbf16>, vector<2x8x8xf32> -> vector<2x8x8xf32>
    "tpu.trace_stop"() : () -> ()
    %276 = vector.extract_strided_slice %247 {offsets = [0, 0, 8], sizes = [2, 8, 8], strides = [1, 1, 1]} : vector<2x8x32xf32> to vector<2x8x8xf32>
    %277 = arith.truncf %276 : vector<2x8x8xf32> to vector<2x8x8xbf16>
    %278 = vector.extract_strided_slice %249 {offsets = [0, 0, 8], sizes = [2, 8, 8], strides = [1, 1, 1]} : vector<2x8x32xf32> to vector<2x8x8xf32>
    %279 = arith.truncf %278 : vector<2x8x8xf32> to vector<2x8x8xbf16>
    %280 = vector.extract_strided_slice %251 {offsets = [0, 0, 8], sizes = [2, 8, 8], strides = [1, 1, 1]} : vector<2x8x32xf32> to vector<2x8x8xf32>
    %281 = arith.truncf %280 : vector<2x8x8xf32> to vector<2x8x8xbf16>
    "tpu.trace_start"() <{level = 10 : i32, message = "bqd,bkd->bqk"}> : () -> ()
    %cst_103 = arith.constant dense<0.000000e+00> : vector<2x8x8xf32>
    %282 = tpu.matmul %277, %279, %cst_103 {dimension_numbers = #tpu.dot_dimension_numbers<[2], [2], [1], [1], [0, 0, 0, 1, 1, 1], [0], [0]>} : vector<2x8x8xbf16>, vector<2x8x8xbf16>, vector<2x8x8xf32> -> vector<2x8x8xf32>
    "tpu.trace_stop"() : () -> ()
    %283 = vector.broadcast %29 : vector<2x1x8xf32> to vector<2x8x8xf32>
    %284 = arith.addf %282, %283 : vector<2x8x8xf32>
    %cst_104 = arith.constant dense<0xFF800000> : vector<2x8xf32>
    %285 = vector.multi_reduction <maximumf>, %284, %cst_104 [2] : vector<2x8x8xf32> to vector<2x8xf32>
    %286 = vector.shape_cast %285 : vector<2x8xf32> to vector<2x8x1xf32>
    %287 = vector.broadcast %286 : vector<2x8x1xf32> to vector<2x8x8xf32>
    %288 = arith.subf %284, %287 : vector<2x8x8xf32>
    %289 = math.exp %288 : vector<2x8x8xf32>
    %cst_105 = arith.constant dense<0.000000e+00> : vector<2x8xf32>
    %290 = vector.multi_reduction <add>, %289, %cst_105 [2] : vector<2x8x8xf32> to vector<2x8xf32>
    %291 = vector.shape_cast %290 : vector<2x8xf32> to vector<2x8x1xf32>
    %292 = tpu.reciprocal %291 {approx = true} : vector<2x8x1xf32> -> vector<2x8x1xf32>
    %293 = vector.broadcast %292 : vector<2x8x1xf32> to vector<2x8x8xf32>
    %294 = arith.mulf %289, %293 : vector<2x8x8xf32>
    %c5 = arith.constant 5 : index
    %c0_106 = arith.constant 0 : index
    %c0_107 = arith.constant 0 : index
    %c0_108 = arith.constant 0 : index
    %295 = vector.load %arg13[%c5, %c0_106, %c0_107, %c0_108] : memref<8x2x8x8xf32, #tpu.memory_space<vmem>>, vector<1x2x8x8xf32>
    %296 = vector.shape_cast %295 : vector<1x2x8x8xf32> to vector<2x8x8xf32>
    %297 = vector.shape_cast %294 : vector<2x8x8xf32> to vector<1x2x8x8xf32>
    tpu.vector_store %arg13[%c5, %c0_106, %c0_107, %c0_108], %297 {strides = array<i32>} : memref<8x2x8x8xf32, #tpu.memory_space<vmem>>, vector<1x2x8x8xf32>,
    %298 = arith.truncf %294 : vector<2x8x8xf32> to vector<2x8x8xbf16>
    "tpu.trace_start"() <{level = 10 : i32, message = "bqk,bkd->bqd"}> : () -> ()
    %cst_109 = arith.constant dense<0.000000e+00> : vector<2x8x8xf32>
    %299 = tpu.matmul %298, %281, %cst_109 {dimension_numbers = #tpu.dot_dimension_numbers<[2], [1], [1], [2], [0, 0, 0, 1, 1, 2], [0], [0]>} : vector<2x8x8xbf16>, vector<2x8x8xbf16>, vector<2x8x8xf32> -> vector<2x8x8xf32>
    "tpu.trace_stop"() : () -> ()
    %300 = vector.extract_strided_slice %247 {offsets = [0, 0, 16], sizes = [2, 8, 8], strides = [1, 1, 1]} : vector<2x8x32xf32> to vector<2x8x8xf32>
    %301 = arith.truncf %300 : vector<2x8x8xf32> to vector<2x8x8xbf16>
    %302 = vector.extract_strided_slice %249 {offsets = [0, 0, 16], sizes = [2, 8, 8], strides = [1, 1, 1]} : vector<2x8x32xf32> to vector<2x8x8xf32>
    %303 = arith.truncf %302 : vector<2x8x8xf32> to vector<2x8x8xbf16>
    %304 = vector.extract_strided_slice %251 {offsets = [0, 0, 16], sizes = [2, 8, 8], strides = [1, 1, 1]} : vector<2x8x32xf32> to vector<2x8x8xf32>
    %305 = arith.truncf %304 : vector<2x8x8xf32> to vector<2x8x8xbf16>
    "tpu.trace_start"() <{level = 10 : i32, message = "bqd,bkd->bqk"}> : () -> ()
    %cst_110 = arith.constant dense<0.000000e+00> : vector<2x8x8xf32>
    %306 = tpu.matmul %301, %303, %cst_110 {dimension_numbers = #tpu.dot_dimension_numbers<[2], [2], [1], [1], [0, 0, 0, 1, 1, 1], [0], [0]>} : vector<2x8x8xbf16>, vector<2x8x8xbf16>, vector<2x8x8xf32> -> vector<2x8x8xf32>
    "tpu.trace_stop"() : () -> ()
    %307 = vector.broadcast %29 : vector<2x1x8xf32> to vector<2x8x8xf32>
    %308 = arith.addf %306, %307 : vector<2x8x8xf32>
    %cst_111 = arith.constant dense<0xFF800000> : vector<2x8xf32>
    %309 = vector.multi_reduction <maximumf>, %308, %cst_111 [2] : vector<2x8x8xf32> to vector<2x8xf32>
    %310 = vector.shape_cast %309 : vector<2x8xf32> to vector<2x8x1xf32>
    %311 = vector.broadcast %310 : vector<2x8x1xf32> to vector<2x8x8xf32>
    %312 = arith.subf %308, %311 : vector<2x8x8xf32>
    %313 = math.exp %312 : vector<2x8x8xf32>
    %cst_112 = arith.constant dense<0.000000e+00> : vector<2x8xf32>
    %314 = vector.multi_reduction <add>, %313, %cst_112 [2] : vector<2x8x8xf32> to vector<2x8xf32>
    %315 = vector.shape_cast %314 : vector<2x8xf32> to vector<2x8x1xf32>
    %316 = tpu.reciprocal %315 {approx = true} : vector<2x8x1xf32> -> vector<2x8x1xf32>
    %317 = vector.broadcast %316 : vector<2x8x1xf32> to vector<2x8x8xf32>
    %318 = arith.mulf %313, %317 : vector<2x8x8xf32>
    %c6 = arith.constant 6 : index
    %c0_113 = arith.constant 0 : index
    %c0_114 = arith.constant 0 : index
    %c0_115 = arith.constant 0 : index
    %319 = vector.load %arg13[%c6, %c0_113, %c0_114, %c0_115] : memref<8x2x8x8xf32, #tpu.memory_space<vmem>>, vector<1x2x8x8xf32>
    %320 = vector.shape_cast %319 : vector<1x2x8x8xf32> to vector<2x8x8xf32>
    %321 = vector.shape_cast %318 : vector<2x8x8xf32> to vector<1x2x8x8xf32>
    tpu.vector_store %arg13[%c6, %c0_113, %c0_114, %c0_115], %321 {strides = array<i32>} : memref<8x2x8x8xf32, #tpu.memory_space<vmem>>, vector<1x2x8x8xf32>,
    %322 = arith.truncf %318 : vector<2x8x8xf32> to vector<2x8x8xbf16>
    "tpu.trace_start"() <{level = 10 : i32, message = "bqk,bkd->bqd"}> : () -> ()
    %cst_116 = arith.constant dense<0.000000e+00> : vector<2x8x8xf32>
    %323 = tpu.matmul %322, %305, %cst_116 {dimension_numbers = #tpu.dot_dimension_numbers<[2], [1], [1], [2], [0, 0, 0, 1, 1, 2], [0], [0]>} : vector<2x8x8xbf16>, vector<2x8x8xbf16>, vector<2x8x8xf32> -> vector<2x8x8xf32>
    "tpu.trace_stop"() : () -> ()
    %324 = vector.extract_strided_slice %247 {offsets = [0, 0, 24], sizes = [2, 8, 8], strides = [1, 1, 1]} : vector<2x8x32xf32> to vector<2x8x8xf32>
    %325 = arith.truncf %324 : vector<2x8x8xf32> to vector<2x8x8xbf16>
    %326 = vector.extract_strided_slice %249 {offsets = [0, 0, 24], sizes = [2, 8, 8], strides = [1, 1, 1]} : vector<2x8x32xf32> to vector<2x8x8xf32>
    %327 = arith.truncf %326 : vector<2x8x8xf32> to vector<2x8x8xbf16>
    %328 = vector.extract_strided_slice %251 {offsets = [0, 0, 24], sizes = [2, 8, 8], strides = [1, 1, 1]} : vector<2x8x32xf32> to vector<2x8x8xf32>
    %329 = arith.truncf %328 : vector<2x8x8xf32> to vector<2x8x8xbf16>
    "tpu.trace_start"() <{level = 10 : i32, message = "bqd,bkd->bqk"}> : () -> ()
    %cst_117 = arith.constant dense<0.000000e+00> : vector<2x8x8xf32>
    %330 = tpu.matmul %325, %327, %cst_117 {dimension_numbers = #tpu.dot_dimension_numbers<[2], [2], [1], [1], [0, 0, 0, 1, 1, 1], [0], [0]>} : vector<2x8x8xbf16>, vector<2x8x8xbf16>, vector<2x8x8xf32> -> vector<2x8x8xf32>
    "tpu.trace_stop"() : () -> ()
    %331 = vector.broadcast %29 : vector<2x1x8xf32> to vector<2x8x8xf32>
    %332 = arith.addf %330, %331 : vector<2x8x8xf32>
    %cst_118 = arith.constant dense<0xFF800000> : vector<2x8xf32>
    %333 = vector.multi_reduction <maximumf>, %332, %cst_118 [2] : vector<2x8x8xf32> to vector<2x8xf32>
    %334 = vector.shape_cast %333 : vector<2x8xf32> to vector<2x8x1xf32>
    %335 = vector.broadcast %334 : vector<2x8x1xf32> to vector<2x8x8xf32>
    %336 = arith.subf %332, %335 : vector<2x8x8xf32>
    %337 = math.exp %336 : vector<2x8x8xf32>
    %cst_119 = arith.constant dense<0.000000e+00> : vector<2x8xf32>
    %338 = vector.multi_reduction <add>, %337, %cst_119 [2] : vector<2x8x8xf32> to vector<2x8xf32>
    %339 = vector.shape_cast %338 : vector<2x8xf32> to vector<2x8x1xf32>
    %340 = tpu.reciprocal %339 {approx = true} : vector<2x8x1xf32> -> vector<2x8x1xf32>
    %341 = vector.broadcast %340 : vector<2x8x1xf32> to vector<2x8x8xf32>
    %342 = arith.mulf %337, %341 : vector<2x8x8xf32>
    %c7 = arith.constant 7 : index
    %c0_120 = arith.constant 0 : index
    %c0_121 = arith.constant 0 : index
    %c0_122 = arith.constant 0 : index
    %343 = vector.load %arg13[%c7, %c0_120, %c0_121, %c0_122] : memref<8x2x8x8xf32, #tpu.memory_space<vmem>>, vector<1x2x8x8xf32>
    %344 = vector.shape_cast %343 : vector<1x2x8x8xf32> to vector<2x8x8xf32>
    %345 = vector.shape_cast %342 : vector<2x8x8xf32> to vector<1x2x8x8xf32>
    tpu.vector_store %arg13[%c7, %c0_120, %c0_121, %c0_122], %345 {strides = array<i32>} : memref<8x2x8x8xf32, #tpu.memory_space<vmem>>, vector<1x2x8x8xf32>,
    %346 = arith.truncf %342 : vector<2x8x8xf32> to vector<2x8x8xbf16>
    "tpu.trace_start"() <{level = 10 : i32, message = "bqk,bkd->bqd"}> : () -> ()
    %cst_123 = arith.constant dense<0.000000e+00> : vector<2x8x8xf32>
    %347 = tpu.matmul %346, %329, %cst_123 {dimension_numbers = #tpu.dot_dimension_numbers<[2], [1], [1], [2], [0, 0, 0, 1, 1, 2], [0], [0]>} : vector<2x8x8xbf16>, vector<2x8x8xbf16>, vector<2x8x8xf32> -> vector<2x8x8xf32>
    "tpu.trace_stop"() : () -> ()
    %348 = tpu.concatenate %275, %299, %323, %347 in 2 : vector<2x8x8xf32>, vector<2x8x8xf32>, vector<2x8x8xf32>, vector<2x8x8xf32> -> vector<2x8x32xf32>
    %349 = vector.shape_cast %348 : vector<2x8x32xf32> to vector<16x32xf32>
    %350 = arith.truncf %349 : vector<16x32xf32> to vector<16x32xbf16>
    %c1_124 = arith.constant 1 : index
    %c0_125 = arith.constant 0 : index
    %c0_126 = arith.constant 0 : index
    %351 = vector.load %arg5[%c1_124, %c0_125, %c0_126] : memref<2x32x32xbf16, #tpu.memory_space<vmem>>, vector<1x32x32xbf16>
    %352 = vector.shape_cast %351 : vector<1x32x32xbf16> to vector<32x32xbf16>
    %cst_127 = arith.constant dense<0.000000e+00> : vector<16x32xf32>
    %353 = tpu.matmul %350, %352, %cst_127 {dimension_numbers = #tpu.dot_dimension_numbers<[1], [0], [0], [1], [0, 0, 1, 1], [], []>} : vector<16x32xbf16>, vector<32x32xbf16>, vector<16x32xf32> -> vector<16x32xf32>
    %354 = vector.extract_strided_slice %235 {offsets = [0, 0], sizes = [1, 32], strides = [1, 1]} : vector<8x32xf32> to vector<1x32xf32>
    %355 = vector.broadcast %354 : vector<1x32xf32> to vector<16x32xf32>
    %356 = arith.addf %353, %355 : vector<16x32xf32>
    %357 = arith.addf %356, %230 : vector<16x32xf32>
    %358 = vector.extract_strided_slice %235 {offsets = [1, 0], sizes = [1, 32], strides = [1, 1]} : vector<8x32xf32> to vector<1x32xf32>
    %359 = vector.extract_strided_slice %235 {offsets = [2, 0], sizes = [1, 32], strides = [1, 1]} : vector<8x32xf32> to vector<1x32xf32>
    %cst_128 = arith.constant dense<0.000000e+00> : vector<16xf32>
    %360 = vector.multi_reduction <add>, %357, %cst_128 [1] : vector<16x32xf32> to vector<16xf32>
    %361 = vector.shape_cast %360 : vector<16xf32> to vector<16x1xf32>
    %cst_129 = arith.constant 3.200000e+01 : f32
    %362 = vector.broadcast %cst_129 : f32 to vector<16x1xf32>
    %363 = arith.divf %361, %362 : vector<16x1xf32>
    %364 = vector.broadcast %363 : vector<16x1xf32> to vector<16x32xf32>
    %365 = arith.subf %357, %364 : vector<16x32xf32>
    %366 = arith.mulf %365, %365 : vector<16x32xf32>
    %cst_130 = arith.constant dense<0.000000e+00> : vector<16xf32>
    %367 = vector.multi_reduction <add>, %366, %cst_130 [1] : vector<16x32xf32> to vector<16xf32>
    %368 = vector.shape_cast %367 : vector<16xf32> to vector<16x1xf32>
    %cst_131 = arith.constant 3.200000e+01 : f32
    %369 = vector.broadcast %cst_131 : f32 to vector<16x1xf32>
    %370 = arith.divf %368, %369 : vector<16x1xf32>
    %371 = vector.broadcast %363 : vector<16x1xf32> to vector<16x32xf32>
    %372 = arith.subf %357, %371 : vector<16x32xf32>
    %cst_132 = arith.constant 9.99999996E-13 : f32
    %373 = vector.broadcast %cst_132 : f32 to vector<16x1xf32>
    %374 = arith.addf %370, %373 : vector<16x1xf32>
    %375 = math.rsqrt %374 : vector<16x1xf32>
    %376 = vector.broadcast %375 : vector<16x1xf32> to vector<16x32xf32>
    %377 = arith.mulf %372, %376 : vector<16x32xf32>
    %378 = vector.broadcast %358 : vector<1x32xf32> to vector<16x32xf32>
    %379 = arith.mulf %377, %378 : vector<16x32xf32>
    %380 = vector.broadcast %359 : vector<1x32xf32> to vector<16x32xf32>
    %381 = arith.addf %379, %380 : vector<16x32xf32>
    %382 = arith.truncf %381 : vector<16x32xf32> to vector<16x32xbf16>
    %c1_133 = arith.constant 1 : index
    %c0_134 = arith.constant 0 : index
    %c0_135 = arith.constant 0 : index
    %383 = vector.load %arg6[%c1_133, %c0_134, %c0_135] : memref<2x32x64xbf16, #tpu.memory_space<vmem>>, vector<1x32x64xbf16>
    %384 = vector.shape_cast %383 : vector<1x32x64xbf16> to vector<32x64xbf16>
    %cst_136 = arith.constant dense<0.000000e+00> : vector<16x64xf32>
    %385 = tpu.matmul %382, %384, %cst_136 {dimension_numbers = #tpu.dot_dimension_numbers<[1], [0], [0], [1], [0, 0, 1, 1], [], []>} : vector<16x32xbf16>, vector<32x64xbf16>, vector<16x64xf32> -> vector<16x64xf32>
    %c1_137 = arith.constant 1 : index
    %c0_138 = arith.constant 0 : index
    %c0_139 = arith.constant 0 : index
    %386 = vector.load %arg7[%c1_137, %c0_138, %c0_139] : memref<2x1x64xf32, #tpu.memory_space<vmem>>, vector<1x1x64xf32>
    %387 = vector.shape_cast %386 : vector<1x1x64xf32> to vector<1x64xf32>
    %388 = vector.broadcast %387 : vector<1x64xf32> to vector<16x64xf32>
    %389 = arith.addf %385, %388 : vector<16x64xf32>
    %390 = arith.mulf %389, %389 : vector<16x64xf32>
    %391 = arith.mulf %389, %390 : vector<16x64xf32>
    %cst_140 = arith.constant 4.471500e-02 : f32
    %392 = vector.broadcast %cst_140 : f32 to vector<16x64xf32>
    %393 = arith.mulf %392, %391 : vector<16x64xf32>
    %394 = arith.addf %389, %393 : vector<16x64xf32>
    %cst_141 = arith.constant 0.797884583 : f32
    %395 = vector.broadcast %cst_141 : f32 to vector<16x64xf32>
    %396 = arith.mulf %395, %394 : vector<16x64xf32>
    %397 = math.tanh %396 : vector<16x64xf32>
    %cst_142 = arith.constant 1.000000e+00 : f32
    %398 = vector.broadcast %cst_142 : f32 to vector<16x64xf32>
    %399 = arith.addf %398, %397 : vector<16x64xf32>
    %cst_143 = arith.constant 5.000000e-01 : f32
    %400 = vector.broadcast %cst_143 : f32 to vector<16x64xf32>
    %401 = arith.mulf %400, %399 : vector<16x64xf32>
    %402 = arith.mulf %389, %401 : vector<16x64xf32>
    %403 = arith.truncf %402 : vector<16x64xf32> to vector<16x64xbf16>
    %c1_144 = arith.constant 1 : index
    %c0_145 = arith.constant 0 : index
    %c0_146 = arith.constant 0 : index
    %404 = vector.load %arg8[%c1_144, %c0_145, %c0_146] : memref<2x64x32xbf16, #tpu.memory_space<vmem>>, vector<1x64x32xbf16>
    %405 = vector.shape_cast %404 : vector<1x64x32xbf16> to vector<64x32xbf16>
    %cst_147 = arith.constant dense<0.000000e+00> : vector<16x32xf32>
    %406 = tpu.matmul %403, %405, %cst_147 {dimension_numbers = #tpu.dot_dimension_numbers<[1], [0], [0], [1], [0, 0, 1, 1], [], []>} : vector<16x64xbf16>, vector<64x32xbf16>, vector<16x32xf32> -> vector<16x32xf32>
    %407 = vector.extract_strided_slice %235 {offsets = [3, 0], sizes = [1, 32], strides = [1, 1]} : vector<8x32xf32> to vector<1x32xf32>
    %408 = vector.broadcast %407 : vector<1x32xf32> to vector<16x32xf32>
    %409 = arith.addf %406, %408 : vector<16x32xf32>
    %410 = arith.addf %409, %381 : vector<16x32xf32>
    %411 = vector.extract_strided_slice %235 {offsets = [4, 0], sizes = [1, 32], strides = [1, 1]} : vector<8x32xf32> to vector<1x32xf32>
    %412 = vector.extract_strided_slice %235 {offsets = [5, 0], sizes = [1, 32], strides = [1, 1]} : vector<8x32xf32> to vector<1x32xf32>
    %cst_148 = arith.constant dense<0.000000e+00> : vector<16xf32>
    %413 = vector.multi_reduction <add>, %410, %cst_148 [1] : vector<16x32xf32> to vector<16xf32>
    %414 = vector.shape_cast %413 : vector<16xf32> to vector<16x1xf32>
    %cst_149 = arith.constant 3.200000e+01 : f32
    %415 = vector.broadcast %cst_149 : f32 to vector<16x1xf32>
    %416 = arith.divf %414, %415 : vector<16x1xf32>
    %417 = vector.broadcast %416 : vector<16x1xf32> to vector<16x32xf32>
    %418 = arith.subf %410, %417 : vector<16x32xf32>
    %419 = arith.mulf %418, %418 : vector<16x32xf32>
    %cst_150 = arith.constant dense<0.000000e+00> : vector<16xf32>
    %420 = vector.multi_reduction <add>, %419, %cst_150 [1] : vector<16x32xf32> to vector<16xf32>
    %421 = vector.shape_cast %420 : vector<16xf32> to vector<16x1xf32>
    %cst_151 = arith.constant 3.200000e+01 : f32
    %422 = vector.broadcast %cst_151 : f32 to vector<16x1xf32>
    %423 = arith.divf %421, %422 : vector<16x1xf32>
    %424 = vector.broadcast %416 : vector<16x1xf32> to vector<16x32xf32>
    %425 = arith.subf %410, %424 : vector<16x32xf32>
    %cst_152 = arith.constant 9.99999996E-13 : f32
    %426 = vector.broadcast %cst_152 : f32 to vector<16x1xf32>
    %427 = arith.addf %423, %426 : vector<16x1xf32>
    %428 = math.rsqrt %427 : vector<16x1xf32>
    %429 = vector.broadcast %428 : vector<16x1xf32> to vector<16x32xf32>
    %430 = arith.mulf %425, %429 : vector<16x32xf32>
    %431 = vector.broadcast %411 : vector<1x32xf32> to vector<16x32xf32>
    %432 = arith.mulf %430, %431 : vector<16x32xf32>
    %433 = vector.broadcast %412 : vector<1x32xf32> to vector<16x32xf32>
    %434 = arith.addf %432, %433 : vector<16x32xf32>
    %c2_153 = arith.constant 2 : index
    %c0_154 = arith.constant 0 : index
    %c0_155 = arith.constant 0 : index
    %435 = vector.load %arg12[%c2_153, %c0_154, %c0_155] : memref<3x16x32xf32, #tpu.memory_space<vmem>>, vector<1x16x32xf32>
    %436 = vector.shape_cast %435 : vector<1x16x32xf32> to vector<16x32xf32>
    %437 = vector.shape_cast %434 : vector<16x32xf32> to vector<1x16x32xf32>
    tpu.vector_store %arg12[%c2_153, %c0_154, %c0_155], %437 {strides = array<i32>} : memref<3x16x32xf32, #tpu.memory_space<vmem>>, vector<1x16x32xf32>,
    %438 = arith.truncf %434 : vector<16x32xf32> to vector<16x32xbf16>
    %c0_156 = arith.constant 0 : index
    %c0_157 = arith.constant 0 : index
    %439 = vector.load %arg10[%c0_156, %c0_157] : memref<32x34xbf16, #tpu.memory_space<vmem>>, vector<32x34xbf16>
    %cst_158 = arith.constant dense<0.000000e+00> : vector<16x34xf32>
    %440 = tpu.matmul %438, %439, %cst_158 {dimension_numbers = #tpu.dot_dimension_numbers<[1], [0], [0], [1], [0, 0, 1, 1], [], []>} : vector<16x32xbf16>, vector<32x34xbf16>, vector<16x34xf32> -> vector<16x34xf32>
    %c0_159 = arith.constant 0 : index
    %c0_160 = arith.constant 0 : index
    %441 = vector.load %arg11[%c0_159, %c0_160] : memref<1x34xf32, #tpu.memory_space<vmem>>, vector<1x34xf32>
    %442 = vector.broadcast %441 : vector<1x34xf32> to vector<16x34xf32>
    %443 = arith.addf %440, %442 : vector<16x34xf32>
    %444 = vector.extract_strided_slice %443 {offsets = [0, 32], sizes = [16, 2], strides = [1, 1]} : vector<16x34xf32> to vector<16x2xf32>
    %c0_161 = arith.constant 0 : index
    %c0_162 = arith.constant 0 : index
    %445 = vector.load %arg14[%c0_161, %c0_162] : memref<16x2xf32, #tpu.memory_space<vmem>>, vector<16x2xf32>
    tpu.vector_store %arg14[%c0_161, %c0_162], %444 {strides = array<i32>} : memref<16x2xf32, #tpu.memory_space<vmem>>, vector<16x2xf32>,
    %446 = vector.extract_strided_slice %443 {offsets = [0, 0], sizes = [16, 32], strides = [1, 1]} : vector<16x34xf32> to vector<16x32xf32>
    %447 = vector.shape_cast %446 : vector<16x32xf32> to vector<2x8x32xf32>
    %448 = vector.extract_strided_slice %447 {offsets = [0, 0, 0], sizes = [2, 1, 32], strides = [1, 1, 1]} : vector<2x8x32xf32> to vector<2x1x32xf32>
    %449 = vector.shape_cast %448 : vector<2x1x32xf32> to vector<2x32xf32>
    %c0_163 = arith.constant 0 : index
    %c0_164 = arith.constant 0 : index
    %450 = vector.load %arg15[%c0_163, %c0_164] : memref<2x32xf32, #tpu.memory_space<vmem>>, vector<2x32xf32>
    tpu.vector_store %arg15[%c0_163, %c0_164], %449 {strides = array<i32>} : memref<2x32xf32, #tpu.memory_space<vmem>>, vector<2x32xf32>,
    return
  }
}

</mosaic_0001>

<llo_original>
// kernel: distilbert_encoder_forward.1
$region0: #{distilbert_encoder_forward.1}
  #allocation0 [shape = 'u32[]', space=smem, size = 0x4, offset = 0x4, fixed_abs, tag = 'smem constant byte address 0x4 - core index']
  #allocation1 [shape = 'u32[144,128]{1,0:T(1,128)}', space=vmem, size = 0x12000, scoped, tag = 'internal scratch']
  %s0 = inlined_call_operand.vmem [shape: f32[16,32], index: 0, kind: input, shape index: {}]
  %s1 = inlined_call_operand.vmem [shape: f32[2,1,8], index: 1, kind: input, shape index: {}]
  %s2 = inlined_call_operand.vmem [shape: f32[2,32], index: 2, kind: input, shape index: {}]
  %s3 = inlined_call_operand.vmem [shape: bf16[2,32,96], index: 3, kind: input, shape index: {}]
  %s4 = inlined_call_operand.vmem [shape: f32[2,1,96], index: 4, kind: input, shape index: {}]
  %s5 = inlined_call_operand.vmem [shape: bf16[2,32,32], index: 5, kind: input, shape index: {}]
  %s6 = inlined_call_operand.vmem [shape: bf16[2,32,64], index: 6, kind: input, shape index: {}]
  %s7 = inlined_call_operand.vmem [shape: f32[2,1,64], index: 7, kind: input, shape index: {}]
  %s8 = inlined_call_operand.vmem [shape: bf16[2,64,32], index: 8, kind: input, shape index: {}]
  %s9 = inlined_call_operand.vmem [shape: f32[2,8,32], index: 9, kind: input, shape index: {}]
  %s10 = inlined_call_operand.vmem [shape: bf16[32,34], index: 10, kind: input, shape index: {}]
  %s11 = inlined_call_operand.vmem [shape: f32[1,34], index: 11, kind: input, shape index: {}]
  %s12 = inlined_call_operand.vmem [shape: f32[3,16,32], index: 12, kind: output, shape index: {0}]
  %s13 = inlined_call_operand.vmem [shape: f32[8,2,8,8], index: 13, kind: output, shape index: {1}]
  %s14 = inlined_call_operand.vmem [shape: f32[16,2], index: 14, kind: output, shape index: {2}]
  %s15 = inlined_call_operand.hbm [shape: f32[2,32], index: 15, kind: output, shape index: {3}]
  %16 = xla_tuple %s12, %s13, %s14, %s15
  %s17 = sld [smem:[#allocation0]]
  $region82: #{distilbert_encoder_forward.1} parent=0
    _
  %s19 = ssub.s32 1, %s17
  %s20 = scalar_select 0, %s19, %s17
  $region1: #{distilbert_encoder_forward.1} parent=0
    #allocation2 [shape = 'u8[1024]{0}', space=vmem, size = 0x400, scoped, tag = 'output window, operand 3, single buffered']
    #allocation3 [shape = 's32[1]{0}', space=sflag, size = 0x4, scoped, tag = 'scoped memory for distilbert_encoder_forward.1']
    %21 = vsyncpa [#allocation3], 0
    // Predicated region
    $region2: #{distilbert_encoder_forward.1} parent=1 // pred_check
      _
    $region3: #{distilbert_encoder_forward.1} parent=1 // pred_check_branch
      %23 = sbr.rel (0) target = $region5
    $region4: #{distilbert_encoder_forward.1} parent=1 // pred_region
      _
    $region5: #{distilbert_encoder_forward.1} parent=1 // pred_fallthru
      _
    // Predicated region
    $region6: #{distilbert_encoder_forward.1} parent=1 // pred_check
      _
    $region7: #{distilbert_encoder_forward.1} parent=1 // pred_check_branch
      %25 = sbr.rel (0) target = $region9
    $region8: #{distilbert_encoder_forward.1} parent=1 // pred_region
      _
    $region9: #{distilbert_encoder_forward.1} parent=1 // pred_fallthru
      _
    // Predicated region
    $region10: #{distilbert_encoder_forward.1} parent=1 // pred_check
      _
    $region11: #{distilbert_encoder_forward.1} parent=1 // pred_check_branch
      %27 = sbr.rel (0) target = $region13
    $region12: #{distilbert_encoder_forward.1} parent=1 // pred_region
      _
    $region13: #{distilbert_encoder_forward.1} parent=1 // pred_fallthru
      _
    // Predicated region
    $region14: #{distilbert_encoder_forward.1} parent=1 // pred_check
      _
    $region15: #{distilbert_encoder_forward.1} parent=1 // pred_check_branch
      %29 = sbr.rel (0) target = $region17
    $region16: #{distilbert_encoder_forward.1} parent=1 // pred_region
      _
    $region17: #{distilbert_encoder_forward.1} parent=1 // pred_fallthru
      _
    // Predicated region
    $region18: #{distilbert_encoder_forward.1} parent=1 // pred_check
      _
    $region19: #{distilbert_encoder_forward.1} parent=1 // pred_check_branch
      %31 = sbr.rel (0) target = $region21
    $region20: #{distilbert_encoder_forward.1} parent=1 // pred_region
      _
    $region21: #{distilbert_encoder_forward.1} parent=1 // pred_fallthru
      _
    // Predicated region
    $region22: #{distilbert_encoder_forward.1} parent=1 // pred_check
      _
    $region23: #{distilbert_encoder_forward.1} parent=1 // pred_check_branch
      %33 = sbr.rel (0) target = $region25
    $region24: #{distilbert_encoder_forward.1} parent=1 // pred_region
      _
    $region25: #{distilbert_encoder_forward.1} parent=1 // pred_fallthru
      _
    // Predicated region
    $region26: #{distilbert_encoder_forward.1} parent=1 // pred_check
      _
    $region27: #{distilbert_encoder_forward.1} parent=1 // pred_check_branch
      %35 = sbr.rel (0) target = $region29
    $region28: #{distilbert_encoder_forward.1} parent=1 // pred_region
      _
    $region29: #{distilbert_encoder_forward.1} parent=1 // pred_fallthru
      _
    // Predicated region
    $region30: #{distilbert_encoder_forward.1} parent=1 // pred_check
      _
    $region31: #{distilbert_encoder_forward.1} parent=1 // pred_check_branch
      %37 = sbr.rel (0) target = $region33
    $region32: #{distilbert_encoder_forward.1} parent=1 // pred_region
      _
    $region33: #{distilbert_encoder_forward.1} parent=1 // pred_fallthru
      _
    // Predicated region
    $region34: #{distilbert_encoder_forward.1} parent=1 // pred_check
      _
    $region35: #{distilbert_encoder_forward.1} parent=1 // pred_check_branch
      %39 = sbr.rel (0) target = $region37
    $region36: #{distilbert_encoder_forward.1} parent=1 // pred_region
      _
    $region37: #{distilbert_encoder_forward.1} parent=1 // pred_fallthru
      _
    // Predicated region
    $region38: #{distilbert_encoder_forward.1} parent=1 // pred_check
      _
    $region39: #{distilbert_encoder_forward.1} parent=1 // pred_check_branch
      %41 = sbr.rel (0) target = $region41
    $region40: #{distilbert_encoder_forward.1} parent=1 // pred_region
      _
    $region41: #{distilbert_encoder_forward.1} parent=1 // pred_fallthru
      _
    // Predicated region
    $region42: #{distilbert_encoder_forward.1} parent=1 // pred_check
      _
    $region43: #{distilbert_encoder_forward.1} parent=1 // pred_check_branch
      %43 = sbr.rel (0) target = $region45
    $region44: #{distilbert_encoder_forward.1} parent=1 // pred_region
      _
    $region45: #{distilbert_encoder_forward.1} parent=1 // pred_fallthru
      _
    // Predicated region
    $region46: #{distilbert_encoder_forward.1} parent=1 // pred_check
      _
    $region47: #{distilbert_encoder_forward.1} parent=1 // pred_check_branch
      %45 = sbr.rel (0) target = $region49
    $region48: #{distilbert_encoder_forward.1} parent=1 // pred_region
      _
    $region49: #{distilbert_encoder_forward.1} parent=1 // pred_fallthru
      _
    %v47 = vld [vmem:[%s2] sm:$0x3]
    %v48 = vld [vmem:[%s0] sm:$0xff]
    %v49 = vld [vmem:[%s0 + $0x8] sm:$0xff]
    %vm50 = vcmask 261120
    %v51 = vsel %vm50, %v48, 0.0
    %52 = vadd.xlane.f32.xlu0 %v51
    %v53 = vpop.xlane.xlu0 %52
    %v54 = vsel %vm50, %v49, 0.0
    %55 = vadd.xlane.f32.xlu0 %v54
    %v56 = vpop.xlane.xlu0 %55
    %v57 = vrcp.pop 32.0
    %v58 = vmul.f32 %v53, %v57
    %v59 = vmul.f32 %v56, %v57
    %v60 = vsub.f32 %v48, %v58
    %v61 = vsub.f32 %v49, %v59
    %v62 = vmul.f32 %v60, %v60
    %v63 = vmul.f32 %v61, %v61
    %v64 = vsel %vm50, %v62, 0.0
    %65 = vadd.xlane.f32.xlu0 %v64
    %v66 = vpop.xlane.xlu0 %65
    %v67 = vsel %vm50, %v63, 0.0
    %68 = vadd.xlane.f32.xlu0 %v67
    %v69 = vpop.xlane.xlu0 %68
    %v70 = vmul.f32 %v66, %v57
    %v71 = vmul.f32 %v69, %v57
    %v72 = vadd.f32 %v70, 1e-12
    %v73 = vadd.f32 %v71, 1e-12
    %v74 = vrsqrt.pop %v72
    %v75 = vrsqrt.pop %v73
    %v76 = vmul.f32 %v60, %v74
    %v77 = vmul.f32 %v61, %v75
    %v78 = vlaneseq
    %v79 = vshrl.u32 %v78, 7
    %v80 = vsub.s32 0, %v79
    %v81 = vrot.slane %v47, %v80
    %v82 = vmul.f32 %v76, %v81
    %v83 = vmul.f32 %v77, %v81
    %v84 = vlaneseq
    %v85 = vshrl.u32 %v84, 7
    %v86 = vsub.s32 1, %v85
    %v87 = vrot.slane %v47, %v86
    %v88 = vadd.f32 %v82, %v87
    %v89 = vadd.f32 %v83, %v87
    %90 = vst.msk [vmem:[%s12] sm:$0xff] %vm50, %v88
    %91 = vst.msk [vmem:[%s12 + $0x8] sm:$0xff] %vm50, %v89
    %v92 = vld [vmem:[%s1] sm:$0x1]
    %v93 = vld [vmem:[%s1 + $0x1] sm:$0x1]
    %v94 = vld [vmem:[%s9] sm:$0xff]
    %v95 = vpack.c.bf16 %v89, %v88
    %v96 = vld [vmem:[%s3] sm:$0xf]
    %v97 = vld [vmem:[%s3 + $0x4] sm:$0xf]
    %v98 = vld [vmem:[%s3 + $0x8] sm:$0xf]
    %v99 = vld [vmem:[%s3 + $0xc] sm:$0xf]
    %v100 = vld [vmem:[%s4] sm:$0x1]
    %v102 = vlaneseq
    %v103 = vshrl.u32 %v102, 7
    %v104 = vsub.s32 0, %v103
    %v105 = vrot.slane %v100, %v104
    %v111 = vunpack.c.l.b16 %v96
    %v112 = vunpack.c.l.b16 %v97
    %v113 = vunpack.c.l.b16 %v98
    %v114 = vunpack.c.l.b16 %v99
    %v115 = vpack.c.b16 %v112, %v111
    %v116 = vpack.c.b16 %v114, %v113
    %v120 = vsel %vm50, %v95, 0
    %122 = vmatprep.subr.bf16.mxu0 0
    %123 = vmatpush1.bf16.msra.mxu0 %v115
    %124 = vmatprep.subr.bf16.mxu0 0
    %125 = vmatpush1.bf16.msra.mxu0 %v116
    %126 = vmatprep.subr.bf16.mxu0 0
    %127 = vmatpush1.bf16.msra.mxu0 0
    %128 = vmatprep.subr.bf16.mxu0 0
    %129 = vmatpush1.bf16.msra.mxu0 0
    %130 = vmatprep.subr.bf16.mxu0 0
    %131 = vmatpush1.bf16.msra.mxu0 0
    %132 = vmatprep.subr.bf16.mxu0 0
    %133 = vmatpush1.bf16.msra.mxu0 0
    %134 = vmatprep.subr.bf16.mxu0 0
    %135 = vmatpush1.bf16.msra.mxu0 0
    %136 = vmatprep.subr.bf16.mxu0 0
    %137 = vmatpush1.bf16.msra.mxu0 0
    %138 = vmatprep.subr.bf16.mxu0 0
    %139 = vmatpush1.bf16.msra.mxu0 0
    %140 = vmatprep.subr.bf16.mxu0 0
    %141 = vmatpush1.bf16.msra.mxu0 0
    %142 = vmatprep.subr.bf16.mxu0 0
    %143 = vmatpush1.bf16.msra.mxu0 0
    %144 = vmatprep.subr.bf16.mxu0 0
    %145 = vmatpush1.bf16.msra.mxu0 0
    %146 = vmatprep.subr.bf16.mxu0 0
    %147 = vmatpush1.bf16.msra.mxu0 0
    %148 = vmatprep.subr.bf16.mxu0 0
    %149 = vmatpush1.bf16.msra.mxu0 0
    %150 = vmatprep.subr.bf16.mxu0 0
    %151 = vmatpush1.bf16.msra.mxu0 0
    %152 = vmatprep.subr.bf16.mxu0 0
    %153 = vmatpush1.bf16.msra.mxu0 0
    %154 = vmatprep.mubr.bf16.mxu0 0
    %155 = vmatmul.mubr.bf16.gmra.mrb[0].mxu0 %v120
    %v156 = vpop.f32.mrb[0].mxu0
    %v157 = vadd.f32 %v105, %v156
    %v158 = vpop.f32.mrb[0].mxu0
    %v159 = vpop.f32.mrb[0].mxu0
    %v160 = vadd.f32 %v105, %v159
    %v161 = vpop.f32.mrb[0].mxu0
    %162 = vdwg.mxu0
    %v163 = vmul.f32 %v157, 0.35355338
    %v164 = vmul.f32 %v160, 0.35355338
    %v165 = vpack.c.bf16 %v163, %v163
    %v166 = vpack.c.bf16 %v164, %v164
    %v167 = vpack.c.bf16 %v157, %v157
    %v168 = vpack.c.bf16 %v160, %v160
    %v171 = vlaneseq
    %v172 = vshrl.u32 %v171, 7
    %v173 = vsub.s32 0, %v172
    %v174 = vrot.slane %v92, %v173
    %v175 = vlaneseq
    %v176 = vshrl.u32 %v175, 7
    %v177 = vsub.s32 0, %v176
    %v178 = vrot.slane %v93, %v177
    %182 = vrot.lane.b32.xlu0 %v167, 96
    %v183 = vpop.permute.xlu0 %182
    %vm184 = vcmask 64512
    %v186 = vsel %vm184, %v165, 0
    %v189 = vsel %vm184, %v183, 0
    %191 = vmatprep.subr.bf16.mxu0 0
    %192 = vmatpush1.bf16.xpose.msra.mxu0 %v189
    %193 = vmatprep.subr.bf16.mxu0 0
    %194 = vmatpush1.bf16.xpose.msra.mxu0 0
    %195 = vmatprep.subr.bf16.mxu0 0
    %196 = vmatpush1.bf16.xpose.msra.mxu0 0
    %197 = vmatprep.subr.bf16.mxu0 0
    %198 = vmatpush1.bf16.xpose.msra.mxu0 0
    %199 = vmatprep.subr.bf16.mxu0 0
    %200 = vmatpush1.bf16.xpose.msra.mxu0 0
    %201 = vmatprep.subr.bf16.mxu0 0
    %202 = vmatpush1.bf16.xpose.msra.mxu0 0
    %203 = vmatprep.subr.bf16.mxu0 0
    %204 = vmatpush1.bf16.xpose.msra.mxu0 0
    %205 = vmatprep.subr.bf16.mxu0 0
    %206 = vmatpush1.bf16.xpose.msra.mxu0 0
    %207 = vmatprep.subr.bf16.mxu0 0
    %208 = vmatpush1.bf16.xpose.msra.mxu0 0
    %209 = vmatprep.subr.bf16.mxu0 0
    %210 = vmatpush1.bf16.xpose.msra.mxu0 0
    %211 = vmatprep.subr.bf16.mxu0 0
    %212 = vmatpush1.bf16.xpose.msra.mxu0 0
    %213 = vmatprep.subr.bf16.mxu0 0
    %214 = vmatpush1.bf16.xpose.msra.mxu0 0
    %215 = vmatprep.subr.bf16.mxu0 0
    %216 = vmatpush1.bf16.xpose.msra.mxu0 0
    %217 = vmatprep.subr.bf16.mxu0 0
    %218 = vmatpush1.bf16.xpose.msra.mxu0 0
    %219 = vmatprep.subr.bf16.mxu0 0
    %220 = vmatpush1.bf16.xpose.msra.mxu0 0
    %221 = vmatprep.subr.bf16.mxu0 0
    %222 = vmatpush1.bf16.xpose.msra.mxu0 0
    %223 = vmatprep.mubr.bf16.mxu0 0
    %224 = vmatmul.mubr.bf16.gmra.mrb[0].mxu0 %v186
    %v225 = vpop.f32.mrb[0].mxu0
    %v226 = vadd.f32 %v174, %v225
    %v227 = vpop.f32.mrb[0].mxu0
    %v228 = vpop.f32.mrb[0].mxu0
    %v229 = vpop.f32.mrb[0].mxu0
    %230 = vdwg.mxu0
    %232 = vrot.lane.b32.xlu0 %v168, 96
    %v233 = vpop.permute.xlu0 %232
    %v235 = vsel %vm184, %v166, 0
    %v238 = vsel %vm184, %v233, 0
    %240 = vmatprep.subr.bf16.mxu0 0
    %241 = vmatpush1.bf16.xpose.msra.mxu0 %v238
    %242 = vmatprep.subr.bf16.mxu0 0
    %243 = vmatpush1.bf16.xpose.msra.mxu0 0
    %244 = vmatprep.subr.bf16.mxu0 0
    %245 = vmatpush1.bf16.xpose.msra.mxu0 0
    %246 = vmatprep.subr.bf16.mxu0 0
    %247 = vmatpush1.bf16.xpose.msra.mxu0 0
    %248 = vmatprep.subr.bf16.mxu0 0
    %249 = vmatpush1.bf16.xpose.msra.mxu0 0
    %250 = vmatprep.subr.bf16.mxu0 0
    %251 = vmatpush1.bf16.xpose.msra.mxu0 0
    %252 = vmatprep.subr.bf16.mxu0 0
    %253 = vmatpush1.bf16.xpose.msra.mxu0 0
    %254 = vmatprep.subr.bf16.mxu0 0
    %255 = vmatpush1.bf16.xpose.msra.mxu0 0
    %256 = vmatprep.subr.bf16.mxu0 0
    %257 = vmatpush1.bf16.xpose.msra.mxu0 0
    %258 = vmatprep.subr.bf16.mxu0 0
    %259 = vmatpush1.bf16.xpose.msra.mxu0 0
    %260 = vmatprep.subr.bf16.mxu0 0
    %261 = vmatpush1.bf16.xpose.msra.mxu0 0
    %262 = vmatprep.subr.bf16.mxu0 0
    %263 = vmatpush1.bf16.xpose.msra.mxu0 0
    %264 = vmatprep.subr.bf16.mxu0 0
    %265 = vmatpush1.bf16.xpose.msra.mxu0 0
    %266 = vmatprep.subr.bf16.mxu0 0
    %267 = vmatpush1.bf16.xpose.msra.mxu0 0
    %268 = vmatprep.subr.bf16.mxu0 0
    %269 = vmatpush1.bf16.xpose.msra.mxu0 0
    %270 = vmatprep.subr.bf16.mxu0 0
    %271 = vmatpush1.bf16.xpose.msra.mxu0 0
    %272 = vmatprep.mubr.bf16.mxu0 0
    %273 = vmatmul.mubr.bf16.gmra.mrb[0].mxu0 %v235
    %v274 = vpop.f32.mrb[0].mxu0
    %v275 = vadd.f32 %v178, %v274
    %v276 = vpop.f32.mrb[0].mxu0
    %v277 = vpop.f32.mrb[0].mxu0
    %v278 = vpop.f32.mrb[0].mxu0
    %279 = vdwg.mxu0
    %v280 = vsel %vm184, %v226, -inf
    %281 = vmax.xlane.f32.xlu0 %v280
    %v282 = vpop.xlane.xlu0 %281
    %v283 = vsel %vm184, %v275, -inf
    %284 = vmax.xlane.f32.xlu0 %v283
    %v285 = vpop.xlane.xlu0 %284
    %v286 = vsub.f32 %v226, %v282
    %v287 = vsub.f32 %v275, %v285
    %v288 = vmul.f32 %v286, 1.442695
    %v289 = vpow.pop %v288
    %v290 = vmul.f32 %v287, 1.442695
    %v291 = vpow.pop %v290
    %v292 = vsel %vm184, %v289, 0.0
    %293 = vadd.xlane.f32.xlu0 %v292
    %v294 = vpop.xlane.xlu0 %293
    %v295 = vsel %vm184, %v291, 0.0
    %296 = vadd.xlane.f32.xlu0 %v295
    %v297 = vpop.xlane.xlu0 %296
    %v298 = vrcp.pop %v294
    %v299 = vrcp.pop %v297
    %v300 = vmul.f32 %v289, %v298
    %v301 = vmul.f32 %v291, %v299
    %302 = vst.msk [vmem:[%s13] sm:$0xff] %vm184, %v300
    %303 = vst.msk [vmem:[%s13 + $0x8] sm:$0xff] %vm184, %v301
    %v304 = vpack.c.bf16 %v300, %v300
    %v305 = vpack.c.bf16 %v301, %v301
    %306 = vrot.lane.b32.xlu0 %v167, 64
    %v307 = vpop.permute.xlu0 %306
    %v309 = vsel %vm184, %v304, 0
    %vm311 = vcmask 1043456
    %v313 = vsel %vm311, %v307, 0
    %315 = vmatprep.subr.bf16.mxu0 0
    %316 = vmatpush1.bf16.msra.mxu0 %v313
    %317 = vmatprep.subr.bf16.mxu0 0
    %318 = vmatpush1.bf16.msra.mxu0 0
    %319 = vmatprep.subr.bf16.mxu0 0
    %320 = vmatpush1.bf16.msra.mxu0 0
    %321 = vmatprep.subr.bf16.mxu0 0
    %322 = vmatpush1.bf16.msra.mxu0 0
    %323 = vmatprep.subr.bf16.mxu0 0
    %324 = vmatpush1.bf16.msra.mxu0 0
    %325 = vmatprep.subr.bf16.mxu0 0
    %326 = vmatpush1.bf16.msra.mxu0 0
    %327 = vmatprep.subr.bf16.mxu0 0
    %328 = vmatpush1.bf16.msra.mxu0 0
    %329 = vmatprep.subr.bf16.mxu0 0
    %330 = vmatpush1.bf16.msra.mxu0 0
    %331 = vmatprep.subr.bf16.mxu0 0
    %332 = vmatpush1.bf16.msra.mxu0 0
    %333 = vmatprep.subr.bf16.mxu0 0
    %334 = vmatpush1.bf16.msra.mxu0 0
    %335 = vmatprep.subr.bf16.mxu0 0
    %336 = vmatpush1.bf16.msra.mxu0 0
    %337 = vmatprep.subr.bf16.mxu0 0
    %338 = vmatpush1.bf16.msra.mxu0 0
    %339 = vmatprep.subr.bf16.mxu0 0
    %340 = vmatpush1.bf16.msra.mxu0 0
    %341 = vmatprep.subr.bf16.mxu0 0
    %342 = vmatpush1.bf16.msra.mxu0 0
    %343 = vmatprep.subr.bf16.mxu0 0
    %344 = vmatpush1.bf16.msra.mxu0 0
    %345 = vmatprep.subr.bf16.mxu0 0
    %346 = vmatpush1.bf16.msra.mxu0 0
    %347 = vmatprep.mubr.bf16.mxu0 0
    %348 = vmatmul.mubr.bf16.gmra.mrb[0].mxu0 %v309
    %v349 = vpop.f32.mrb[0].mxu0
    %v350 = vadd.f32 0.0, %v349
    %v351 = vpop.f32.mrb[0].mxu0
    %v352 = vpop.f32.mrb[0].mxu0
    %v353 = vpop.f32.mrb[0].mxu0
    %354 = vdwg.mxu0
    %355 = vrot.lane.b32.xlu0 %v168, 64
    %v356 = vpop.permute.xlu0 %355
    %v358 = vsel %vm184, %v305, 0
    %v361 = vsel %vm311, %v356, 0
    %363 = vmatprep.subr.bf16.mxu0 0
    %364 = vmatpush1.bf16.msra.mxu0 %v361
    %365 = vmatprep.subr.bf16.mxu0 0
    %366 = vmatpush1.bf16.msra.mxu0 0
    %367 = vmatprep.subr.bf16.mxu0 0
    %368 = vmatpush1.bf16.msra.mxu0 0
    %369 = vmatprep.subr.bf16.mxu0 0
    %370 = vmatpush1.bf16.msra.mxu0 0
    %371 = vmatprep.subr.bf16.mxu0 0
    %372 = vmatpush1.bf16.msra.mxu0 0
    %373 = vmatprep.subr.bf16.mxu0 0
    %374 = vmatpush1.bf16.msra.mxu0 0
    %375 = vmatprep.subr.bf16.mxu0 0
    %376 = vmatpush1.bf16.msra.mxu0 0
    %377 = vmatprep.subr.bf16.mxu0 0
    %378 = vmatpush1.bf16.msra.mxu0 0
    %379 = vmatprep.subr.bf16.mxu0 0
    %380 = vmatpush1.bf16.msra.mxu0 0
    %381 = vmatprep.subr.bf16.mxu0 0
    %382 = vmatpush1.bf16.msra.mxu0 0
    %383 = vmatprep.subr.bf16.mxu0 0
    %384 = vmatpush1.bf16.msra.mxu0 0
    %385 = vmatprep.subr.bf16.mxu0 0
    %386 = vmatpush1.bf16.msra.mxu0 0
    %387 = vmatprep.subr.bf16.mxu0 0
    %388 = vmatpush1.bf16.msra.mxu0 0
    %389 = vmatprep.subr.bf16.mxu0 0
    %390 = vmatpush1.bf16.msra.mxu0 0
    %391 = vmatprep.subr.bf16.mxu0 0
    %392 = vmatpush1.bf16.msra.mxu0 0
    %393 = vmatprep.subr.bf16.mxu0 0
    %394 = vmatpush1.bf16.msra.mxu0 0
    %395 = vmatprep.mubr.bf16.mxu0 0
    %396 = vmatmul.mubr.bf16.gmra.mrb[0].mxu0 %v358
    %v397 = vpop.f32.mrb[0].mxu0
    %v398 = vadd.f32 0.0, %v397
    %v399 = vpop.f32.mrb[0].mxu0
    %v400 = vpop.f32.mrb[0].mxu0
    %v401 = vpop.f32.mrb[0].mxu0
    %402 = vdwg.mxu0
    %404 = vrot.lane.b32.xlu0 %v165, 120
    %v405 = vpop.permute.xlu0 %404
    %406 = vrot.lane.b32.xlu0 %v167, 88
    %v407 = vpop.permute.xlu0 %406
    %v409 = vsel %vm184, %v405, 0
    %v412 = vsel %vm184, %v407, 0
    %414 = vmatprep.subr.bf16.mxu0 0
    %415 = vmatpush1.bf16.xpose.msra.mxu0 %v412
    %416 = vmatprep.subr.bf16.mxu0 0
    %417 = vmatpush1.bf16.xpose.msra.mxu0 0
    %418 = vmatprep.subr.bf16.mxu0 0
    %419 = vmatpush1.bf16.xpose.msra.mxu0 0
    %420 = vmatprep.subr.bf16.mxu0 0
    %421 = vmatpush1.bf16.xpose.msra.mxu0 0
    %422 = vmatprep.subr.bf16.mxu0 0
    %423 = vmatpush1.bf16.xpose.msra.mxu0 0
    %424 = vmatprep.subr.bf16.mxu0 0
    %425 = vmatpush1.bf16.xpose.msra.mxu0 0
    %426 = vmatprep.subr.bf16.mxu0 0
    %427 = vmatpush1.bf16.xpose.msra.mxu0 0
    %428 = vmatprep.subr.bf16.mxu0 0
    %429 = vmatpush1.bf16.xpose.msra.mxu0 0
    %430 = vmatprep.subr.bf16.mxu0 0
    %431 = vmatpush1.bf16.xpose.msra.mxu0 0
    %432 = vmatprep.subr.bf16.mxu0 0
    %433 = vmatpush1.bf16.xpose.msra.mxu0 0
    %434 = vmatprep.subr.bf16.mxu0 0
    %435 = vmatpush1.bf16.xpose.msra.mxu0 0
    %436 = vmatprep.subr.bf16.mxu0 0
    %437 = vmatpush1.bf16.xpose.msra.mxu0 0
    %438 = vmatprep.subr.bf16.mxu0 0
    %439 = vmatpush1.bf16.xpose.msra.mxu0 0
    %440 = vmatprep.subr.bf16.mxu0 0
    %441 = vmatpush1.bf16.xpose.msra.mxu0 0
    %442 = vmatprep.subr.bf16.mxu0 0
    %443 = vmatpush1.bf16.xpose.msra.mxu0 0
    %444 = vmatprep.subr.bf16.mxu0 0
    %445 = vmatpush1.bf16.xpose.msra.mxu0 0
    %446 = vmatprep.mubr.bf16.mxu0 0
    %447 = vmatmul.mubr.bf16.gmra.mrb[0].mxu0 %v409
    %v448 = vpop.f32.mrb[0].mxu0
    %v449 = vadd.f32 %v174, %v448
    %v450 = vpop.f32.mrb[0].mxu0
    %v451 = vpop.f32.mrb[0].mxu0
    %v452 = vpop.f32.mrb[0].mxu0
    %453 = vdwg.mxu0
    %455 = vrot.lane.b32.xlu0 %v166, 120
    %v456 = vpop.permute.xlu0 %455
    %457 = vrot.lane.b32.xlu0 %v168, 88
    %v458 = vpop.permute.xlu0 %457
    %v460 = vsel %vm184, %v456, 0
    %v463 = vsel %vm184, %v458, 0
    %465 = vmatprep.subr.bf16.mxu0 0
    %466 = vmatpush1.bf16.xpose.msra.mxu0 %v463
    %467 = vmatprep.subr.bf16.mxu0 0
    %468 = vmatpush1.bf16.xpose.msra.mxu0 0
    %469 = vmatprep.subr.bf16.mxu0 0
    %470 = vmatpush1.bf16.xpose.msra.mxu0 0
    %471 = vmatprep.subr.bf16.mxu0 0
    %472 = vmatpush1.bf16.xpose.msra.mxu0 0
    %473 = vmatprep.subr.bf16.mxu0 0
    %474 = vmatpush1.bf16.xpose.msra.mxu0 0
    %475 = vmatprep.subr.bf16.mxu0 0
    %476 = vmatpush1.bf16.xpose.msra.mxu0 0
    %477 = vmatprep.subr.bf16.mxu0 0
    %478 = vmatpush1.bf16.xpose.msra.mxu0 0
    %479 = vmatprep.subr.bf16.mxu0 0
    %480 = vmatpush1.bf16.xpose.msra.mxu0 0
    %481 = vmatprep.subr.bf16.mxu0 0
    %482 = vmatpush1.bf16.xpose.msra.mxu0 0
    %483 = vmatprep.subr.bf16.mxu0 0
    %484 = vmatpush1.bf16.xpose.msra.mxu0 0
    %485 = vmatprep.subr.bf16.mxu0 0
    %486 = vmatpush1.bf16.xpose.msra.mxu0 0
    %487 = vmatprep.subr.bf16.mxu0 0
    %488 = vmatpush1.bf16.xpose.msra.mxu0 0
    %489 = vmatprep.subr.bf16.mxu0 0
    %490 = vmatpush1.bf16.xpose.msra.mxu0 0
    %491 = vmatprep.subr.bf16.mxu0 0
    %492 = vmatpush1.bf16.xpose.msra.mxu0 0
    %493 = vmatprep.subr.bf16.mxu0 0
    %494 = vmatpush1.bf16.xpose.msra.mxu0 0
    %495 = vmatprep.subr.bf16.mxu0 0
    %496 = vmatpush1.bf16.xpose.msra.mxu0 0
    %497 = vmatprep.mubr.bf16.mxu0 0
    %498 = vmatmul.mubr.bf16.gmra.mrb[0].mxu0 %v460
    %v499 = vpop.f32.mrb[0].mxu0
    %v500 = vadd.f32 %v178, %v499
    %v501 = vpop.f32.mrb[0].mxu0
    %v502 = vpop.f32.mrb[0].mxu0
    %v503 = vpop.f32.mrb[0].mxu0
    %504 = vdwg.mxu0
    %v505 = vsel %vm184, %v449, -inf
    %506 = vmax.xlane.f32.xlu0 %v505
    %v507 = vpop.xlane.xlu0 %506
    %v508 = vsel %vm184, %v500, -inf
    %509 = vmax.xlane.f32.xlu0 %v508
    %v510 = vpop.xlane.xlu0 %509
    %v511 = vsub.f32 %v449, %v507
    %v512 = vsub.f32 %v500, %v510
    %v513 = vmul.f32 %v511, 1.442695
    %v514 = vpow.pop %v513
    %v515 = vmul.f32 %v512, 1.442695
    %v516 = vpow.pop %v515
    %v517 = vsel %vm184, %v514, 0.0
    %518 = vadd.xlane.f32.xlu0 %v517
    %v519 = vpop.xlane.xlu0 %518
    %v520 = vsel %vm184, %v516, 0.0
    %521 = vadd.xlane.f32.xlu0 %v520
    %v522 = vpop.xlane.xlu0 %521
    %v523 = vrcp.pop %v519
    %v524 = vrcp.pop %v522
    %v525 = vmul.f32 %v514, %v523
    %v526 = vmul.f32 %v516, %v524
    %s527 = scalar_lea.vmem %s13, 16
    %528 = vst.msk [vmem:[%s527] sm:$0xff] %vm184, %v525
    %529 = vst.msk [vmem:[%s527 + $0x8] sm:$0xff] %vm184, %v526
    %v530 = vpack.c.bf16 %v525, %v525
    %v531 = vpack.c.bf16 %v526, %v526
    %532 = vrot.lane.b32.xlu0 %v167, 56
    %v533 = vpop.permute.xlu0 %532
    %v535 = vsel %vm184, %v530, 0
    %v538 = vsel %vm311, %v533, 0
    %540 = vmatprep.subr.bf16.mxu0 0
    %541 = vmatpush1.bf16.msra.mxu0 %v538
    %542 = vmatprep.subr.bf16.mxu0 0
    %543 = vmatpush1.bf16.msra.mxu0 0
    %544 = vmatprep.subr.bf16.mxu0 0
    %545 = vmatpush1.bf16.msra.mxu0 0
    %546 = vmatprep.subr.bf16.mxu0 0
    %547 = vmatpush1.bf16.msra.mxu0 0
    %548 = vmatprep.subr.bf16.mxu0 0
    %549 = vmatpush1.bf16.msra.mxu0 0
    %550 = vmatprep.subr.bf16.mxu0 0
    %551 = vmatpush1.bf16.msra.mxu0 0
    %552 = vmatprep.subr.bf16.mxu0 0
    %553 = vmatpush1.bf16.msra.mxu0 0
    %554 = vmatprep.subr.bf16.mxu0 0
    %555 = vmatpush1.bf16.msra.mxu0 0
    %556 = vmatprep.subr.bf16.mxu0 0
    %557 = vmatpush1.bf16.msra.mxu0 0
    %558 = vmatprep.subr.bf16.mxu0 0
    %559 = vmatpush1.bf16.msra.mxu0 0
    %560 = vmatprep.subr.bf16.mxu0 0
    %561 = vmatpush1.bf16.msra.mxu0 0
    %562 = vmatprep.subr.bf16.mxu0 0
    %563 = vmatpush1.bf16.msra.mxu0 0
    %564 = vmatprep.subr.bf16.mxu0 0
    %565 = vmatpush1.bf16.msra.mxu0 0
    %566 = vmatprep.subr.bf16.mxu0 0
    %567 = vmatpush1.bf16.msra.mxu0 0
    %568 = vmatprep.subr.bf16.mxu0 0
    %569 = vmatpush1.bf16.msra.mxu0 0
    %570 = vmatprep.subr.bf16.mxu0 0
    %571 = vmatpush1.bf16.msra.mxu0 0
    %572 = vmatprep.mubr.bf16.mxu0 0
    %573 = vmatmul.mubr.bf16.gmra.mrb[0].mxu0 %v535
    %v574 = vpop.f32.mrb[0].mxu0
    %v575 = vadd.f32 0.0, %v574
    %v576 = vpop.f32.mrb[0].mxu0
    %v577 = vpop.f32.mrb[0].mxu0
    %v578 = vpop.f32.mrb[0].mxu0
    %579 = vdwg.mxu0
    %580 = vrot.lane.b32.xlu0 %v168, 56
    %v581 = vpop.permute.xlu0 %580
    %v583 = vsel %vm184, %v531, 0
    %v586 = vsel %vm311, %v581, 0
    %588 = vmatprep.subr.bf16.mxu0 0
    %589 = vmatpush1.bf16.msra.mxu0 %v586
    %590 = vmatprep.subr.bf16.mxu0 0
    %591 = vmatpush1.bf16.msra.mxu0 0
    %592 = vmatprep.subr.bf16.mxu0 0
    %593 = vmatpush1.bf16.msra.mxu0 0
    %594 = vmatprep.subr.bf16.mxu0 0
    %595 = vmatpush1.bf16.msra.mxu0 0
    %596 = vmatprep.subr.bf16.mxu0 0
    %597 = vmatpush1.bf16.msra.mxu0 0
    %598 = vmatprep.subr.bf16.mxu0 0
    %599 = vmatpush1.bf16.msra.mxu0 0
    %600 = vmatprep.subr.bf16.mxu0 0
    %601 = vmatpush1.bf16.msra.mxu0 0
    %602 = vmatprep.subr.bf16.mxu0 0
    %603 = vmatpush1.bf16.msra.mxu0 0
    %604 = vmatprep.subr.bf16.mxu0 0
    %605 = vmatpush1.bf16.msra.mxu0 0
    %606 = vmatprep.subr.bf16.mxu0 0
    %607 = vmatpush1.bf16.msra.mxu0 0
    %608 = vmatprep.subr.bf16.mxu0 0
    %609 = vmatpush1.bf16.msra.mxu0 0
    %610 = vmatprep.subr.bf16.mxu0 0
    %611 = vmatpush1.bf16.msra.mxu0 0
    %612 = vmatprep.subr.bf16.mxu0 0
    %613 = vmatpush1.bf16.msra.mxu0 0
    %614 = vmatprep.subr.bf16.mxu0 0
    %615 = vmatpush1.bf16.msra.mxu0 0
    %616 = vmatprep.subr.bf16.mxu0 0
    %617 = vmatpush1.bf16.msra.mxu0 0
    %618 = vmatprep.subr.bf16.mxu0 0
    %619 = vmatpush1.bf16.msra.mxu0 0
    %620 = vmatprep.mubr.bf16.mxu0 0
    %621 = vmatmul.mubr.bf16.gmra.mrb[0].mxu0 %v583
    %v622 = vpop.f32.mrb[0].mxu0
    %v623 = vadd.f32 0.0, %v622
    %v624 = vpop.f32.mrb[0].mxu0
    %v625 = vpop.f32.mrb[0].mxu0
    %v626 = vpop.f32.mrb[0].mxu0
    %627 = vdwg.mxu0
    %628 = vrot.lane.b32.xlu0 %v165, 112
    %v629 = vpop.permute.xlu0 %628
    %630 = vrot.lane.b32.xlu0 %v167, 80
    %v631 = vpop.permute.xlu0 %630
    %v633 = vsel %vm184, %v629, 0
    %v636 = vsel %vm184, %v631, 0
    %638 = vmatprep.subr.bf16.mxu0 0
    %639 = vmatpush1.bf16.xpose.msra.mxu0 %v636
    %640 = vmatprep.subr.bf16.mxu0 0
    %641 = vmatpush1.bf16.xpose.msra.mxu0 0
    %642 = vmatprep.subr.bf16.mxu0 0
    %643 = vmatpush1.bf16.xpose.msra.mxu0 0
    %644 = vmatprep.subr.bf16.mxu0 0
    %645 = vmatpush1.bf16.xpose.msra.mxu0 0
    %646 = vmatprep.subr.bf16.mxu0 0
    %647 = vmatpush1.bf16.xpose.msra.mxu0 0
    %648 = vmatprep.subr.bf16.mxu0 0
    %649 = vmatpush1.bf16.xpose.msra.mxu0 0
    %650 = vmatprep.subr.bf16.mxu0 0
    %651 = vmatpush1.bf16.xpose.msra.mxu0 0
    %652 = vmatprep.subr.bf16.mxu0 0
    %653 = vmatpush1.bf16.xpose.msra.mxu0 0
    %654 = vmatprep.subr.bf16.mxu0 0
    %655 = vmatpush1.bf16.xpose.msra.mxu0 0
    %656 = vmatprep.subr.bf16.mxu0 0
    %657 = vmatpush1.bf16.xpose.msra.mxu0 0
    %658 = vmatprep.subr.bf16.mxu0 0
    %659 = vmatpush1.bf16.xpose.msra.mxu0 0
    %660 = vmatprep.subr.bf16.mxu0 0
    %661 = vmatpush1.bf16.xpose.msra.mxu0 0
    %662 = vmatprep.subr.bf16.mxu0 0
    %663 = vmatpush1.bf16.xpose.msra.mxu0 0
    %664 = vmatprep.subr.bf16.mxu0 0
    %665 = vmatpush1.bf16.xpose.msra.mxu0 0
    %666 = vmatprep.subr.bf16.mxu0 0
    %667 = vmatpush1.bf16.xpose.msra.mxu0 0
    %668 = vmatprep.subr.bf16.mxu0 0
    %669 = vmatpush1.bf16.xpose.msra.mxu0 0
    %670 = vmatprep.mubr.bf16.mxu0 0
    %671 = vmatmul.mubr.bf16.gmra.mrb[0].mxu0 %v633
    %v672 = vpop.f32.mrb[0].mxu0
    %v673 = vadd.f32 %v174, %v672
    %v674 = vpop.f32.mrb[0].mxu0
    %v675 = vpop.f32.mrb[0].mxu0
    %v676 = vpop.f32.mrb[0].mxu0
    %677 = vdwg.mxu0
    %678 = vrot.lane.b32.xlu0 %v166, 112
    %v679 = vpop.permute.xlu0 %678
    %680 = vrot.lane.b32.xlu0 %v168, 80
    %v681 = vpop.permute.xlu0 %680
    %v683 = vsel %vm184, %v679, 0
    %v686 = vsel %vm184, %v681, 0
    %688 = vmatprep.subr.bf16.mxu0 0
    %689 = vmatpush1.bf16.xpose.msra.mxu0 %v686
    %690 = vmatprep.subr.bf16.mxu0 0
    %691 = vmatpush1.bf16.xpose.msra.mxu0 0
    %692 = vmatprep.subr.bf16.mxu0 0
    %693 = vmatpush1.bf16.xpose.msra.mxu0 0
    %694 = vmatprep.subr.bf16.mxu0 0
    %695 = vmatpush1.bf16.xpose.msra.mxu0 0
    %696 = vmatprep.subr.bf16.mxu0 0
    %697 = vmatpush1.bf16.xpose.msra.mxu0 0
    %698 = vmatprep.subr.bf16.mxu0 0
    %699 = vmatpush1.bf16.xpose.msra.mxu0 0
    %700 = vmatprep.subr.bf16.mxu0 0
    %701 = vmatpush1.bf16.xpose.msra.mxu0 0
    %702 = vmatprep.subr.bf16.mxu0 0
    %703 = vmatpush1.bf16.xpose.msra.mxu0 0
    %704 = vmatprep.subr.bf16.mxu0 0
    %705 = vmatpush1.bf16.xpose.msra.mxu0 0
    %706 = vmatprep.subr.bf16.mxu0 0
    %707 = vmatpush1.bf16.xpose.msra.mxu0 0
    %708 = vmatprep.subr.bf16.mxu0 0
    %709 = vmatpush1.bf16.xpose.msra.mxu0 0
    %710 = vmatprep.subr.bf16.mxu0 0
    %711 = vmatpush1.bf16.xpose.msra.mxu0 0
    %712 = vmatprep.subr.bf16.mxu0 0
    %713 = vmatpush1.bf16.xpose.msra.mxu0 0
    %714 = vmatprep.subr.bf16.mxu0 0
    %715 = vmatpush1.bf16.xpose.msra.mxu0 0
    %716 = vmatprep.subr.bf16.mxu0 0
    %717 = vmatpush1.bf16.xpose.msra.mxu0 0
    %718 = vmatprep.subr.bf16.mxu0 0
    %719 = vmatpush1.bf16.xpose.msra.mxu0 0
    %720 = vmatprep.mubr.bf16.mxu0 0
    %721 = vmatmul.mubr.bf16.gmra.mrb[0].mxu0 %v683
    %v722 = vpop.f32.mrb[0].mxu0
    %v723 = vadd.f32 %v178, %v722
    %v724 = vpop.f32.mrb[0].mxu0
    %v725 = vpop.f32.mrb[0].mxu0
    %v726 = vpop.f32.mrb[0].mxu0
    %727 = vdwg.mxu0
    %v728 = vsel %vm184, %v673, -inf
    %729 = vmax.xlane.f32.xlu0 %v728
    %v730 = vpop.xlane.xlu0 %729
    %v731 = vsel %vm184, %v723, -inf
    %732 = vmax.xlane.f32.xlu0 %v731
    %v733 = vpop.xlane.xlu0 %732
    %v734 = vsub.f32 %v673, %v730
    %v735 = vsub.f32 %v723, %v733
    %v736 = vmul.f32 %v734, 1.442695
    %v737 = vpow.pop %v736
    %v738 = vmul.f32 %v735, 1.442695
    %v739 = vpow.pop %v738
    %v740 = vsel %vm184, %v737, 0.0
    %741 = vadd.xlane.f32.xlu0 %v740
    %v742 = vpop.xlane.xlu0 %741
    %v743 = vsel %vm184, %v739, 0.0
    %744 = vadd.xlane.f32.xlu0 %v743
    %v745 = vpop.xlane.xlu0 %744
    %v746 = vrcp.pop %v742
    %v747 = vrcp.pop %v745
    %v748 = vmul.f32 %v737, %v746
    %v749 = vmul.f32 %v739, %v747
    %s750 = scalar_lea.vmem %s13, 32
    %751 = vst.msk [vmem:[%s750] sm:$0xff] %vm184, %v748
    %752 = vst.msk [vmem:[%s750 + $0x8] sm:$0xff] %vm184, %v749
    %v753 = vpack.c.bf16 %v748, %v748
    %v754 = vpack.c.bf16 %v749, %v749
    %755 = vrot.lane.b32.xlu0 %v167, 48
    %v756 = vpop.permute.xlu0 %755
    %v758 = vsel %vm184, %v753, 0
    %v761 = vsel %vm311, %v756, 0
    %763 = vmatprep.subr.bf16.mxu0 0
    %764 = vmatpush1.bf16.msra.mxu0 %v761
    %765 = vmatprep.subr.bf16.mxu0 0
    %766 = vmatpush1.bf16.msra.mxu0 0
    %767 = vmatprep.subr.bf16.mxu0 0
    %768 = vmatpush1.bf16.msra.mxu0 0
    %769 = vmatprep.subr.bf16.mxu0 0
    %770 = vmatpush1.bf16.msra.mxu0 0
    %771 = vmatprep.subr.bf16.mxu0 0
    %772 = vmatpush1.bf16.msra.mxu0 0
    %773 = vmatprep.subr.bf16.mxu0 0
    %774 = vmatpush1.bf16.msra.mxu0 0
    %775 = vmatprep.subr.bf16.mxu0 0
    %776 = vmatpush1.bf16.msra.mxu0 0
    %777 = vmatprep.subr.bf16.mxu0 0
    %778 = vmatpush1.bf16.msra.mxu0 0
    %779 = vmatprep.subr.bf16.mxu0 0
    %780 = vmatpush1.bf16.msra.mxu0 0
    %781 = vmatprep.subr.bf16.mxu0 0
    %782 = vmatpush1.bf16.msra.mxu0 0
    %783 = vmatprep.subr.bf16.mxu0 0
    %784 = vmatpush1.bf16.msra.mxu0 0
    %785 = vmatprep.subr.bf16.mxu0 0
    %786 = vmatpush1.bf16.msra.mxu0 0
    %787 = vmatprep.subr.bf16.mxu0 0
    %788 = vmatpush1.bf16.msra.mxu0 0
    %789 = vmatprep.subr.bf16.mxu0 0
    %790 = vmatpush1.bf16.msra.mxu0 0
    %791 = vmatprep.subr.bf16.mxu0 0
    %792 = vmatpush1.bf16.msra.mxu0 0
    %793 = vmatprep.subr.bf16.mxu0 0
    %794 = vmatpush1.bf16.msra.mxu0 0
    %795 = vmatprep.mubr.bf16.mxu0 0
    %796 = vmatmul.mubr.bf16.gmra.mrb[0].mxu0 %v758
    %v797 = vpop.f32.mrb[0].mxu0
    %v798 = vadd.f32 0.0, %v797
    %v799 = vpop.f32.mrb[0].mxu0
    %v800 = vpop.f32.mrb[0].mxu0
    %v801 = vpop.f32.mrb[0].mxu0
    %802 = vdwg.mxu0
    %803 = vrot.lane.b32.xlu0 %v168, 48
    %v804 = vpop.permute.xlu0 %803
    %v806 = vsel %vm184, %v754, 0
    %v809 = vsel %vm311, %v804, 0
    %811 = vmatprep.subr.bf16.mxu0 0
    %812 = vmatpush1.bf16.msra.mxu0 %v809
    %813 = vmatprep.subr.bf16.mxu0 0
    %814 = vmatpush1.bf16.msra.mxu0 0
    %815 = vmatprep.subr.bf16.mxu0 0
    %816 = vmatpush1.bf16.msra.mxu0 0
    %817 = vmatprep.subr.bf16.mxu0 0
    %818 = vmatpush1.bf16.msra.mxu0 0
    %819 = vmatprep.subr.bf16.mxu0 0
    %820 = vmatpush1.bf16.msra.mxu0 0
    %821 = vmatprep.subr.bf16.mxu0 0
    %822 = vmatpush1.bf16.msra.mxu0 0
    %823 = vmatprep.subr.bf16.mxu0 0
    %824 = vmatpush1.bf16.msra.mxu0 0
    %825 = vmatprep.subr.bf16.mxu0 0
    %826 = vmatpush1.bf16.msra.mxu0 0
    %827 = vmatprep.subr.bf16.mxu0 0
    %828 = vmatpush1.bf16.msra.mxu0 0
    %829 = vmatprep.subr.bf16.mxu0 0
    %830 = vmatpush1.bf16.msra.mxu0 0
    %831 = vmatprep.subr.bf16.mxu0 0
    %832 = vmatpush1.bf16.msra.mxu0 0
    %833 = vmatprep.subr.bf16.mxu0 0
    %834 = vmatpush1.bf16.msra.mxu0 0
    %835 = vmatprep.subr.bf16.mxu0 0
    %836 = vmatpush1.bf16.msra.mxu0 0
    %837 = vmatprep.subr.bf16.mxu0 0
    %838 = vmatpush1.bf16.msra.mxu0 0
    %839 = vmatprep.subr.bf16.mxu0 0
    %840 = vmatpush1.bf16.msra.mxu0 0
    %841 = vmatprep.subr.bf16.mxu0 0
    %842 = vmatpush1.bf16.msra.mxu0 0
    %843 = vmatprep.mubr.bf16.mxu0 0
    %844 = vmatmul.mubr.bf16.gmra.mrb[0].mxu0 %v806
    %v845 = vpop.f32.mrb[0].mxu0
    %v846 = vadd.f32 0.0, %v845
    %v847 = vpop.f32.mrb[0].mxu0
    %v848 = vpop.f32.mrb[0].mxu0
    %v849 = vpop.f32.mrb[0].mxu0
    %850 = vdwg.mxu0
    %851 = vrot.lane.b32.xlu0 %v165, 104
    %v852 = vpop.permute.xlu0 %851
    %853 = vrot.lane.b32.xlu0 %v167, 72
    %v854 = vpop.permute.xlu0 %853
    %v856 = vsel %vm184, %v852, 0
    %v859 = vsel %vm184, %v854, 0
    %861 = vmatprep.subr.bf16.mxu0 0
    %862 = vmatpush1.bf16.xpose.msra.mxu0 %v859
    %863 = vmatprep.subr.bf16.mxu0 0
    %864 = vmatpush1.bf16.xpose.msra.mxu0 0
    %865 = vmatprep.subr.bf16.mxu0 0
    %866 = vmatpush1.bf16.xpose.msra.mxu0 0
    %867 = vmatprep.subr.bf16.mxu0 0
    %868 = vmatpush1.bf16.xpose.msra.mxu0 0
    %869 = vmatprep.subr.bf16.mxu0 0
    %870 = vmatpush1.bf16.xpose.msra.mxu0 0
    %871 = vmatprep.subr.bf16.mxu0 0
    %872 = vmatpush1.bf16.xpose.msra.mxu0 0
    %873 = vmatprep.subr.bf16.mxu0 0
    %874 = vmatpush1.bf16.xpose.msra.mxu0 0
    %875 = vmatprep.subr.bf16.mxu0 0
    %876 = vmatpush1.bf16.xpose.msra.mxu0 0
    %877 = vmatprep.subr.bf16.mxu0 0
    %878 = vmatpush1.bf16.xpose.msra.mxu0 0
    %879 = vmatprep.subr.bf16.mxu0 0
    %880 = vmatpush1.bf16.xpose.msra.mxu0 0
    %881 = vmatprep.subr.bf16.mxu0 0
    %882 = vmatpush1.bf16.xpose.msra.mxu0 0
    %883 = vmatprep.subr.bf16.mxu0 0
    %884 = vmatpush1.bf16.xpose.msra.mxu0 0
    %885 = vmatprep.subr.bf16.mxu0 0
    %886 = vmatpush1.bf16.xpose.msra.mxu0 0
    %887 = vmatprep.subr.bf16.mxu0 0
    %888 = vmatpush1.bf16.xpose.msra.mxu0 0
    %889 = vmatprep.subr.bf16.mxu0 0
    %890 = vmatpush1.bf16.xpose.msra.mxu0 0
    %891 = vmatprep.subr.bf16.mxu0 0
    %892 = vmatpush1.bf16.xpose.msra.mxu0 0
    %893 = vmatprep.mubr.bf16.mxu0 0
    %894 = vmatmul.mubr.bf16.gmra.mrb[0].mxu0 %v856
    %v895 = vpop.f32.mrb[0].mxu0
    %v896 = vadd.f32 %v174, %v895
    %v897 = vpop.f32.mrb[0].mxu0
    %v898 = vpop.f32.mrb[0].mxu0
    %v899 = vpop.f32.mrb[0].mxu0
    %900 = vdwg.mxu0
    %901 = vrot.lane.b32.xlu0 %v166, 104
    %v902 = vpop.permute.xlu0 %901
    %903 = vrot.lane.b32.xlu0 %v168, 72
    %v904 = vpop.permute.xlu0 %903
    %v906 = vsel %vm184, %v902, 0
    %v909 = vsel %vm184, %v904, 0
    %911 = vmatprep.subr.bf16.mxu0 0
    %912 = vmatpush1.bf16.xpose.msra.mxu0 %v909
    %913 = vmatprep.subr.bf16.mxu0 0
    %914 = vmatpush1.bf16.xpose.msra.mxu0 0
    %915 = vmatprep.subr.bf16.mxu0 0
    %916 = vmatpush1.bf16.xpose.msra.mxu0 0
    %917 = vmatprep.subr.bf16.mxu0 0
    %918 = vmatpush1.bf16.xpose.msra.mxu0 0
    %919 = vmatprep.subr.bf16.mxu0 0
    %920 = vmatpush1.bf16.xpose.msra.mxu0 0
    %921 = vmatprep.subr.bf16.mxu0 0
    %922 = vmatpush1.bf16.xpose.msra.mxu0 0
    %923 = vmatprep.subr.bf16.mxu0 0
    %924 = vmatpush1.bf16.xpose.msra.mxu0 0
    %925 = vmatprep.subr.bf16.mxu0 0
    %926 = vmatpush1.bf16.xpose.msra.mxu0 0
    %927 = vmatprep.subr.bf16.mxu0 0
    %928 = vmatpush1.bf16.xpose.msra.mxu0 0
    %929 = vmatprep.subr.bf16.mxu0 0
    %930 = vmatpush1.bf16.xpose.msra.mxu0 0
    %931 = vmatprep.subr.bf16.mxu0 0
    %932 = vmatpush1.bf16.xpose.msra.mxu0 0
    %933 = vmatprep.subr.bf16.mxu0 0
    %934 = vmatpush1.bf16.xpose.msra.mxu0 0
    %935 = vmatprep.subr.bf16.mxu0 0
    %936 = vmatpush1.bf16.xpose.msra.mxu0 0
    %937 = vmatprep.subr.bf16.mxu0 0
    %938 = vmatpush1.bf16.xpose.msra.mxu0 0
    %939 = vmatprep.subr.bf16.mxu0 0
    %940 = vmatpush1.bf16.xpose.msra.mxu0 0
    %941 = vmatprep.subr.bf16.mxu0 0
    %942 = vmatpush1.bf16.xpose.msra.mxu0 0
    %943 = vmatprep.mubr.bf16.mxu0 0
    %944 = vmatmul.mubr.bf16.gmra.mrb[0].mxu0 %v906
    %v945 = vpop.f32.mrb[0].mxu0
    %v946 = vadd.f32 %v178, %v945
    %v947 = vpop.f32.mrb[0].mxu0
    %v948 = vpop.f32.mrb[0].mxu0
    %v949 = vpop.f32.mrb[0].mxu0
    %950 = vdwg.mxu0
    %v951 = vsel %vm184, %v896, -inf
    %952 = vmax.xlane.f32.xlu0 %v951
    %v953 = vpop.xlane.xlu0 %952
    %v954 = vsel %vm184, %v946, -inf
    %955 = vmax.xlane.f32.xlu0 %v954
    %v956 = vpop.xlane.xlu0 %955
    %v957 = vsub.f32 %v896, %v953
    %v958 = vsub.f32 %v946, %v956
    %v959 = vmul.f32 %v957, 1.442695
    %v960 = vpow.pop %v959
    %v961 = vmul.f32 %v958, 1.442695
    %v962 = vpow.pop %v961
    %v963 = vsel %vm184, %v960, 0.0
    %964 = vadd.xlane.f32.xlu0 %v963
    %v965 = vpop.xlane.xlu0 %964
    %v966 = vsel %vm184, %v962, 0.0
    %967 = vadd.xlane.f32.xlu0 %v966
    %v968 = vpop.xlane.xlu0 %967
    %v969 = vrcp.pop %v965
    %v970 = vrcp.pop %v968
    %v971 = vmul.f32 %v960, %v969
    %v972 = vmul.f32 %v962, %v970
    %s973 = scalar_lea.vmem %s13, 48
    %974 = vst.msk [vmem:[%s973] sm:$0xff] %vm184, %v971
    %975 = vst.msk [vmem:[%s973 + $0x8] sm:$0xff] %vm184, %v972
    %v976 = vpack.c.bf16 %v971, %v971
    %v977 = vpack.c.bf16 %v972, %v972
    %978 = vrot.lane.b32.xlu0 %v167, 40
    %v979 = vpop.permute.xlu0 %978
    %v981 = vsel %vm184, %v976, 0
    %v984 = vsel %vm311, %v979, 0
    %986 = vmatprep.subr.bf16.mxu0 0
    %987 = vmatpush1.bf16.msra.mxu0 %v984
    %988 = vmatprep.subr.bf16.mxu0 0
    %989 = vmatpush1.bf16.msra.mxu0 0
    %990 = vmatprep.subr.bf16.mxu0 0
    %991 = vmatpush1.bf16.msra.mxu0 0
    %992 = vmatprep.subr.bf16.mxu0 0
    %993 = vmatpush1.bf16.msra.mxu0 0
    %994 = vmatprep.subr.bf16.mxu0 0
    %995 = vmatpush1.bf16.msra.mxu0 0
    %996 = vmatprep.subr.bf16.mxu0 0
    %997 = vmatpush1.bf16.msra.mxu0 0
    %998 = vmatprep.subr.bf16.mxu0 0
    %999 = vmatpush1.bf16.msra.mxu0 0
    %1000 = vmatprep.subr.bf16.mxu0 0
    %1001 = vmatpush1.bf16.msra.mxu0 0
    %1002 = vmatprep.subr.bf16.mxu0 0
    %1003 = vmatpush1.bf16.msra.mxu0 0
    %1004 = vmatprep.subr.bf16.mxu0 0
    %1005 = vmatpush1.bf16.msra.mxu0 0
    %1006 = vmatprep.subr.bf16.mxu0 0
    %1007 = vmatpush1.bf16.msra.mxu0 0
    %1008 = vmatprep.subr.bf16.mxu0 0
    %1009 = vmatpush1.bf16.msra.mxu0 0
    %1010 = vmatprep.subr.bf16.mxu0 0
    %1011 = vmatpush1.bf16.msra.mxu0 0
    %1012 = vmatprep.subr.bf16.mxu0 0
    %1013 = vmatpush1.bf16.msra.mxu0 0
    %1014 = vmatprep.subr.bf16.mxu0 0
    %1015 = vmatpush1.bf16.msra.mxu0 0
    %1016 = vmatprep.subr.bf16.mxu0 0
    %1017 = vmatpush1.bf16.msra.mxu0 0
    %1018 = vmatprep.mubr.bf16.mxu0 0
    %1019 = vmatmul.mubr.bf16.gmra.mrb[0].mxu0 %v981
    %v1020 = vpop.f32.mrb[0].mxu0
    %v1021 = vadd.f32 0.0, %v1020
    %v1022 = vpop.f32.mrb[0].mxu0
    %v1023 = vpop.f32.mrb[0].mxu0
    %v1024 = vpop.f32.mrb[0].mxu0
    %1025 = vdwg.mxu0
    %1026 = vrot.lane.b32.xlu0 %v168, 40
    %v1027 = vpop.permute.xlu0 %1026
    %v1029 = vsel %vm184, %v977, 0
    %v1032 = vsel %vm311, %v1027, 0
    %1034 = vmatprep.subr.bf16.mxu0 0
    %1035 = vmatpush1.bf16.msra.mxu0 %v1032
    %1036 = vmatprep.subr.bf16.mxu0 0
    %1037 = vmatpush1.bf16.msra.mxu0 0
    %1038 = vmatprep.subr.bf16.mxu0 0
    %1039 = vmatpush1.bf16.msra.mxu0 0
    %1040 = vmatprep.subr.bf16.mxu0 0
    %1041 = vmatpush1.bf16.msra.mxu0 0
    %1042 = vmatprep.subr.bf16.mxu0 0
    %1043 = vmatpush1.bf16.msra.mxu0 0
    %1044 = vmatprep.subr.bf16.mxu0 0
    %1045 = vmatpush1.bf16.msra.mxu0 0
    %1046 = vmatprep.subr.bf16.mxu0 0
    %1047 = vmatpush1.bf16.msra.mxu0 0
    %1048 = vmatprep.subr.bf16.mxu0 0
    %1049 = vmatpush1.bf16.msra.mxu0 0
    %1050 = vmatprep.subr.bf16.mxu0 0
    %1051 = vmatpush1.bf16.msra.mxu0 0
    %1052 = vmatprep.subr.bf16.mxu0 0
    %1053 = vmatpush1.bf16.msra.mxu0 0
    %1054 = vmatprep.subr.bf16.mxu0 0
    %1055 = vmatpush1.bf16.msra.mxu0 0
    %1056 = vmatprep.subr.bf16.mxu0 0
    %1057 = vmatpush1.bf16.msra.mxu0 0
    %1058 = vmatprep.subr.bf16.mxu0 0
    %1059 = vmatpush1.bf16.msra.mxu0 0
    %1060 = vmatprep.subr.bf16.mxu0 0
    %1061 = vmatpush1.bf16.msra.mxu0 0
    %1062 = vmatprep.subr.bf16.mxu0 0
    %1063 = vmatpush1.bf16.msra.mxu0 0
    %1064 = vmatprep.subr.bf16.mxu0 0
    %1065 = vmatpush1.bf16.msra.mxu0 0
    %1066 = vmatprep.mubr.bf16.mxu0 0
    %1067 = vmatmul.mubr.bf16.gmra.mrb[0].mxu0 %v1029
    %v1068 = vpop.f32.mrb[0].mxu0
    %v1069 = vadd.f32 0.0, %v1068
    %v1070 = vpop.f32.mrb[0].mxu0
    %v1071 = vpop.f32.mrb[0].mxu0
    %v1072 = vpop.f32.mrb[0].mxu0
    %1073 = vdwg.mxu0
    %1076 = vrot.lane.b32.xlu0 %v575, 8
    %v1077 = vpop.permute.xlu0 %1076
    %1078 = vrot.lane.b32.xlu0 %v623, 8
    %v1079 = vpop.permute.xlu0 %1078
    %1084 = vrot.lane.b32.xlu0 %v798, 16
    %v1085 = vpop.permute.xlu0 %1084
    %1086 = vrot.lane.b32.xlu0 %v846, 16
    %v1087 = vpop.permute.xlu0 %1086
    %1092 = vrot.lane.b32.xlu0 %v1021, 24
    %v1093 = vpop.permute.xlu0 %1092
    %1094 = vrot.lane.b32.xlu0 %v1069, 24
    %v1095 = vpop.permute.xlu0 %1094
    %v1098 = vsel %vm184, %v350, %v1077
    %v1099 = vsel %vm184, %v398, %v1079
    %vm1100 = vcmask 130048
    %v1101 = vsel %vm1100, %v1098, %v1085
    %v1102 = vsel %vm1100, %v1099, %v1087
    %vm1103 = vcmask 195584
    %v1104 = vsel %vm1103, %v1101, %v1093
    %v1105 = vsel %vm1103, %v1102, %v1095
    %v1106 = vpack.c.bf16 %v1105, %v1104
    %v1107 = vld [vmem:[%s5] sm:$0xf]
    %v1108 = vld [vmem:[%s5 + $0x4] sm:$0xf]
    %v1109 = vld [vmem:[%s5 + $0x8] sm:$0xf]
    %v1110 = vld [vmem:[%s5 + $0xc] sm:$0xf]
    %v1111 = vlaneseq
    %v1112 = vshrl.u32 %v1111, 7
    %v1113 = vsub.s32 0, %v1112
    %v1114 = vrot.slane %v94, %v1113
    %v1119 = vunpack.c.l.b16 %v1107
    %v1120 = vunpack.c.l.b16 %v1108
    %v1121 = vunpack.c.l.b16 %v1109
    %v1122 = vunpack.c.l.b16 %v1110
    %v1123 = vpack.c.b16 %v1120, %v1119
    %v1124 = vpack.c.b16 %v1122, %v1121
    %v1128 = vsel %vm50, %v1106, 0
    %1130 = vmatprep.subr.bf16.mxu0 0
    %1131 = vmatpush1.bf16.msra.mxu0 %v1123
    %1132 = vmatprep.subr.bf16.mxu0 0
    %1133 = vmatpush1.bf16.msra.mxu0 %v1124
    %1134 = vmatprep.subr.bf16.mxu0 0
    %1135 = vmatpush1.bf16.msra.mxu0 0
    %1136 = vmatprep.subr.bf16.mxu0 0
    %1137 = vmatpush1.bf16.msra.mxu0 0
    %1138 = vmatprep.subr.bf16.mxu0 0
    %1139 = vmatpush1.bf16.msra.mxu0 0
    %1140 = vmatprep.subr.bf16.mxu0 0
    %1141 = vmatpush1.bf16.msra.mxu0 0
    %1142 = vmatprep.subr.bf16.mxu0 0
    %1143 = vmatpush1.bf16.msra.mxu0 0
    %1144 = vmatprep.subr.bf16.mxu0 0
    %1145 = vmatpush1.bf16.msra.mxu0 0
    %1146 = vmatprep.subr.bf16.mxu0 0
    %1147 = vmatpush1.bf16.msra.mxu0 0
    %1148 = vmatprep.subr.bf16.mxu0 0
    %1149 = vmatpush1.bf16.msra.mxu0 0
    %1150 = vmatprep.subr.bf16.mxu0 0
    %1151 = vmatpush1.bf16.msra.mxu0 0
    %1152 = vmatprep.subr.bf16.mxu0 0
    %1153 = vmatpush1.bf16.msra.mxu0 0
    %1154 = vmatprep.subr.bf16.mxu0 0
    %1155 = vmatpush1.bf16.msra.mxu0 0
    %1156 = vmatprep.subr.bf16.mxu0 0
    %1157 = vmatpush1.bf16.msra.mxu0 0
    %1158 = vmatprep.subr.bf16.mxu0 0
    %1159 = vmatpush1.bf16.msra.mxu0 0
    %1160 = vmatprep.subr.bf16.mxu0 0
    %1161 = vmatpush1.bf16.msra.mxu0 0
    %1162 = vmatprep.mubr.bf16.mxu0 0
    %1163 = vmatmul.mubr.bf16.gmra.mrb[0].mxu0 %v1128
    %v1164 = vpop.f32.mrb[0].mxu0
    %v1165 = vadd.f32 %v1114, %v1164
    %v1166 = vpop.f32.mrb[0].mxu0
    %v1167 = vpop.f32.mrb[0].mxu0
    %v1168 = vadd.f32 %v1114, %v1167
    %v1169 = vpop.f32.mrb[0].mxu0
    %1170 = vdwg.mxu0
    %v1171 = vadd.f32 %v1165, %v88
    %v1172 = vadd.f32 %v1168, %v89
    %v1173 = vsel %vm50, %v1171, 0.0
    %1174 = vadd.xlane.f32.xlu0 %v1173
    %v1175 = vpop.xlane.xlu0 %1174
    %v1176 = vsel %vm50, %v1172, 0.0
    %1177 = vadd.xlane.f32.xlu0 %v1176
    %v1178 = vpop.xlane.xlu0 %1177
    %v1179 = vmul.f32 %v1175, %v57
    %v1180 = vmul.f32 %v1178, %v57
    %v1181 = vsub.f32 %v1171, %v1179
    %v1182 = vsub.f32 %v1172, %v1180
    %v1183 = vmul.f32 %v1181, %v1181
    %v1184 = vmul.f32 %v1182, %v1182
    %v1185 = vsel %vm50, %v1183, 0.0
    %1186 = vadd.xlane.f32.xlu0 %v1185
    %v1187 = vpop.xlane.xlu0 %1186
    %v1188 = vsel %vm50, %v1184, 0.0
    %1189 = vadd.xlane.f32.xlu0 %v1188
    %v1190 = vpop.xlane.xlu0 %1189
    %v1191 = vmul.f32 %v1187, %v57
    %v1192 = vmul.f32 %v1190, %v57
    %v1193 = vadd.f32 %v1191, 1e-12
    %v1194 = vadd.f32 %v1192, 1e-12
    %v1195 = vrsqrt.pop %v1193
    %v1196 = vrsqrt.pop %v1194
    %v1197 = vmul.f32 %v1181, %v1195
    %v1198 = vmul.f32 %v1182, %v1196
    %v1199 = vlaneseq
    %v1200 = vshrl.u32 %v1199, 7
    %v1201 = vsub.s32 1, %v1200
    %v1202 = vrot.slane %v94, %v1201
    %v1203 = vmul.f32 %v1197, %v1202
    %v1204 = vmul.f32 %v1198, %v1202
    %v1205 = vlaneseq
    %v1206 = vshrl.u32 %v1205, 7
    %v1207 = vsub.s32 2, %v1206
    %v1208 = vrot.slane %v94, %v1207
    %v1209 = vadd.f32 %v1203, %v1208
    %v1210 = vadd.f32 %v1204, %v1208
    %v1211 = vpack.c.bf16 %v1210, %v1209
    %v1212 = vld [vmem:[%s6] sm:$0xf]
    %v1213 = vld [vmem:[%s6 + $0x4] sm:$0xf]
    %v1214 = vld [vmem:[%s6 + $0x8] sm:$0xf]
    %v1215 = vld [vmem:[%s6 + $0xc] sm:$0xf]
    %v1216 = vld [vmem:[%s7] sm:$0x1]
    %v1218 = vlaneseq
    %v1219 = vshrl.u32 %v1218, 7
    %v1220 = vsub.s32 0, %v1219
    %v1221 = vrot.slane %v1216, %v1220
    %v1227 = vunpack.c.l.b16 %v1212
    %v1228 = vunpack.c.l.b16 %v1213
    %v1229 = vunpack.c.l.b16 %v1214
    %v1230 = vunpack.c.l.b16 %v1215
    %v1231 = vpack.c.b16 %v1228, %v1227
    %v1232 = vpack.c.b16 %v1230, %v1229
    %v1236 = vsel %vm50, %v1211, 0
    %1238 = vmatprep.subr.bf16.mxu0 0
    %1239 = vmatpush1.bf16.msra.mxu0 %v1231
    %1240 = vmatprep.subr.bf16.mxu0 0
    %1241 = vmatpush1.bf16.msra.mxu0 %v1232
    %1242 = vmatprep.subr.bf16.mxu0 0
    %1243 = vmatpush1.bf16.msra.mxu0 0
    %1244 = vmatprep.subr.bf16.mxu0 0
    %1245 = vmatpush1.bf16.msra.mxu0 0
    %1246 = vmatprep.subr.bf16.mxu0 0
    %1247 = vmatpush1.bf16.msra.mxu0 0
    %1248 = vmatprep.subr.bf16.mxu0 0
    %1249 = vmatpush1.bf16.msra.mxu0 0
    %1250 = vmatprep.subr.bf16.mxu0 0
    %1251 = vmatpush1.bf16.msra.mxu0 0
    %1252 = vmatprep.subr.bf16.mxu0 0
    %1253 = vmatpush1.bf16.msra.mxu0 0
    %1254 = vmatprep.subr.bf16.mxu0 0
    %1255 = vmatpush1.bf16.msra.mxu0 0
    %1256 = vmatprep.subr.bf16.mxu0 0
    %1257 = vmatpush1.bf16.msra.mxu0 0
    %1258 = vmatprep.subr.bf16.mxu0 0
    %1259 = vmatpush1.bf16.msra.mxu0 0
    %1260 = vmatprep.subr.bf16.mxu0 0
    %1261 = vmatpush1.bf16.msra.mxu0 0
    %1262 = vmatprep.subr.bf16.mxu0 0
    %1263 = vmatpush1.bf16.msra.mxu0 0
    %1264 = vmatprep.subr.bf16.mxu0 0
    %1265 = vmatpush1.bf16.msra.mxu0 0
    %1266 = vmatprep.subr.bf16.mxu0 0
    %1267 = vmatpush1.bf16.msra.mxu0 0
    %1268 = vmatprep.subr.bf16.mxu0 0
    %1269 = vmatpush1.bf16.msra.mxu0 0
    %1270 = vmatprep.mubr.bf16.mxu0 0
    %1271 = vmatmul.mubr.bf16.gmra.mrb[0].mxu0 %v1236
    %v1272 = vpop.f32.mrb[0].mxu0
    %v1273 = vadd.f32 %v1221, %v1272
    %v1274 = vpop.f32.mrb[0].mxu0
    %v1275 = vpop.f32.mrb[0].mxu0
    %v1276 = vadd.f32 %v1221, %v1275
    %v1277 = vpop.f32.mrb[0].mxu0
    %1278 = vdwg.mxu0
    %v1279 = vmul.f32 %v1273, %v1273
    %v1280 = vmul.f32 %v1276, %v1276
    %v1281 = vmul.f32 %v1273, %v1279
    %v1282 = vmul.f32 %v1276, %v1280
    %v1283 = vmul.f32 %v1281, 0.044715
    %v1284 = vmul.f32 %v1282, 0.044715
    %v1285 = vadd.f32 %v1273, %v1283
    %v1286 = vadd.f32 %v1276, %v1284
    %v1287 = vmul.f32 %v1285, 0.7978846
    %v1288 = vmul.f32 %v1286, 0.7978846
    %v1289 = vtanh.pop %v1287
    %v1290 = vtanh.pop %v1288
    %v1291 = vadd.f32 %v1289, 1.0
    %v1292 = vadd.f32 %v1290, 1.0
    %v1293 = vmul.f32 %v1291, 0.5
    %v1294 = vmul.f32 %v1292, 0.5
    %v1295 = vmul.f32 %v1273, %v1293
    %v1296 = vmul.f32 %v1276, %v1294
    %v1297 = vpack.c.bf16 %v1296, %v1295
    %v1298 = vld [vmem:[%s8] sm:$0xf]
    %v1299 = vld [vmem:[%s8 + $0x4] sm:$0xf]
    %v1300 = vld [vmem:[%s8 + $0x8] sm:$0xf]
    %v1301 = vld [vmem:[%s8 + $0xc] sm:$0xf]
    %v1302 = vld [vmem:[%s8 + $0x10] sm:$0xf]
    %v1303 = vld [vmem:[%s8 + $0x14] sm:$0xf]
    %v1304 = vld [vmem:[%s8 + $0x18] sm:$0xf]
    %v1305 = vld [vmem:[%s8 + $0x1c] sm:$0xf]
    %v1306 = vlaneseq
    %v1307 = vshrl.u32 %v1306, 7
    %v1308 = vsub.s32 3, %v1307
    %v1309 = vrot.slane %v94, %v1308
    %v1318 = vunpack.c.l.b16 %v1298
    %v1319 = vunpack.c.l.b16 %v1299
    %v1320 = vunpack.c.l.b16 %v1300
    %v1321 = vunpack.c.l.b16 %v1301
    %v1322 = vunpack.c.l.b16 %v1302
    %v1323 = vunpack.c.l.b16 %v1303
    %v1324 = vunpack.c.l.b16 %v1304
    %v1325 = vunpack.c.l.b16 %v1305
    %v1326 = vpack.c.b16 %v1319, %v1318
    %v1327 = vpack.c.b16 %v1321, %v1320
    %v1328 = vpack.c.b16 %v1323, %v1322
    %v1329 = vpack.c.b16 %v1325, %v1324
    %vm1334 = vcmask 523264
    %v1336 = vsel %vm1334, %v1297, 0
    %1338 = vmatprep.subr.bf16.mxu0 0
    %1339 = vmatpush1.bf16.msra.mxu0 %v1326
    %1340 = vmatprep.subr.bf16.mxu0 0
    %1341 = vmatpush1.bf16.msra.mxu0 %v1327
    %1342 = vmatprep.subr.bf16.mxu0 0
    %1343 = vmatpush1.bf16.msra.mxu0 %v1328
    %1344 = vmatprep.subr.bf16.mxu0 0
    %1345 = vmatpush1.bf16.msra.mxu0 %v1329
    %1346 = vmatprep.subr.bf16.mxu0 0
    %1347 = vmatpush1.bf16.msra.mxu0 0
    %1348 = vmatprep.subr.bf16.mxu0 0
    %1349 = vmatpush1.bf16.msra.mxu0 0
    %1350 = vmatprep.subr.bf16.mxu0 0
    %1351 = vmatpush1.bf16.msra.mxu0 0
    %1352 = vmatprep.subr.bf16.mxu0 0
    %1353 = vmatpush1.bf16.msra.mxu0 0
    %1354 = vmatprep.subr.bf16.mxu0 0
    %1355 = vmatpush1.bf16.msra.mxu0 0
    %1356 = vmatprep.subr.bf16.mxu0 0
    %1357 = vmatpush1.bf16.msra.mxu0 0
    %1358 = vmatprep.subr.bf16.mxu0 0
    %1359 = vmatpush1.bf16.msra.mxu0 0
    %1360 = vmatprep.subr.bf16.mxu0 0
    %1361 = vmatpush1.bf16.msra.mxu0 0
    %1362 = vmatprep.subr.bf16.mxu0 0
    %1363 = vmatpush1.bf16.msra.mxu0 0
    %1364 = vmatprep.subr.bf16.mxu0 0
    %1365 = vmatpush1.bf16.msra.mxu0 0
    %1366 = vmatprep.subr.bf16.mxu0 0
    %1367 = vmatpush1.bf16.msra.mxu0 0
    %1368 = vmatprep.subr.bf16.mxu0 0
    %1369 = vmatpush1.bf16.msra.mxu0 0
    %1370 = vmatprep.mubr.bf16.mxu0 0
    %1371 = vmatmul.mubr.bf16.gmra.mrb[0].mxu0 %v1336
    %v1372 = vpop.f32.mrb[0].mxu0
    %v1373 = vadd.f32 %v1309, %v1372
    %v1374 = vpop.f32.mrb[0].mxu0
    %v1375 = vpop.f32.mrb[0].mxu0
    %v1376 = vadd.f32 %v1309, %v1375
    %v1377 = vpop.f32.mrb[0].mxu0
    %1378 = vdwg.mxu0
    %v1379 = vadd.f32 %v1373, %v1209
    %v1380 = vadd.f32 %v1376, %v1210
    %v1381 = vsel %vm50, %v1379, 0.0
    %1382 = vadd.xlane.f32.xlu0 %v1381
    %v1383 = vpop.xlane.xlu0 %1382
    %v1384 = vsel %vm50, %v1380, 0.0
    %1385 = vadd.xlane.f32.xlu0 %v1384
    %v1386 = vpop.xlane.xlu0 %1385
    %v1387 = vmul.f32 %v1383, %v57
    %v1388 = vmul.f32 %v1386, %v57
    %v1389 = vsub.f32 %v1379, %v1387
    %v1390 = vsub.f32 %v1380, %v1388
    %v1391 = vmul.f32 %v1389, %v1389
    %v1392 = vmul.f32 %v1390, %v1390
    %v1393 = vsel %vm50, %v1391, 0.0
    %1394 = vadd.xlane.f32.xlu0 %v1393
    %v1395 = vpop.xlane.xlu0 %1394
    %v1396 = vsel %vm50, %v1392, 0.0
    %1397 = vadd.xlane.f32.xlu0 %v1396
    %v1398 = vpop.xlane.xlu0 %1397
    %v1399 = vmul.f32 %v1395, %v57
    %v1400 = vmul.f32 %v1398, %v57
    %v1401 = vadd.f32 %v1399, 1e-12
    %v1402 = vadd.f32 %v1400, 1e-12
    %v1403 = vrsqrt.pop %v1401
    %v1404 = vrsqrt.pop %v1402
    %v1405 = vmul.f32 %v1389, %v1403
    %v1406 = vmul.f32 %v1390, %v1404
    %v1407 = vlaneseq
    %v1408 = vshrl.u32 %v1407, 7
    %v1409 = vsub.s32 4, %v1408
    %v1410 = vrot.slane %v94, %v1409
    %v1411 = vmul.f32 %v1405, %v1410
    %v1412 = vmul.f32 %v1406, %v1410
    %v1413 = vlaneseq
    %v1414 = vshrl.u32 %v1413, 7
    %v1415 = vsub.s32 5, %v1414
    %v1416 = vrot.slane %v94, %v1415
    %v1417 = vadd.f32 %v1411, %v1416
    %v1418 = vadd.f32 %v1412, %v1416
    %s1419 = scalar_lea.vmem %s12, 16
    %1420 = vst.msk [vmem:[%s1419] sm:$0xff] %vm50, %v1417
    %1421 = vst.msk [vmem:[%s1419 + $0x8] sm:$0xff] %vm50, %v1418
    %s1422 = scalar_lea.vmem %s9, 8
    %v1423 = vld [vmem:[%s1422] sm:$0xff]
    %v1424 = vpack.c.bf16 %v1418, %v1417
    %s1425 = scalar_lea.vmem %s3, 16
    %v1426 = vld [vmem:[%s1425] sm:$0xf]
    %v1427 = vld [vmem:[%s1425 + $0x4] sm:$0xf]
    %v1428 = vld [vmem:[%s1425 + $0x8] sm:$0xf]
    %v1429 = vld [vmem:[%s1425 + $0xc] sm:$0xf]
    %s1430 = scalar_lea.vmem %s4, 1
    %v1431 = vld [vmem:[%s1430] sm:$0x1]
    %v1433 = vlaneseq
    %v1434 = vshrl.u32 %v1433, 7
    %v1435 = vsub.s32 0, %v1434
    %v1436 = vrot.slane %v1431, %v1435
    %v1442 = vunpack.c.l.b16 %v1426
    %v1443 = vunpack.c.l.b16 %v1427
    %v1444 = vunpack.c.l.b16 %v1428
    %v1445 = vunpack.c.l.b16 %v1429
    %v1446 = vpack.c.b16 %v1443, %v1442
    %v1447 = vpack.c.b16 %v1445, %v1444
    %v1451 = vsel %vm50, %v1424, 0
    %1453 = vmatprep.subr.bf16.mxu0 0
    %1454 = vmatpush1.bf16.msra.mxu0 %v1446
    %1455 = vmatprep.subr.bf16.mxu0 0
    %1456 = vmatpush1.bf16.msra.mxu0 %v1447
    %1457 = vmatprep.subr.bf16.mxu0 0
    %1458 = vmatpush1.bf16.msra.mxu0 0
    %1459 = vmatprep.subr.bf16.mxu0 0
    %1460 = vmatpush1.bf16.msra.mxu0 0
    %1461 = vmatprep.subr.bf16.mxu0 0
    %1462 = vmatpush1.bf16.msra.mxu0 0
    %1463 = vmatprep.subr.bf16.mxu0 0
    %1464 = vmatpush1.bf16.msra.mxu0 0
    %1465 = vmatprep.subr.bf16.mxu0 0
    %1466 = vmatpush1.bf16.msra.mxu0 0
    %1467 = vmatprep.subr.bf16.mxu0 0
    %1468 = vmatpush1.bf16.msra.mxu0 0
    %1469 = vmatprep.subr.bf16.mxu0 0
    %1470 = vmatpush1.bf16.msra.mxu0 0
    %1471 = vmatprep.subr.bf16.mxu0 0
    %1472 = vmatpush1.bf16.msra.mxu0 0
    %1473 = vmatprep.subr.bf16.mxu0 0
    %1474 = vmatpush1.bf16.msra.mxu0 0
    %1475 = vmatprep.subr.bf16.mxu0 0
    %1476 = vmatpush1.bf16.msra.mxu0 0
    %1477 = vmatprep.subr.bf16.mxu0 0
    %1478 = vmatpush1.bf16.msra.mxu0 0
    %1479 = vmatprep.subr.bf16.mxu0 0
    %1480 = vmatpush1.bf16.msra.mxu0 0
    %1481 = vmatprep.subr.bf16.mxu0 0
    %1482 = vmatpush1.bf16.msra.mxu0 0
    %1483 = vmatprep.subr.bf16.mxu0 0
    %1484 = vmatpush1.bf16.msra.mxu0 0
    %1485 = vmatprep.mubr.bf16.mxu0 0
    %1486 = vmatmul.mubr.bf16.gmra.mrb[0].mxu0 %v1451
    %v1487 = vpop.f32.mrb[0].mxu0
    %v1488 = vadd.f32 %v1436, %v1487
    %v1489 = vpop.f32.mrb[0].mxu0
    %v1490 = vpop.f32.mrb[0].mxu0
    %v1491 = vadd.f32 %v1436, %v1490
    %v1492 = vpop.f32.mrb[0].mxu0
    %1493 = vdwg.mxu0
    %v1494 = vmul.f32 %v1488, 0.35355338
    %v1495 = vmul.f32 %v1491, 0.35355338
    %v1496 = vpack.c.bf16 %v1494, %v1494
    %v1497 = vpack.c.bf16 %v1495, %v1495
    %v1498 = vpack.c.bf16 %v1488, %v1488
    %v1499 = vpack.c.bf16 %v1491, %v1491
    %1501 = vrot.lane.b32.xlu0 %v1498, 96
    %v1502 = vpop.permute.xlu0 %1501
    %v1504 = vsel %vm184, %v1496, 0
    %v1507 = vsel %vm184, %v1502, 0
    %1509 = vmatprep.subr.bf16.mxu0 0
    %1510 = vmatpush1.bf16.xpose.msra.mxu0 %v1507
    %1511 = vmatprep.subr.bf16.mxu0 0
    %1512 = vmatpush1.bf16.xpose.msra.mxu0 0
    %1513 = vmatprep.subr.bf16.mxu0 0
    %1514 = vmatpush1.bf16.xpose.msra.mxu0 0
    %1515 = vmatprep.subr.bf16.mxu0 0
    %1516 = vmatpush1.bf16.xpose.msra.mxu0 0
    %1517 = vmatprep.subr.bf16.mxu0 0
    %1518 = vmatpush1.bf16.xpose.msra.mxu0 0
    %1519 = vmatprep.subr.bf16.mxu0 0
    %1520 = vmatpush1.bf16.xpose.msra.mxu0 0
    %1521 = vmatprep.subr.bf16.mxu0 0
    %1522 = vmatpush1.bf16.xpose.msra.mxu0 0
    %1523 = vmatprep.subr.bf16.mxu0 0
    %1524 = vmatpush1.bf16.xpose.msra.mxu0 0
    %1525 = vmatprep.subr.bf16.mxu0 0
    %1526 = vmatpush1.bf16.xpose.msra.mxu0 0
    %1527 = vmatprep.subr.bf16.mxu0 0
    %1528 = vmatpush1.bf16.xpose.msra.mxu0 0
    %1529 = vmatprep.subr.bf16.mxu0 0
    %1530 = vmatpush1.bf16.xpose.msra.mxu0 0
    %1531 = vmatprep.subr.bf16.mxu0 0
    %1532 = vmatpush1.bf16.xpose.msra.mxu0 0
    %1533 = vmatprep.subr.bf16.mxu0 0
    %1534 = vmatpush1.bf16.xpose.msra.mxu0 0
    %1535 = vmatprep.subr.bf16.mxu0 0
    %1536 = vmatpush1.bf16.xpose.msra.mxu0 0
    %1537 = vmatprep.subr.bf16.mxu0 0
    %1538 = vmatpush1.bf16.xpose.msra.mxu0 0
    %1539 = vmatprep.subr.bf16.mxu0 0
    %1540 = vmatpush1.bf16.xpose.msra.mxu0 0
    %1541 = vmatprep.mubr.bf16.mxu0 0
    %1542 = vmatmul.mubr.bf16.gmra.mrb[0].mxu0 %v1504
    %v1543 = vpop.f32.mrb[0].mxu0
    %v1544 = vadd.f32 %v174, %v1543
    %v1545 = vpop.f32.mrb[0].mxu0
    %v1546 = vpop.f32.mrb[0].mxu0
    %v1547 = vpop.f32.mrb[0].mxu0
    %1548 = vdwg.mxu0
    %1550 = vrot.lane.b32.xlu0 %v1499, 96
    %v1551 = vpop.permute.xlu0 %1550
    %v1553 = vsel %vm184, %v1497, 0
    %v1556 = vsel %vm184, %v1551, 0
    %1558 = vmatprep.subr.bf16.mxu0 0
    %1559 = vmatpush1.bf16.xpose.msra.mxu0 %v1556
    %1560 = vmatprep.subr.bf16.mxu0 0
    %1561 = vmatpush1.bf16.xpose.msra.mxu0 0
    %1562 = vmatprep.subr.bf16.mxu0 0
    %1563 = vmatpush1.bf16.xpose.msra.mxu0 0
    %1564 = vmatprep.subr.bf16.mxu0 0
    %1565 = vmatpush1.bf16.xpose.msra.mxu0 0
    %1566 = vmatprep.subr.bf16.mxu0 0
    %1567 = vmatpush1.bf16.xpose.msra.mxu0 0
    %1568 = vmatprep.subr.bf16.mxu0 0
    %1569 = vmatpush1.bf16.xpose.msra.mxu0 0
    %1570 = vmatprep.subr.bf16.mxu0 0
    %1571 = vmatpush1.bf16.xpose.msra.mxu0 0
    %1572 = vmatprep.subr.bf16.mxu0 0
    %1573 = vmatpush1.bf16.xpose.msra.mxu0 0
    %1574 = vmatprep.subr.bf16.mxu0 0
    %1575 = vmatpush1.bf16.xpose.msra.mxu0 0
    %1576 = vmatprep.subr.bf16.mxu0 0
    %1577 = vmatpush1.bf16.xpose.msra.mxu0 0
    %1578 = vmatprep.subr.bf16.mxu0 0
    %1579 = vmatpush1.bf16.xpose.msra.mxu0 0
    %1580 = vmatprep.subr.bf16.mxu0 0
    %1581 = vmatpush1.bf16.xpose.msra.mxu0 0
    %1582 = vmatprep.subr.bf16.mxu0 0
    %1583 = vmatpush1.bf16.xpose.msra.mxu0 0
    %1584 = vmatprep.subr.bf16.mxu0 0
    %1585 = vmatpush1.bf16.xpose.msra.mxu0 0
    %1586 = vmatprep.subr.bf16.mxu0 0
    %1587 = vmatpush1.bf16.xpose.msra.mxu0 0
    %1588 = vmatprep.subr.bf16.mxu0 0
    %1589 = vmatpush1.bf16.xpose.msra.mxu0 0
    %1590 = vmatprep.mubr.bf16.mxu0 0
    %1591 = vmatmul.mubr.bf16.gmra.mrb[0].mxu0 %v1553
    %v1592 = vpop.f32.mrb[0].mxu0
    %v1593 = vadd.f32 %v178, %v1592
    %v1594 = vpop.f32.mrb[0].mxu0
    %v1595 = vpop.f32.mrb[0].mxu0
    %v1596 = vpop.f32.mrb[0].mxu0
    %1597 = vdwg.mxu0
    %v1598 = vsel %vm184, %v1544, -inf
    %1599 = vmax.xlane.f32.xlu0 %v1598
    %v1600 = vpop.xlane.xlu0 %1599
    %v1601 = vsel %vm184, %v1593, -inf
    %1602 = vmax.xlane.f32.xlu0 %v1601
    %v1603 = vpop.xlane.xlu0 %1602
    %v1604 = vsub.f32 %v1544, %v1600
    %v1605 = vsub.f32 %v1593, %v1603
    %v1606 = vmul.f32 %v1604, 1.442695
    %v1607 = vpow.pop %v1606
    %v1608 = vmul.f32 %v1605, 1.442695
    %v1609 = vpow.pop %v1608
    %v1610 = vsel %vm184, %v1607, 0.0
    %1611 = vadd.xlane.f32.xlu0 %v1610
    %v1612 = vpop.xlane.xlu0 %1611
    %v1613 = vsel %vm184, %v1609, 0.0
    %1614 = vadd.xlane.f32.xlu0 %v1613
    %v1615 = vpop.xlane.xlu0 %1614
    %v1616 = vrcp.pop %v1612
    %v1617 = vrcp.pop %v1615
    %v1618 = vmul.f32 %v1607, %v1616
    %v1619 = vmul.f32 %v1609, %v1617
    %s1620 = scalar_lea.vmem %s13, 64
    %1621 = vst.msk [vmem:[%s1620] sm:$0xff] %vm184, %v1618
    %1622 = vst.msk [vmem:[%s1620 + $0x8] sm:$0xff] %vm184, %v1619
    %v1623 = vpack.c.bf16 %v1618, %v1618
    %v1624 = vpack.c.bf16 %v1619, %v1619
    %1625 = vrot.lane.b32.xlu0 %v1498, 64
    %v1626 = vpop.permute.xlu0 %1625
    %v1628 = vsel %vm184, %v1623, 0
    %v1631 = vsel %vm311, %v1626, 0
    %1633 = vmatprep.subr.bf16.mxu0 0
    %1634 = vmatpush1.bf16.msra.mxu0 %v1631
    %1635 = vmatprep.subr.bf16.mxu0 0
    %1636 = vmatpush1.bf16.msra.mxu0 0
    %1637 = vmatprep.subr.bf16.mxu0 0
    %1638 = vmatpush1.bf16.msra.mxu0 0
    %1639 = vmatprep.subr.bf16.mxu0 0
    %1640 = vmatpush1.bf16.msra.mxu0 0
    %1641 = vmatprep.subr.bf16.mxu0 0
    %1642 = vmatpush1.bf16.msra.mxu0 0
    %1643 = vmatprep.subr.bf16.mxu0 0
    %1644 = vmatpush1.bf16.msra.mxu0 0
    %1645 = vmatprep.subr.bf16.mxu0 0
    %1646 = vmatpush1.bf16.msra.mxu0 0
    %1647 = vmatprep.subr.bf16.mxu0 0
    %1648 = vmatpush1.bf16.msra.mxu0 0
    %1649 = vmatprep.subr.bf16.mxu0 0
    %1650 = vmatpush1.bf16.msra.mxu0 0
    %1651 = vmatprep.subr.bf16.mxu0 0
    %1652 = vmatpush1.bf16.msra.mxu0 0
    %1653 = vmatprep.subr.bf16.mxu0 0
    %1654 = vmatpush1.bf16.msra.mxu0 0
    %1655 = vmatprep.subr.bf16.mxu0 0
    %1656 = vmatpush1.bf16.msra.mxu0 0
    %1657 = vmatprep.subr.bf16.mxu0 0
    %1658 = vmatpush1.bf16.msra.mxu0 0
    %1659 = vmatprep.subr.bf16.mxu0 0
    %1660 = vmatpush1.bf16.msra.mxu0 0
    %1661 = vmatprep.subr.bf16.mxu0 0
    %1662 = vmatpush1.bf16.msra.mxu0 0
    %1663 = vmatprep.subr.bf16.mxu0 0
    %1664 = vmatpush1.bf16.msra.mxu0 0
    %1665 = vmatprep.mubr.bf16.mxu0 0
    %1666 = vmatmul.mubr.bf16.gmra.mrb[0].mxu0 %v1628
    %v1667 = vpop.f32.mrb[0].mxu0
    %v1668 = vadd.f32 0.0, %v1667
    %v1669 = vpop.f32.mrb[0].mxu0
    %v1670 = vpop.f32.mrb[0].mxu0
    %v1671 = vpop.f32.mrb[0].mxu0
    %1672 = vdwg.mxu0
    %1673 = vrot.lane.b32.xlu0 %v1499, 64
    %v1674 = vpop.permute.xlu0 %1673
    %v1676 = vsel %vm184, %v1624, 0
    %v1679 = vsel %vm311, %v1674, 0
    %1681 = vmatprep.subr.bf16.mxu0 0
    %1682 = vmatpush1.bf16.msra.mxu0 %v1679
    %1683 = vmatprep.subr.bf16.mxu0 0
    %1684 = vmatpush1.bf16.msra.mxu0 0
    %1685 = vmatprep.subr.bf16.mxu0 0
    %1686 = vmatpush1.bf16.msra.mxu0 0
    %1687 = vmatprep.subr.bf16.mxu0 0
    %1688 = vmatpush1.bf16.msra.mxu0 0
    %1689 = vmatprep.subr.bf16.mxu0 0
    %1690 = vmatpush1.bf16.msra.mxu0 0
    %1691 = vmatprep.subr.bf16.mxu0 0
    %1692 = vmatpush1.bf16.msra.mxu0 0
    %1693 = vmatprep.subr.bf16.mxu0 0
    %1694 = vmatpush1.bf16.msra.mxu0 0
    %1695 = vmatprep.subr.bf16.mxu0 0
    %1696 = vmatpush1.bf16.msra.mxu0 0
    %1697 = vmatprep.subr.bf16.mxu0 0
    %1698 = vmatpush1.bf16.msra.mxu0 0
    %1699 = vmatprep.subr.bf16.mxu0 0
    %1700 = vmatpush1.bf16.msra.mxu0 0
    %1701 = vmatprep.subr.bf16.mxu0 0
    %1702 = vmatpush1.bf16.msra.mxu0 0
    %1703 = vmatprep.subr.bf16.mxu0 0
    %1704 = vmatpush1.bf16.msra.mxu0 0
    %1705 = vmatprep.subr.bf16.mxu0 0
    %1706 = vmatpush1.bf16.msra.mxu0 0
    %1707 = vmatprep.subr.bf16.mxu0 0
    %1708 = vmatpush1.bf16.msra.mxu0 0
    %1709 = vmatprep.subr.bf16.mxu0 0
    %1710 = vmatpush1.bf16.msra.mxu0 0
    %1711 = vmatprep.subr.bf16.mxu0 0
    %1712 = vmatpush1.bf16.msra.mxu0 0
    %1713 = vmatprep.mubr.bf16.mxu0 0
    %1714 = vmatmul.mubr.bf16.gmra.mrb[0].mxu0 %v1676
    %v1715 = vpop.f32.mrb[0].mxu0
    %v1716 = vadd.f32 0.0, %v1715
    %v1717 = vpop.f32.mrb[0].mxu0
    %v1718 = vpop.f32.mrb[0].mxu0
    %v1719 = vpop.f32.mrb[0].mxu0
    %1720 = vdwg.mxu0
    %1722 = vrot.lane.b32.xlu0 %v1496, 120
    %v1723 = vpop.permute.xlu0 %1722
    %1724 = vrot.lane.b32.xlu0 %v1498, 88
    %v1725 = vpop.permute.xlu0 %1724
    %v1727 = vsel %vm184, %v1723, 0
    %v1730 = vsel %vm184, %v1725, 0
    %1732 = vmatprep.subr.bf16.mxu0 0
    %1733 = vmatpush1.bf16.xpose.msra.mxu0 %v1730
    %1734 = vmatprep.subr.bf16.mxu0 0
    %1735 = vmatpush1.bf16.xpose.msra.mxu0 0
    %1736 = vmatprep.subr.bf16.mxu0 0
    %1737 = vmatpush1.bf16.xpose.msra.mxu0 0
    %1738 = vmatprep.subr.bf16.mxu0 0
    %1739 = vmatpush1.bf16.xpose.msra.mxu0 0
    %1740 = vmatprep.subr.bf16.mxu0 0
    %1741 = vmatpush1.bf16.xpose.msra.mxu0 0
    %1742 = vmatprep.subr.bf16.mxu0 0
    %1743 = vmatpush1.bf16.xpose.msra.mxu0 0
    %1744 = vmatprep.subr.bf16.mxu0 0
    %1745 = vmatpush1.bf16.xpose.msra.mxu0 0
    %1746 = vmatprep.subr.bf16.mxu0 0
    %1747 = vmatpush1.bf16.xpose.msra.mxu0 0
    %1748 = vmatprep.subr.bf16.mxu0 0
    %1749 = vmatpush1.bf16.xpose.msra.mxu0 0
    %1750 = vmatprep.subr.bf16.mxu0 0
    %1751 = vmatpush1.bf16.xpose.msra.mxu0 0
    %1752 = vmatprep.subr.bf16.mxu0 0
    %1753 = vmatpush1.bf16.xpose.msra.mxu0 0
    %1754 = vmatprep.subr.bf16.mxu0 0
    %1755 = vmatpush1.bf16.xpose.msra.mxu0 0
    %1756 = vmatprep.subr.bf16.mxu0 0
    %1757 = vmatpush1.bf16.xpose.msra.mxu0 0
    %1758 = vmatprep.subr.bf16.mxu0 0
    %1759 = vmatpush1.bf16.xpose.msra.mxu0 0
    %1760 = vmatprep.subr.bf16.mxu0 0
    %1761 = vmatpush1.bf16.xpose.msra.mxu0 0
    %1762 = vmatprep.subr.bf16.mxu0 0
    %1763 = vmatpush1.bf16.xpose.msra.mxu0 0
    %1764 = vmatprep.mubr.bf16.mxu0 0
    %1765 = vmatmul.mubr.bf16.gmra.mrb[0].mxu0 %v1727
    %v1766 = vpop.f32.mrb[0].mxu0
    %v1767 = vadd.f32 %v174, %v1766
    %v1768 = vpop.f32.mrb[0].mxu0
    %v1769 = vpop.f32.mrb[0].mxu0
    %v1770 = vpop.f32.mrb[0].mxu0
    %1771 = vdwg.mxu0
    %1773 = vrot.lane.b32.xlu0 %v1497, 120
    %v1774 = vpop.permute.xlu0 %1773
    %1775 = vrot.lane.b32.xlu0 %v1499, 88
    %v1776 = vpop.permute.xlu0 %1775
    %v1778 = vsel %vm184, %v1774, 0
    %v1781 = vsel %vm184, %v1776, 0
    %1783 = vmatprep.subr.bf16.mxu0 0
    %1784 = vmatpush1.bf16.xpose.msra.mxu0 %v1781
    %1785 = vmatprep.subr.bf16.mxu0 0
    %1786 = vmatpush1.bf16.xpose.msra.mxu0 0
    %1787 = vmatprep.subr.bf16.mxu0 0
    %1788 = vmatpush1.bf16.xpose.msra.mxu0 0
    %1789 = vmatprep.subr.bf16.mxu0 0
    %1790 = vmatpush1.bf16.xpose.msra.mxu0 0
    %1791 = vmatprep.subr.bf16.mxu0 0
    %1792 = vmatpush1.bf16.xpose.msra.mxu0 0
    %1793 = vmatprep.subr.bf16.mxu0 0
    %1794 = vmatpush1.bf16.xpose.msra.mxu0 0
    %1795 = vmatprep.subr.bf16.mxu0 0
    %1796 = vmatpush1.bf16.xpose.msra.mxu0 0
    %1797 = vmatprep.subr.bf16.mxu0 0
    %1798 = vmatpush1.bf16.xpose.msra.mxu0 0
    %1799 = vmatprep.subr.bf16.mxu0 0
    %1800 = vmatpush1.bf16.xpose.msra.mxu0 0
    %1801 = vmatprep.subr.bf16.mxu0 0
    %1802 = vmatpush1.bf16.xpose.msra.mxu0 0
    %1803 = vmatprep.subr.bf16.mxu0 0
    %1804 = vmatpush1.bf16.xpose.msra.mxu0 0
    %1805 = vmatprep.subr.bf16.mxu0 0
    %1806 = vmatpush1.bf16.xpose.msra.mxu0 0
    %1807 = vmatprep.subr.bf16.mxu0 0
    %1808 = vmatpush1.bf16.xpose.msra.mxu0 0
    %1809 = vmatprep.subr.bf16.mxu0 0
    %1810 = vmatpush1.bf16.xpose.msra.mxu0 0
    %1811 = vmatprep.subr.bf16.mxu0 0
    %1812 = vmatpush1.bf16.xpose.msra.mxu0 0
    %1813 = vmatprep.subr.bf16.mxu0 0
    %1814 = vmatpush1.bf16.xpose.msra.mxu0 0
    %1815 = vmatprep.mubr.bf16.mxu0 0
    %1816 = vmatmul.mubr.bf16.gmra.mrb[0].mxu0 %v1778
    %v1817 = vpop.f32.mrb[0].mxu0
    %v1818 = vadd.f32 %v178, %v1817
    %v1819 = vpop.f32.mrb[0].mxu0
    %v1820 = vpop.f32.mrb[0].mxu0
    %v1821 = vpop.f32.mrb[0].mxu0
    %1822 = vdwg.mxu0
    %v1823 = vsel %vm184, %v1767, -inf
    %1824 = vmax.xlane.f32.xlu0 %v1823
    %v1825 = vpop.xlane.xlu0 %1824
    %v1826 = vsel %vm184, %v1818, -inf
    %1827 = vmax.xlane.f32.xlu0 %v1826
    %v1828 = vpop.xlane.xlu0 %1827
    %v1829 = vsub.f32 %v1767, %v1825
    %v1830 = vsub.f32 %v1818, %v1828
    %v1831 = vmul.f32 %v1829, 1.442695
    %v1832 = vpow.pop %v1831
    %v1833 = vmul.f32 %v1830, 1.442695
    %v1834 = vpow.pop %v1833
    %v1835 = vsel %vm184, %v1832, 0.0
    %1836 = vadd.xlane.f32.xlu0 %v1835
    %v1837 = vpop.xlane.xlu0 %1836
    %v1838 = vsel %vm184, %v1834, 0.0
    %1839 = vadd.xlane.f32.xlu0 %v1838
    %v1840 = vpop.xlane.xlu0 %1839
    %v1841 = vrcp.pop %v1837
    %v1842 = vrcp.pop %v1840
    %v1843 = vmul.f32 %v1832, %v1841
    %v1844 = vmul.f32 %v1834, %v1842
    %s1845 = scalar_lea.vmem %s13, 80
    %1846 = vst.msk [vmem:[%s1845] sm:$0xff] %vm184, %v1843
    %1847 = vst.msk [vmem:[%s1845 + $0x8] sm:$0xff] %vm184, %v1844
    %v1848 = vpack.c.bf16 %v1843, %v1843
    %v1849 = vpack.c.bf16 %v1844, %v1844
    %1850 = vrot.lane.b32.xlu0 %v1498, 56
    %v1851 = vpop.permute.xlu0 %1850
    %v1853 = vsel %vm184, %v1848, 0
    %v1856 = vsel %vm311, %v1851, 0
    %1858 = vmatprep.subr.bf16.mxu0 0
    %1859 = vmatpush1.bf16.msra.mxu0 %v1856
    %1860 = vmatprep.subr.bf16.mxu0 0
    %1861 = vmatpush1.bf16.msra.mxu0 0
    %1862 = vmatprep.subr.bf16.mxu0 0
    %1863 = vmatpush1.bf16.msra.mxu0 0
    %1864 = vmatprep.subr.bf16.mxu0 0
    %1865 = vmatpush1.bf16.msra.mxu0 0
    %1866 = vmatprep.subr.bf16.mxu0 0
    %1867 = vmatpush1.bf16.msra.mxu0 0
    %1868 = vmatprep.subr.bf16.mxu0 0
    %1869 = vmatpush1.bf16.msra.mxu0 0
    %1870 = vmatprep.subr.bf16.mxu0 0
    %1871 = vmatpush1.bf16.msra.mxu0 0
    %1872 = vmatprep.subr.bf16.mxu0 0
    %1873 = vmatpush1.bf16.msra.mxu0 0
    %1874 = vmatprep.subr.bf16.mxu0 0
    %1875 = vmatpush1.bf16.msra.mxu0 0
    %1876 = vmatprep.subr.bf16.mxu0 0
    %1877 = vmatpush1.bf16.msra.mxu0 0
    %1878 = vmatprep.subr.bf16.mxu0 0
    %1879 = vmatpush1.bf16.msra.mxu0 0
    %1880 = vmatprep.subr.bf16.mxu0 0
    %1881 = vmatpush1.bf16.msra.mxu0 0
    %1882 = vmatprep.subr.bf16.mxu0 0
    %1883 = vmatpush1.bf16.msra.mxu0 0
    %1884 = vmatprep.subr.bf16.mxu0 0
    %1885 = vmatpush1.bf16.msra.mxu0 0
    %1886 = vmatprep.subr.bf16.mxu0 0
    %1887 = vmatpush1.bf16.msra.mxu0 0
    %1888 = vmatprep.subr.bf16.mxu0 0
    %1889 = vmatpush1.bf16.msra.mxu0 0
    %1890 = vmatprep.mubr.bf16.mxu0 0
    %1891 = vmatmul.mubr.bf16.gmra.mrb[0].mxu0 %v1853
    %v1892 = vpop.f32.mrb[0].mxu0
    %v1893 = vadd.f32 0.0, %v1892
    %v1894 = vpop.f32.mrb[0].mxu0
    %v1895 = vpop.f32.mrb[0].mxu0
    %v1896 = vpop.f32.mrb[0].mxu0
    %1897 = vdwg.mxu0
    %1898 = vrot.lane.b32.xlu0 %v1499, 56
    %v1899 = vpop.permute.xlu0 %1898
    %v1901 = vsel %vm184, %v1849, 0
    %v1904 = vsel %vm311, %v1899, 0
    %1906 = vmatprep.subr.bf16.mxu0 0
    %1907 = vmatpush1.bf16.msra.mxu0 %v1904
    %1908 = vmatprep.subr.bf16.mxu0 0
    %1909 = vmatpush1.bf16.msra.mxu0 0
    %1910 = vmatprep.subr.bf16.mxu0 0
    %1911 = vmatpush1.bf16.msra.mxu0 0
    %1912 = vmatprep.subr.bf16.mxu0 0
    %1913 = vmatpush1.bf16.msra.mxu0 0
    %1914 = vmatprep.subr.bf16.mxu0 0
    %1915 = vmatpush1.bf16.msra.mxu0 0
    %1916 = vmatprep.subr.bf16.mxu0 0
    %1917 = vmatpush1.bf16.msra.mxu0 0
    %1918 = vmatprep.subr.bf16.mxu0 0
    %1919 = vmatpush1.bf16.msra.mxu0 0
    %1920 = vmatprep.subr.bf16.mxu0 0
    %1921 = vmatpush1.bf16.msra.mxu0 0
    %1922 = vmatprep.subr.bf16.mxu0 0
    %1923 = vmatpush1.bf16.msra.mxu0 0
    %1924 = vmatprep.subr.bf16.mxu0 0
    %1925 = vmatpush1.bf16.msra.mxu0 0
    %1926 = vmatprep.subr.bf16.mxu0 0
    %1927 = vmatpush1.bf16.msra.mxu0 0
    %1928 = vmatprep.subr.bf16.mxu0 0
    %1929 = vmatpush1.bf16.msra.mxu0 0
    %1930 = vmatprep.subr.bf16.mxu0 0
    %1931 = vmatpush1.bf16.msra.mxu0 0
    %1932 = vmatprep.subr.bf16.mxu0 0
    %1933 = vmatpush1.bf16.msra.mxu0 0
    %1934 = vmatprep.subr.bf16.mxu0 0
    %1935 = vmatpush1.bf16.msra.mxu0 0
    %1936 = vmatprep.subr.bf16.mxu0 0
    %1937 = vmatpush1.bf16.msra.mxu0 0
    %1938 = vmatprep.mubr.bf16.mxu0 0
    %1939 = vmatmul.mubr.bf16.gmra.mrb[0].mxu0 %v1901
    %v1940 = vpop.f32.mrb[0].mxu0
    %v1941 = vadd.f32 0.0, %v1940
    %v1942 = vpop.f32.mrb[0].mxu0
    %v1943 = vpop.f32.mrb[0].mxu0
    %v1944 = vpop.f32.mrb[0].mxu0
    %1945 = vdwg.mxu0
    %1946 = vrot.lane.b32.xlu0 %v1496, 112
    %v1947 = vpop.permute.xlu0 %1946
    %1948 = vrot.lane.b32.xlu0 %v1498, 80
    %v1949 = vpop.permute.xlu0 %1948
    %v1951 = vsel %vm184, %v1947, 0
    %v1954 = vsel %vm184, %v1949, 0
    %1956 = vmatprep.subr.bf16.mxu0 0
    %1957 = vmatpush1.bf16.xpose.msra.mxu0 %v1954
    %1958 = vmatprep.subr.bf16.mxu0 0
    %1959 = vmatpush1.bf16.xpose.msra.mxu0 0
    %1960 = vmatprep.subr.bf16.mxu0 0
    %1961 = vmatpush1.bf16.xpose.msra.mxu0 0
    %1962 = vmatprep.subr.bf16.mxu0 0
    %1963 = vmatpush1.bf16.xpose.msra.mxu0 0
    %1964 = vmatprep.subr.bf16.mxu0 0
    %1965 = vmatpush1.bf16.xpose.msra.mxu0 0
    %1966 = vmatprep.subr.bf16.mxu0 0
    %1967 = vmatpush1.bf16.xpose.msra.mxu0 0
    %1968 = vmatprep.subr.bf16.mxu0 0
    %1969 = vmatpush1.bf16.xpose.msra.mxu0 0
    %1970 = vmatprep.subr.bf16.mxu0 0
    %1971 = vmatpush1.bf16.xpose.msra.mxu0 0
    %1972 = vmatprep.subr.bf16.mxu0 0
    %1973 = vmatpush1.bf16.xpose.msra.mxu0 0
    %1974 = vmatprep.subr.bf16.mxu0 0
    %1975 = vmatpush1.bf16.xpose.msra.mxu0 0
    %1976 = vmatprep.subr.bf16.mxu0 0
    %1977 = vmatpush1.bf16.xpose.msra.mxu0 0
    %1978 = vmatprep.subr.bf16.mxu0 0
    %1979 = vmatpush1.bf16.xpose.msra.mxu0 0
    %1980 = vmatprep.subr.bf16.mxu0 0
    %1981 = vmatpush1.bf16.xpose.msra.mxu0 0
    %1982 = vmatprep.subr.bf16.mxu0 0
    %1983 = vmatpush1.bf16.xpose.msra.mxu0 0
    %1984 = vmatprep.subr.bf16.mxu0 0
    %1985 = vmatpush1.bf16.xpose.msra.mxu0 0
    %1986 = vmatprep.subr.bf16.mxu0 0
    %1987 = vmatpush1.bf16.xpose.msra.mxu0 0
    %1988 = vmatprep.mubr.bf16.mxu0 0
    %1989 = vmatmul.mubr.bf16.gmra.mrb[0].mxu0 %v1951
    %v1990 = vpop.f32.mrb[0].mxu0
    %v1991 = vadd.f32 %v174, %v1990
    %v1992 = vpop.f32.mrb[0].mxu0
    %v1993 = vpop.f32.mrb[0].mxu0
    %v1994 = vpop.f32.mrb[0].mxu0
    %1995 = vdwg.mxu0
    %1996 = vrot.lane.b32.xlu0 %v1497, 112
    %v1997 = vpop.permute.xlu0 %1996
    %1998 = vrot.lane.b32.xlu0 %v1499, 80
    %v1999 = vpop.permute.xlu0 %1998
    %v2001 = vsel %vm184, %v1997, 0
    %v2004 = vsel %vm184, %v1999, 0
    %2006 = vmatprep.subr.bf16.mxu0 0
    %2007 = vmatpush1.bf16.xpose.msra.mxu0 %v2004
    %2008 = vmatprep.subr.bf16.mxu0 0
    %2009 = vmatpush1.bf16.xpose.msra.mxu0 0
    %2010 = vmatprep.subr.bf16.mxu0 0
    %2011 = vmatpush1.bf16.xpose.msra.mxu0 0
    %2012 = vmatprep.subr.bf16.mxu0 0
    %2013 = vmatpush1.bf16.xpose.msra.mxu0 0
    %2014 = vmatprep.subr.bf16.mxu0 0
    %2015 = vmatpush1.bf16.xpose.msra.mxu0 0
    %2016 = vmatprep.subr.bf16.mxu0 0
    %2017 = vmatpush1.bf16.xpose.msra.mxu0 0
    %2018 = vmatprep.subr.bf16.mxu0 0
    %2019 = vmatpush1.bf16.xpose.msra.mxu0 0
    %2020 = vmatprep.subr.bf16.mxu0 0
    %2021 = vmatpush1.bf16.xpose.msra.mxu0 0
    %2022 = vmatprep.subr.bf16.mxu0 0
    %2023 = vmatpush1.bf16.xpose.msra.mxu0 0
    %2024 = vmatprep.subr.bf16.mxu0 0
    %2025 = vmatpush1.bf16.xpose.msra.mxu0 0
    %2026 = vmatprep.subr.bf16.mxu0 0
    %2027 = vmatpush1.bf16.xpose.msra.mxu0 0
    %2028 = vmatprep.subr.bf16.mxu0 0
    %2029 = vmatpush1.bf16.xpose.msra.mxu0 0
    %2030 = vmatprep.subr.bf16.mxu0 0
    %2031 = vmatpush1.bf16.xpose.msra.mxu0 0
    %2032 = vmatprep.subr.bf16.mxu0 0
    %2033 = vmatpush1.bf16.xpose.msra.mxu0 0
    %2034 = vmatprep.subr.bf16.mxu0 0
    %2035 = vmatpush1.bf16.xpose.msra.mxu0 0
    %2036 = vmatprep.subr.bf16.mxu0 0
    %2037 = vmatpush1.bf16.xpose.msra.mxu0 0
    %2038 = vmatprep.mubr.bf16.mxu0 0
    %2039 = vmatmul.mubr.bf16.gmra.mrb[0].mxu0 %v2001
    %v2040 = vpop.f32.mrb[0].mxu0
    %v2041 = vadd.f32 %v178, %v2040
    %v2042 = vpop.f32.mrb[0].mxu0
    %v2043 = vpop.f32.mrb[0].mxu0
    %v2044 = vpop.f32.mrb[0].mxu0
    %2045 = vdwg.mxu0
    %v2046 = vsel %vm184, %v1991, -inf
    %2047 = vmax.xlane.f32.xlu0 %v2046
    %v2048 = vpop.xlane.xlu0 %2047
    %v2049 = vsel %vm184, %v2041, -inf
    %2050 = vmax.xlane.f32.xlu0 %v2049
    %v2051 = vpop.xlane.xlu0 %2050
    %v2052 = vsub.f32 %v1991, %v2048
    %v2053 = vsub.f32 %v2041, %v2051
    %v2054 = vmul.f32 %v2052, 1.442695
    %v2055 = vpow.pop %v2054
    %v2056 = vmul.f32 %v2053, 1.442695
    %v2057 = vpow.pop %v2056
    %v2058 = vsel %vm184, %v2055, 0.0
    %2059 = vadd.xlane.f32.xlu0 %v2058
    %v2060 = vpop.xlane.xlu0 %2059
    %v2061 = vsel %vm184, %v2057, 0.0
    %2062 = vadd.xlane.f32.xlu0 %v2061
    %v2063 = vpop.xlane.xlu0 %2062
    %v2064 = vrcp.pop %v2060
    %v2065 = vrcp.pop %v2063
    %v2066 = vmul.f32 %v2055, %v2064
    %v2067 = vmul.f32 %v2057, %v2065
    %s2068 = scalar_lea.vmem %s13, 96
    %2069 = vst.msk [vmem:[%s2068] sm:$0xff] %vm184, %v2066
    %2070 = vst.msk [vmem:[%s2068 + $0x8] sm:$0xff] %vm184, %v2067
    %v2071 = vpack.c.bf16 %v2066, %v2066
    %v2072 = vpack.c.bf16 %v2067, %v2067
    %2073 = vrot.lane.b32.xlu0 %v1498, 48
    %v2074 = vpop.permute.xlu0 %2073
    %v2076 = vsel %vm184, %v2071, 0
    %v2079 = vsel %vm311, %v2074, 0
    %2081 = vmatprep.subr.bf16.mxu0 0
    %2082 = vmatpush1.bf16.msra.mxu0 %v2079
    %2083 = vmatprep.subr.bf16.mxu0 0
    %2084 = vmatpush1.bf16.msra.mxu0 0
    %2085 = vmatprep.subr.bf16.mxu0 0
    %2086 = vmatpush1.bf16.msra.mxu0 0
    %2087 = vmatprep.subr.bf16.mxu0 0
    %2088 = vmatpush1.bf16.msra.mxu0 0
    %2089 = vmatprep.subr.bf16.mxu0 0
    %2090 = vmatpush1.bf16.msra.mxu0 0
    %2091 = vmatprep.subr.bf16.mxu0 0
    %2092 = vmatpush1.bf16.msra.mxu0 0
    %2093 = vmatprep.subr.bf16.mxu0 0
    %2094 = vmatpush1.bf16.msra.mxu0 0
    %2095 = vmatprep.subr.bf16.mxu0 0
    %2096 = vmatpush1.bf16.msra.mxu0 0
    %2097 = vmatprep.subr.bf16.mxu0 0
    %2098 = vmatpush1.bf16.msra.mxu0 0
    %2099 = vmatprep.subr.bf16.mxu0 0
    %2100 = vmatpush1.bf16.msra.mxu0 0
    %2101 = vmatprep.subr.bf16.mxu0 0
    %2102 = vmatpush1.bf16.msra.mxu0 0
    %2103 = vmatprep.subr.bf16.mxu0 0
    %2104 = vmatpush1.bf16.msra.mxu0 0
    %2105 = vmatprep.subr.bf16.mxu0 0
    %2106 = vmatpush1.bf16.msra.mxu0 0
    %2107 = vmatprep.subr.bf16.mxu0 0
    %2108 = vmatpush1.bf16.msra.mxu0 0
    %2109 = vmatprep.subr.bf16.mxu0 0
    %2110 = vmatpush1.bf16.msra.mxu0 0
    %2111 = vmatprep.subr.bf16.mxu0 0
    %2112 = vmatpush1.bf16.msra.mxu0 0
    %2113 = vmatprep.mubr.bf16.mxu0 0
    %2114 = vmatmul.mubr.bf16.gmra.mrb[0].mxu0 %v2076
    %v2115 = vpop.f32.mrb[0].mxu0
    %v2116 = vadd.f32 0.0, %v2115
    %v2117 = vpop.f32.mrb[0].mxu0
    %v2118 = vpop.f32.mrb[0].mxu0
    %v2119 = vpop.f32.mrb[0].mxu0
    %2120 = vdwg.mxu0
    %2121 = vrot.lane.b32.xlu0 %v1499, 48
    %v2122 = vpop.permute.xlu0 %2121
    %v2124 = vsel %vm184, %v2072, 0
    %v2127 = vsel %vm311, %v2122, 0
    %2129 = vmatprep.subr.bf16.mxu0 0
    %2130 = vmatpush1.bf16.msra.mxu0 %v2127
    %2131 = vmatprep.subr.bf16.mxu0 0
    %2132 = vmatpush1.bf16.msra.mxu0 0
    %2133 = vmatprep.subr.bf16.mxu0 0
    %2134 = vmatpush1.bf16.msra.mxu0 0
    %2135 = vmatprep.subr.bf16.mxu0 0
    %2136 = vmatpush1.bf16.msra.mxu0 0
    %2137 = vmatprep.subr.bf16.mxu0 0
    %2138 = vmatpush1.bf16.msra.mxu0 0
    %2139 = vmatprep.subr.bf16.mxu0 0
    %2140 = vmatpush1.bf16.msra.mxu0 0
    %2141 = vmatprep.subr.bf16.mxu0 0
    %2142 = vmatpush1.bf16.msra.mxu0 0
    %2143 = vmatprep.subr.bf16.mxu0 0
    %2144 = vmatpush1.bf16.msra.mxu0 0
    %2145 = vmatprep.subr.bf16.mxu0 0
    %2146 = vmatpush1.bf16.msra.mxu0 0
    %2147 = vmatprep.subr.bf16.mxu0 0
    %2148 = vmatpush1.bf16.msra.mxu0 0
    %2149 = vmatprep.subr.bf16.mxu0 0
    %2150 = vmatpush1.bf16.msra.mxu0 0
    %2151 = vmatprep.subr.bf16.mxu0 0
    %2152 = vmatpush1.bf16.msra.mxu0 0
    %2153 = vmatprep.subr.bf16.mxu0 0
    %2154 = vmatpush1.bf16.msra.mxu0 0
    %2155 = vmatprep.subr.bf16.mxu0 0
    %2156 = vmatpush1.bf16.msra.mxu0 0
    %2157 = vmatprep.subr.bf16.mxu0 0
    %2158 = vmatpush1.bf16.msra.mxu0 0
    %2159 = vmatprep.subr.bf16.mxu0 0
    %2160 = vmatpush1.bf16.msra.mxu0 0
    %2161 = vmatprep.mubr.bf16.mxu0 0
    %2162 = vmatmul.mubr.bf16.gmra.mrb[0].mxu0 %v2124
    %v2163 = vpop.f32.mrb[0].mxu0
    %v2164 = vadd.f32 0.0, %v2163
    %v2165 = vpop.f32.mrb[0].mxu0
    %v2166 = vpop.f32.mrb[0].mxu0
    %v2167 = vpop.f32.mrb[0].mxu0
    %2168 = vdwg.mxu0
    %2169 = vrot.lane.b32.xlu0 %v1496, 104
    %v2170 = vpop.permute.xlu0 %2169
    %2171 = vrot.lane.b32.xlu0 %v1498, 72
    %v2172 = vpop.permute.xlu0 %2171
    %v2174 = vsel %vm184, %v2170, 0
    %v2177 = vsel %vm184, %v2172, 0
    %2179 = vmatprep.subr.bf16.mxu0 0
    %2180 = vmatpush1.bf16.xpose.msra.mxu0 %v2177
    %2181 = vmatprep.subr.bf16.mxu0 0
    %2182 = vmatpush1.bf16.xpose.msra.mxu0 0
    %2183 = vmatprep.subr.bf16.mxu0 0
    %2184 = vmatpush1.bf16.xpose.msra.mxu0 0
    %2185 = vmatprep.subr.bf16.mxu0 0
    %2186 = vmatpush1.bf16.xpose.msra.mxu0 0
    %2187 = vmatprep.subr.bf16.mxu0 0
    %2188 = vmatpush1.bf16.xpose.msra.mxu0 0
    %2189 = vmatprep.subr.bf16.mxu0 0
    %2190 = vmatpush1.bf16.xpose.msra.mxu0 0
    %2191 = vmatprep.subr.bf16.mxu0 0
    %2192 = vmatpush1.bf16.xpose.msra.mxu0 0
    %2193 = vmatprep.subr.bf16.mxu0 0
    %2194 = vmatpush1.bf16.xpose.msra.mxu0 0
    %2195 = vmatprep.subr.bf16.mxu0 0
    %2196 = vmatpush1.bf16.xpose.msra.mxu0 0
    %2197 = vmatprep.subr.bf16.mxu0 0
    %2198 = vmatpush1.bf16.xpose.msra.mxu0 0
    %2199 = vmatprep.subr.bf16.mxu0 0
    %2200 = vmatpush1.bf16.xpose.msra.mxu0 0
    %2201 = vmatprep.subr.bf16.mxu0 0
    %2202 = vmatpush1.bf16.xpose.msra.mxu0 0
    %2203 = vmatprep.subr.bf16.mxu0 0
    %2204 = vmatpush1.bf16.xpose.msra.mxu0 0
    %2205 = vmatprep.subr.bf16.mxu0 0
    %2206 = vmatpush1.bf16.xpose.msra.mxu0 0
    %2207 = vmatprep.subr.bf16.mxu0 0
    %2208 = vmatpush1.bf16.xpose.msra.mxu0 0
    %2209 = vmatprep.subr.bf16.mxu0 0
    %2210 = vmatpush1.bf16.xpose.msra.mxu0 0
    %2211 = vmatprep.mubr.bf16.mxu0 0
    %2212 = vmatmul.mubr.bf16.gmra.mrb[0].mxu0 %v2174
    %v2213 = vpop.f32.mrb[0].mxu0
    %v2214 = vadd.f32 %v174, %v2213
    %v2215 = vpop.f32.mrb[0].mxu0
    %v2216 = vpop.f32.mrb[0].mxu0
    %v2217 = vpop.f32.mrb[0].mxu0
    %2218 = vdwg.mxu0
    %2219 = vrot.lane.b32.xlu0 %v1497, 104
    %v2220 = vpop.permute.xlu0 %2219
    %2221 = vrot.lane.b32.xlu0 %v1499, 72
    %v2222 = vpop.permute.xlu0 %2221
    %v2224 = vsel %vm184, %v2220, 0
    %v2227 = vsel %vm184, %v2222, 0
    %2229 = vmatprep.subr.bf16.mxu0 0
    %2230 = vmatpush1.bf16.xpose.msra.mxu0 %v2227
    %2231 = vmatprep.subr.bf16.mxu0 0
    %2232 = vmatpush1.bf16.xpose.msra.mxu0 0
    %2233 = vmatprep.subr.bf16.mxu0 0
    %2234 = vmatpush1.bf16.xpose.msra.mxu0 0
    %2235 = vmatprep.subr.bf16.mxu0 0
    %2236 = vmatpush1.bf16.xpose.msra.mxu0 0
    %2237 = vmatprep.subr.bf16.mxu0 0
    %2238 = vmatpush1.bf16.xpose.msra.mxu0 0
    %2239 = vmatprep.subr.bf16.mxu0 0
    %2240 = vmatpush1.bf16.xpose.msra.mxu0 0
    %2241 = vmatprep.subr.bf16.mxu0 0
    %2242 = vmatpush1.bf16.xpose.msra.mxu0 0
    %2243 = vmatprep.subr.bf16.mxu0 0
    %2244 = vmatpush1.bf16.xpose.msra.mxu0 0
    %2245 = vmatprep.subr.bf16.mxu0 0
    %2246 = vmatpush1.bf16.xpose.msra.mxu0 0
    %2247 = vmatprep.subr.bf16.mxu0 0
    %2248 = vmatpush1.bf16.xpose.msra.mxu0 0
    %2249 = vmatprep.subr.bf16.mxu0 0
    %2250 = vmatpush1.bf16.xpose.msra.mxu0 0
    %2251 = vmatprep.subr.bf16.mxu0 0
    %2252 = vmatpush1.bf16.xpose.msra.mxu0 0
    %2253 = vmatprep.subr.bf16.mxu0 0
    %2254 = vmatpush1.bf16.xpose.msra.mxu0 0
    %2255 = vmatprep.subr.bf16.mxu0 0
    %2256 = vmatpush1.bf16.xpose.msra.mxu0 0
    %2257 = vmatprep.subr.bf16.mxu0 0
    %2258 = vmatpush1.bf16.xpose.msra.mxu0 0
    %2259 = vmatprep.subr.bf16.mxu0 0
    %2260 = vmatpush1.bf16.xpose.msra.mxu0 0
    %2261 = vmatprep.mubr.bf16.mxu0 0
    %2262 = vmatmul.mubr.bf16.gmra.mrb[0].mxu0 %v2224
    %v2263 = vpop.f32.mrb[0].mxu0
    %v2264 = vadd.f32 %v178, %v2263
    %v2265 = vpop.f32.mrb[0].mxu0
    %v2266 = vpop.f32.mrb[0].mxu0
    %v2267 = vpop.f32.mrb[0].mxu0
    %2268 = vdwg.mxu0
    %v2269 = vsel %vm184, %v2214, -inf
    %2270 = vmax.xlane.f32.xlu0 %v2269
    %v2271 = vpop.xlane.xlu0 %2270
    %v2272 = vsel %vm184, %v2264, -inf
    %2273 = vmax.xlane.f32.xlu0 %v2272
    %v2274 = vpop.xlane.xlu0 %2273
    %v2275 = vsub.f32 %v2214, %v2271
    %v2276 = vsub.f32 %v2264, %v2274
    %v2277 = vmul.f32 %v2275, 1.442695
    %v2278 = vpow.pop %v2277
    %v2279 = vmul.f32 %v2276, 1.442695
    %v2280 = vpow.pop %v2279
    %v2281 = vsel %vm184, %v2278, 0.0
    %2282 = vadd.xlane.f32.xlu0 %v2281
    %v2283 = vpop.xlane.xlu0 %2282
    %v2284 = vsel %vm184, %v2280, 0.0
    %2285 = vadd.xlane.f32.xlu0 %v2284
    %v2286 = vpop.xlane.xlu0 %2285
    %v2287 = vrcp.pop %v2283
    %v2288 = vrcp.pop %v2286
    %v2289 = vmul.f32 %v2278, %v2287
    %v2290 = vmul.f32 %v2280, %v2288
    %s2291 = scalar_lea.vmem %s13, 112
    %2292 = vst.msk [vmem:[%s2291] sm:$0xff] %vm184, %v2289
    %2293 = vst.msk [vmem:[%s2291 + $0x8] sm:$0xff] %vm184, %v2290
    %v2294 = vpack.c.bf16 %v2289, %v2289
    %v2295 = vpack.c.bf16 %v2290, %v2290
    %2296 = vrot.lane.b32.xlu0 %v1498, 40
    %v2297 = vpop.permute.xlu0 %2296
    %v2299 = vsel %vm184, %v2294, 0
    %v2302 = vsel %vm311, %v2297, 0
    %2304 = vmatprep.subr.bf16.mxu0 0
    %2305 = vmatpush1.bf16.msra.mxu0 %v2302
    %2306 = vmatprep.subr.bf16.mxu0 0
    %2307 = vmatpush1.bf16.msra.mxu0 0
    %2308 = vmatprep.subr.bf16.mxu0 0
    %2309 = vmatpush1.bf16.msra.mxu0 0
    %2310 = vmatprep.subr.bf16.mxu0 0
    %2311 = vmatpush1.bf16.msra.mxu0 0
    %2312 = vmatprep.subr.bf16.mxu0 0
    %2313 = vmatpush1.bf16.msra.mxu0 0
    %2314 = vmatprep.subr.bf16.mxu0 0
    %2315 = vmatpush1.bf16.msra.mxu0 0
    %2316 = vmatprep.subr.bf16.mxu0 0
    %2317 = vmatpush1.bf16.msra.mxu0 0
    %2318 = vmatprep.subr.bf16.mxu0 0
    %2319 = vmatpush1.bf16.msra.mxu0 0
    %2320 = vmatprep.subr.bf16.mxu0 0
    %2321 = vmatpush1.bf16.msra.mxu0 0
    %2322 = vmatprep.subr.bf16.mxu0 0
    %2323 = vmatpush1.bf16.msra.mxu0 0
    %2324 = vmatprep.subr.bf16.mxu0 0
    %2325 = vmatpush1.bf16.msra.mxu0 0
    %2326 = vmatprep.subr.bf16.mxu0 0
    %2327 = vmatpush1.bf16.msra.mxu0 0
    %2328 = vmatprep.subr.bf16.mxu0 0
    %2329 = vmatpush1.bf16.msra.mxu0 0
    %2330 = vmatprep.subr.bf16.mxu0 0
    %2331 = vmatpush1.bf16.msra.mxu0 0
    %2332 = vmatprep.subr.bf16.mxu0 0
    %2333 = vmatpush1.bf16.msra.mxu0 0
    %2334 = vmatprep.subr.bf16.mxu0 0
    %2335 = vmatpush1.bf16.msra.mxu0 0
    %2336 = vmatprep.mubr.bf16.mxu0 0
    %2337 = vmatmul.mubr.bf16.gmra.mrb[0].mxu0 %v2299
    %v2338 = vpop.f32.mrb[0].mxu0
    %v2339 = vadd.f32 0.0, %v2338
    %v2340 = vpop.f32.mrb[0].mxu0
    %v2341 = vpop.f32.mrb[0].mxu0
    %v2342 = vpop.f32.mrb[0].mxu0
    %2343 = vdwg.mxu0
    %2344 = vrot.lane.b32.xlu0 %v1499, 40
    %v2345 = vpop.permute.xlu0 %2344
    %v2347 = vsel %vm184, %v2295, 0
    %v2350 = vsel %vm311, %v2345, 0
    %2352 = vmatprep.subr.bf16.mxu0 0
    %2353 = vmatpush1.bf16.msra.mxu0 %v2350
    %2354 = vmatprep.subr.bf16.mxu0 0
    %2355 = vmatpush1.bf16.msra.mxu0 0
    %2356 = vmatprep.subr.bf16.mxu0 0
    %2357 = vmatpush1.bf16.msra.mxu0 0
    %2358 = vmatprep.subr.bf16.mxu0 0
    %2359 = vmatpush1.bf16.msra.mxu0 0
    %2360 = vmatprep.subr.bf16.mxu0 0
    %2361 = vmatpush1.bf16.msra.mxu0 0
    %2362 = vmatprep.subr.bf16.mxu0 0
    %2363 = vmatpush1.bf16.msra.mxu0 0
    %2364 = vmatprep.subr.bf16.mxu0 0
    %2365 = vmatpush1.bf16.msra.mxu0 0
    %2366 = vmatprep.subr.bf16.mxu0 0
    %2367 = vmatpush1.bf16.msra.mxu0 0
    %2368 = vmatprep.subr.bf16.mxu0 0
    %2369 = vmatpush1.bf16.msra.mxu0 0
    %2370 = vmatprep.subr.bf16.mxu0 0
    %2371 = vmatpush1.bf16.msra.mxu0 0
    %2372 = vmatprep.subr.bf16.mxu0 0
    %2373 = vmatpush1.bf16.msra.mxu0 0
    %2374 = vmatprep.subr.bf16.mxu0 0
    %2375 = vmatpush1.bf16.msra.mxu0 0
    %2376 = vmatprep.subr.bf16.mxu0 0
    %2377 = vmatpush1.bf16.msra.mxu0 0
    %2378 = vmatprep.subr.bf16.mxu0 0
    %2379 = vmatpush1.bf16.msra.mxu0 0
    %2380 = vmatprep.subr.bf16.mxu0 0
    %2381 = vmatpush1.bf16.msra.mxu0 0
    %2382 = vmatprep.subr.bf16.mxu0 0
    %2383 = vmatpush1.bf16.msra.mxu0 0
    %2384 = vmatprep.mubr.bf16.mxu0 0
    %2385 = vmatmul.mubr.bf16.gmra.mrb[0].mxu0 %v2347
    %v2386 = vpop.f32.mrb[0].mxu0
    %v2387 = vadd.f32 0.0, %v2386
    %v2388 = vpop.f32.mrb[0].mxu0
    %v2389 = vpop.f32.mrb[0].mxu0
    %v2390 = vpop.f32.mrb[0].mxu0
    %2391 = vdwg.mxu0
    %2394 = vrot.lane.b32.xlu0 %v1893, 8
    %v2395 = vpop.permute.xlu0 %2394
    %2396 = vrot.lane.b32.xlu0 %v1941, 8
    %v2397 = vpop.permute.xlu0 %2396
    %2402 = vrot.lane.b32.xlu0 %v2116, 16
    %v2403 = vpop.permute.xlu0 %2402
    %2404 = vrot.lane.b32.xlu0 %v2164, 16
    %v2405 = vpop.permute.xlu0 %2404
    %2410 = vrot.lane.b32.xlu0 %v2339, 24
    %v2411 = vpop.permute.xlu0 %2410
    %2412 = vrot.lane.b32.xlu0 %v2387, 24
    %v2413 = vpop.permute.xlu0 %2412
    %v2416 = vsel %vm184, %v1668, %v2395
    %v2417 = vsel %vm184, %v1716, %v2397
    %v2418 = vsel %vm1100, %v2416, %v2403
    %v2419 = vsel %vm1100, %v2417, %v2405
    %v2420 = vsel %vm1103, %v2418, %v2411
    %v2421 = vsel %vm1103, %v2419, %v2413
    %v2422 = vpack.c.bf16 %v2421, %v2420
    %s2423 = scalar_lea.vmem %s5, 16
    %v2424 = vld [vmem:[%s2423] sm:$0xf]
    %v2425 = vld [vmem:[%s2423 + $0x4] sm:$0xf]
    %v2426 = vld [vmem:[%s2423 + $0x8] sm:$0xf]
    %v2427 = vld [vmem:[%s2423 + $0xc] sm:$0xf]
    %v2428 = vlaneseq
    %v2429 = vshrl.u32 %v2428, 7
    %v2430 = vsub.s32 0, %v2429
    %v2431 = vrot.slane %v1423, %v2430
    %v2436 = vunpack.c.l.b16 %v2424
    %v2437 = vunpack.c.l.b16 %v2425
    %v2438 = vunpack.c.l.b16 %v2426
    %v2439 = vunpack.c.l.b16 %v2427
    %v2440 = vpack.c.b16 %v2437, %v2436
    %v2441 = vpack.c.b16 %v2439, %v2438
    %v2445 = vsel %vm50, %v2422, 0
    %2447 = vmatprep.subr.bf16.mxu0 0
    %2448 = vmatpush1.bf16.msra.mxu0 %v2440
    %2449 = vmatprep.subr.bf16.mxu0 0
    %2450 = vmatpush1.bf16.msra.mxu0 %v2441
    %2451 = vmatprep.subr.bf16.mxu0 0
    %2452 = vmatpush1.bf16.msra.mxu0 0
    %2453 = vmatprep.subr.bf16.mxu0 0
    %2454 = vmatpush1.bf16.msra.mxu0 0
    %2455 = vmatprep.subr.bf16.mxu0 0
    %2456 = vmatpush1.bf16.msra.mxu0 0
    %2457 = vmatprep.subr.bf16.mxu0 0
    %2458 = vmatpush1.bf16.msra.mxu0 0
    %2459 = vmatprep.subr.bf16.mxu0 0
    %2460 = vmatpush1.bf16.msra.mxu0 0
    %2461 = vmatprep.subr.bf16.mxu0 0
    %2462 = vmatpush1.bf16.msra.mxu0 0
    %2463 = vmatprep.subr.bf16.mxu0 0
    %2464 = vmatpush1.bf16.msra.mxu0 0
    %2465 = vmatprep.subr.bf16.mxu0 0
    %2466 = vmatpush1.bf16.msra.mxu0 0
    %2467 = vmatprep.subr.bf16.mxu0 0
    %2468 = vmatpush1.bf16.msra.mxu0 0
    %2469 = vmatprep.subr.bf16.mxu0 0
    %2470 = vmatpush1.bf16.msra.mxu0 0
    %2471 = vmatprep.subr.bf16.mxu0 0
    %2472 = vmatpush1.bf16.msra.mxu0 0
    %2473 = vmatprep.subr.bf16.mxu0 0
    %2474 = vmatpush1.bf16.msra.mxu0 0
    %2475 = vmatprep.subr.bf16.mxu0 0
    %2476 = vmatpush1.bf16.msra.mxu0 0
    %2477 = vmatprep.subr.bf16.mxu0 0
    %2478 = vmatpush1.bf16.msra.mxu0 0
    %2479 = vmatprep.mubr.bf16.mxu0 0
    %2480 = vmatmul.mubr.bf16.gmra.mrb[0].mxu0 %v2445
    %v2481 = vpop.f32.mrb[0].mxu0
    %v2482 = vadd.f32 %v2431, %v2481
    %v2483 = vpop.f32.mrb[0].mxu0
    %v2484 = vpop.f32.mrb[0].mxu0
    %v2485 = vadd.f32 %v2431, %v2484
    %v2486 = vpop.f32.mrb[0].mxu0
    %2487 = vdwg.mxu0
    %v2488 = vadd.f32 %v2482, %v1417
    %v2489 = vadd.f32 %v2485, %v1418
    %v2490 = vsel %vm50, %v2488, 0.0
    %2491 = vadd.xlane.f32.xlu0 %v2490
    %v2492 = vpop.xlane.xlu0 %2491
    %v2493 = vsel %vm50, %v2489, 0.0
    %2494 = vadd.xlane.f32.xlu0 %v2493
    %v2495 = vpop.xlane.xlu0 %2494
    %v2496 = vmul.f32 %v2492, %v57
    %v2497 = vmul.f32 %v2495, %v57
    %v2498 = vsub.f32 %v2488, %v2496
    %v2499 = vsub.f32 %v2489, %v2497
    %v2500 = vmul.f32 %v2498, %v2498
    %v2501 = vmul.f32 %v2499, %v2499
    %v2502 = vsel %vm50, %v2500, 0.0
    %2503 = vadd.xlane.f32.xlu0 %v2502
    %v2504 = vpop.xlane.xlu0 %2503
    %v2505 = vsel %vm50, %v2501, 0.0
    %2506 = vadd.xlane.f32.xlu0 %v2505
    %v2507 = vpop.xlane.xlu0 %2506
    %v2508 = vmul.f32 %v2504, %v57
    %v2509 = vmul.f32 %v2507, %v57
    %v2510 = vadd.f32 %v2508, 1e-12
    %v2511 = vadd.f32 %v2509, 1e-12
    %v2512 = vrsqrt.pop %v2510
    %v2513 = vrsqrt.pop %v2511
    %v2514 = vmul.f32 %v2498, %v2512
    %v2515 = vmul.f32 %v2499, %v2513
    %v2516 = vlaneseq
    %v2517 = vshrl.u32 %v2516, 7
    %v2518 = vsub.s32 1, %v2517
    %v2519 = vrot.slane %v1423, %v2518
    %v2520 = vmul.f32 %v2514, %v2519
    %v2521 = vmul.f32 %v2515, %v2519
    %v2522 = vlaneseq
    %v2523 = vshrl.u32 %v2522, 7
    %v2524 = vsub.s32 2, %v2523
    %v2525 = vrot.slane %v1423, %v2524
    %v2526 = vadd.f32 %v2520, %v2525
    %v2527 = vadd.f32 %v2521, %v2525
    %v2528 = vpack.c.bf16 %v2527, %v2526
    %s2529 = scalar_lea.vmem %s6, 16
    %v2530 = vld [vmem:[%s2529] sm:$0xf]
    %v2531 = vld [vmem:[%s2529 + $0x4] sm:$0xf]
    %v2532 = vld [vmem:[%s2529 + $0x8] sm:$0xf]
    %v2533 = vld [vmem:[%s2529 + $0xc] sm:$0xf]
    %s2534 = scalar_lea.vmem %s7, 1
    %v2535 = vld [vmem:[%s2534] sm:$0x1]
    %v2537 = vlaneseq
    %v2538 = vshrl.u32 %v2537, 7
    %v2539 = vsub.s32 0, %v2538
    %v2540 = vrot.slane %v2535, %v2539
    %v2546 = vunpack.c.l.b16 %v2530
    %v2547 = vunpack.c.l.b16 %v2531
    %v2548 = vunpack.c.l.b16 %v2532
    %v2549 = vunpack.c.l.b16 %v2533
    %v2550 = vpack.c.b16 %v2547, %v2546
    %v2551 = vpack.c.b16 %v2549, %v2548
    %v2555 = vsel %vm50, %v2528, 0
    %2557 = vmatprep.subr.bf16.mxu0 0
    %2558 = vmatpush1.bf16.msra.mxu0 %v2550
    %2559 = vmatprep.subr.bf16.mxu0 0
    %2560 = vmatpush1.bf16.msra.mxu0 %v2551
    %2561 = vmatprep.subr.bf16.mxu0 0
    %2562 = vmatpush1.bf16.msra.mxu0 0
    %2563 = vmatprep.subr.bf16.mxu0 0
    %2564 = vmatpush1.bf16.msra.mxu0 0
    %2565 = vmatprep.subr.bf16.mxu0 0
    %2566 = vmatpush1.bf16.msra.mxu0 0
    %2567 = vmatprep.subr.bf16.mxu0 0
    %2568 = vmatpush1.bf16.msra.mxu0 0
    %2569 = vmatprep.subr.bf16.mxu0 0
    %2570 = vmatpush1.bf16.msra.mxu0 0
    %2571 = vmatprep.subr.bf16.mxu0 0
    %2572 = vmatpush1.bf16.msra.mxu0 0
    %2573 = vmatprep.subr.bf16.mxu0 0
    %2574 = vmatpush1.bf16.msra.mxu0 0
    %2575 = vmatprep.subr.bf16.mxu0 0
    %2576 = vmatpush1.bf16.msra.mxu0 0
    %2577 = vmatprep.subr.bf16.mxu0 0
    %2578 = vmatpush1.bf16.msra.mxu0 0
    %2579 = vmatprep.subr.bf16.mxu0 0
    %2580 = vmatpush1.bf16.msra.mxu0 0
    %2581 = vmatprep.subr.bf16.mxu0 0
    %2582 = vmatpush1.bf16.msra.mxu0 0
    %2583 = vmatprep.subr.bf16.mxu0 0
    %2584 = vmatpush1.bf16.msra.mxu0 0
    %2585 = vmatprep.subr.bf16.mxu0 0
    %2586 = vmatpush1.bf16.msra.mxu0 0
    %2587 = vmatprep.subr.bf16.mxu0 0
    %2588 = vmatpush1.bf16.msra.mxu0 0
    %2589 = vmatprep.mubr.bf16.mxu0 0
    %2590 = vmatmul.mubr.bf16.gmra.mrb[0].mxu0 %v2555
    %v2591 = vpop.f32.mrb[0].mxu0
    %v2592 = vadd.f32 %v2540, %v2591
    %v2593 = vpop.f32.mrb[0].mxu0
    %v2594 = vpop.f32.mrb[0].mxu0
    %v2595 = vadd.f32 %v2540, %v2594
    %v2596 = vpop.f32.mrb[0].mxu0
    %2597 = vdwg.mxu0
    %v2598 = vmul.f32 %v2592, %v2592
    %v2599 = vmul.f32 %v2595, %v2595
    %v2600 = vmul.f32 %v2592, %v2598
    %v2601 = vmul.f32 %v2595, %v2599
    %v2602 = vmul.f32 %v2600, 0.044715
    %v2603 = vmul.f32 %v2601, 0.044715
    %v2604 = vadd.f32 %v2592, %v2602
    %v2605 = vadd.f32 %v2595, %v2603
    %v2606 = vmul.f32 %v2604, 0.7978846
    %v2607 = vmul.f32 %v2605, 0.7978846
    %v2608 = vtanh.pop %v2606
    %v2609 = vtanh.pop %v2607
    %v2610 = vadd.f32 %v2608, 1.0
    %v2611 = vadd.f32 %v2609, 1.0
    %v2612 = vmul.f32 %v2610, 0.5
    %v2613 = vmul.f32 %v2611, 0.5
    %v2614 = vmul.f32 %v2592, %v2612
    %v2615 = vmul.f32 %v2595, %v2613
    %v2616 = vpack.c.bf16 %v2615, %v2614
    %s2617 = scalar_lea.vmem %s8, 32
    %v2618 = vld [vmem:[%s2617] sm:$0xf]
    %v2619 = vld [vmem:[%s2617 + $0x4] sm:$0xf]
    %v2620 = vld [vmem:[%s2617 + $0x8] sm:$0xf]
    %v2621 = vld [vmem:[%s2617 + $0xc] sm:$0xf]
    %v2622 = vld [vmem:[%s2617 + $0x10] sm:$0xf]
    %v2623 = vld [vmem:[%s2617 + $0x14] sm:$0xf]
    %v2624 = vld [vmem:[%s2617 + $0x18] sm:$0xf]
    %v2625 = vld [vmem:[%s2617 + $0x1c] sm:$0xf]
    %v2626 = vlaneseq
    %v2627 = vshrl.u32 %v2626, 7
    %v2628 = vsub.s32 3, %v2627
    %v2629 = vrot.slane %v1423, %v2628
    %v2638 = vunpack.c.l.b16 %v2618
    %v2639 = vunpack.c.l.b16 %v2619
    %v2640 = vunpack.c.l.b16 %v2620
    %v2641 = vunpack.c.l.b16 %v2621
    %v2642 = vunpack.c.l.b16 %v2622
    %v2643 = vunpack.c.l.b16 %v2623
    %v2644 = vunpack.c.l.b16 %v2624
    %v2645 = vunpack.c.l.b16 %v2625
    %v2646 = vpack.c.b16 %v2639, %v2638
    %v2647 = vpack.c.b16 %v2641, %v2640
    %v2648 = vpack.c.b16 %v2643, %v2642
    %v2649 = vpack.c.b16 %v2645, %v2644
    %v2655 = vsel %vm1334, %v2616, 0
    %2657 = vmatprep.subr.bf16.mxu0 0
    %2658 = vmatpush1.bf16.msra.mxu0 %v2646
    %2659 = vmatprep.subr.bf16.mxu0 0
    %2660 = vmatpush1.bf16.msra.mxu0 %v2647
    %2661 = vmatprep.subr.bf16.mxu0 0
    %2662 = vmatpush1.bf16.msra.mxu0 %v2648
    %2663 = vmatprep.subr.bf16.mxu0 0
    %2664 = vmatpush1.bf16.msra.mxu0 %v2649
    %2665 = vmatprep.subr.bf16.mxu0 0
    %2666 = vmatpush1.bf16.msra.mxu0 0
    %2667 = vmatprep.subr.bf16.mxu0 0
    %2668 = vmatpush1.bf16.msra.mxu0 0
    %2669 = vmatprep.subr.bf16.mxu0 0
    %2670 = vmatpush1.bf16.msra.mxu0 0
    %2671 = vmatprep.subr.bf16.mxu0 0
    %2672 = vmatpush1.bf16.msra.mxu0 0
    %2673 = vmatprep.subr.bf16.mxu0 0
    %2674 = vmatpush1.bf16.msra.mxu0 0
    %2675 = vmatprep.subr.bf16.mxu0 0
    %2676 = vmatpush1.bf16.msra.mxu0 0
    %2677 = vmatprep.subr.bf16.mxu0 0
    %2678 = vmatpush1.bf16.msra.mxu0 0
    %2679 = vmatprep.subr.bf16.mxu0 0
    %2680 = vmatpush1.bf16.msra.mxu0 0
    %2681 = vmatprep.subr.bf16.mxu0 0
    %2682 = vmatpush1.bf16.msra.mxu0 0
    %2683 = vmatprep.subr.bf16.mxu0 0
    %2684 = vmatpush1.bf16.msra.mxu0 0
    %2685 = vmatprep.subr.bf16.mxu0 0
    %2686 = vmatpush1.bf16.msra.mxu0 0
    %2687 = vmatprep.subr.bf16.mxu0 0
    %2688 = vmatpush1.bf16.msra.mxu0 0
    %2689 = vmatprep.mubr.bf16.mxu0 0
    %2690 = vmatmul.mubr.bf16.gmra.mrb[0].mxu0 %v2655
    %v2691 = vpop.f32.mrb[0].mxu0
    %v2692 = vadd.f32 %v2629, %v2691
    %v2693 = vpop.f32.mrb[0].mxu0
    %v2694 = vpop.f32.mrb[0].mxu0
    %v2695 = vadd.f32 %v2629, %v2694
    %v2696 = vpop.f32.mrb[0].mxu0
    %2697 = vdwg.mxu0
    %v2698 = vadd.f32 %v2692, %v2526
    %v2699 = vadd.f32 %v2695, %v2527
    %v2700 = vsel %vm50, %v2698, 0.0
    %2701 = vadd.xlane.f32.xlu0 %v2700
    %v2702 = vpop.xlane.xlu0 %2701
    %v2703 = vsel %vm50, %v2699, 0.0
    %2704 = vadd.xlane.f32.xlu0 %v2703
    %v2705 = vpop.xlane.xlu0 %2704
    %v2706 = vmul.f32 %v2702, %v57
    %v2707 = vmul.f32 %v2705, %v57
    %v2708 = vsub.f32 %v2698, %v2706
    %v2709 = vsub.f32 %v2699, %v2707
    %v2710 = vmul.f32 %v2708, %v2708
    %v2711 = vmul.f32 %v2709, %v2709
    %v2712 = vsel %vm50, %v2710, 0.0
    %2713 = vadd.xlane.f32.xlu0 %v2712
    %v2714 = vpop.xlane.xlu0 %2713
    %v2715 = vsel %vm50, %v2711, 0.0
    %2716 = vadd.xlane.f32.xlu0 %v2715
    %v2717 = vpop.xlane.xlu0 %2716
    %v2718 = vmul.f32 %v2714, %v57
    %v2719 = vmul.f32 %v2717, %v57
    %v2720 = vadd.f32 %v2718, 1e-12
    %v2721 = vadd.f32 %v2719, 1e-12
    %v2722 = vrsqrt.pop %v2720
    %v2723 = vrsqrt.pop %v2721
    %v2724 = vmul.f32 %v2708, %v2722
    %v2725 = vmul.f32 %v2709, %v2723
    %v2726 = vlaneseq
    %v2727 = vshrl.u32 %v2726, 7
    %v2728 = vsub.s32 4, %v2727
    %v2729 = vrot.slane %v1423, %v2728
    %v2730 = vmul.f32 %v2724, %v2729
    %v2731 = vmul.f32 %v2725, %v2729
    %v2732 = vlaneseq
    %v2733 = vshrl.u32 %v2732, 7
    %v2734 = vsub.s32 5, %v2733
    %v2735 = vrot.slane %v1423, %v2734
    %v2736 = vadd.f32 %v2730, %v2735
    %v2737 = vadd.f32 %v2731, %v2735
    %s2738 = scalar_lea.vmem %s12, 32
    %2739 = vst.msk [vmem:[%s2738] sm:$0xff] %vm50, %v2736
    %2740 = vst.msk [vmem:[%s2738 + $0x8] sm:$0xff] %vm50, %v2737
    %v2741 = vpack.c.bf16 %v2737, %v2736
    %v2742 = vld [vmem:[%s10] sm:$0xf]
    %v2743 = vld [vmem:[%s10 + $0x4] sm:$0xf]
    %v2744 = vld [vmem:[%s10 + $0x8] sm:$0xf]
    %v2745 = vld [vmem:[%s10 + $0xc] sm:$0xf]
    %v2746 = vld [vmem:[%s11] sm:$0x1]
    %v2748 = vlaneseq
    %v2749 = vshrl.u32 %v2748, 7
    %v2750 = vsub.s32 0, %v2749
    %v2751 = vrot.slane %v2746, %v2750
    %v2757 = vunpack.c.l.b16 %v2742
    %v2758 = vunpack.c.l.b16 %v2743
    %v2759 = vunpack.c.l.b16 %v2744
    %v2760 = vunpack.c.l.b16 %v2745
    %v2761 = vpack.c.b16 %v2758, %v2757
    %v2762 = vpack.c.b16 %v2760, %v2759
    %v2766 = vsel %vm50, %v2741, 0
    %2768 = vmatprep.subr.bf16.mxu0 0
    %2769 = vmatpush1.bf16.msra.mxu0 %v2761
    %2770 = vmatprep.subr.bf16.mxu0 0
    %2771 = vmatpush1.bf16.msra.mxu0 %v2762
    %2772 = vmatprep.subr.bf16.mxu0 0
    %2773 = vmatpush1.bf16.msra.mxu0 0
    %2774 = vmatprep.subr.bf16.mxu0 0
    %2775 = vmatpush1.bf16.msra.mxu0 0
    %2776 = vmatprep.subr.bf16.mxu0 0
    %2777 = vmatpush1.bf16.msra.mxu0 0
    %2778 = vmatprep.subr.bf16.mxu0 0
    %2779 = vmatpush1.bf16.msra.mxu0 0
    %2780 = vmatprep.subr.bf16.mxu0 0
    %2781 = vmatpush1.bf16.msra.mxu0 0
    %2782 = vmatprep.subr.bf16.mxu0 0
    %2783 = vmatpush1.bf16.msra.mxu0 0
    %2784 = vmatprep.subr.bf16.mxu0 0
    %2785 = vmatpush1.bf16.msra.mxu0 0
    %2786 = vmatprep.subr.bf16.mxu0 0
    %2787 = vmatpush1.bf16.msra.mxu0 0
    %2788 = vmatprep.subr.bf16.mxu0 0
    %2789 = vmatpush1.bf16.msra.mxu0 0
    %2790 = vmatprep.subr.bf16.mxu0 0
    %2791 = vmatpush1.bf16.msra.mxu0 0
    %2792 = vmatprep.subr.bf16.mxu0 0
    %2793 = vmatpush1.bf16.msra.mxu0 0
    %2794 = vmatprep.subr.bf16.mxu0 0
    %2795 = vmatpush1.bf16.msra.mxu0 0
    %2796 = vmatprep.subr.bf16.mxu0 0
    %2797 = vmatpush1.bf16.msra.mxu0 0
    %2798 = vmatprep.subr.bf16.mxu0 0
    %2799 = vmatpush1.bf16.msra.mxu0 0
    %2800 = vmatprep.mubr.bf16.mxu0 0
    %2801 = vmatmul.mubr.bf16.gmra.mrb[0].mxu0 %v2766
    %v2802 = vpop.f32.mrb[0].mxu0
    %v2803 = vadd.f32 %v2751, %v2802
    %v2804 = vpop.f32.mrb[0].mxu0
    %v2805 = vpop.f32.mrb[0].mxu0
    %v2806 = vadd.f32 %v2751, %v2805
    %v2807 = vpop.f32.mrb[0].mxu0
    %2808 = vdwg.mxu0
    %2811 = vrot.lane.b32.xlu0 %v2803, 96
    %v2812 = vpop.permute.xlu0 %2811
    %2813 = vrot.lane.b32.xlu0 %v2806, 96
    %v2814 = vpop.permute.xlu0 %2813
    %vm2817 = vcmask 15360
    %2818 = vst.msk [vmem:[%s14] sm:$0xff] %vm2817, %v2812
    %2819 = vst.msk [vmem:[%s14 + $0x8] sm:$0xff] %vm2817, %v2814
    %v2820 = vrot.slane %v2806, 7
    %vm2821 = vcmask 1041409
    %v2822 = vsel %vm2821, %v2820, %v2803
    %vm2824 = vcmask 254976
    %2825 = vst.msk [vmem:[#allocation2] sm:$0x3] %vm2824, %v2822
    // Predicated region
    $region50: #{distilbert_encoder_forward.1} parent=1 // pred_check
      _
    $region51: #{distilbert_encoder_forward.1} parent=1 // pred_check_branch
      %2827 = sbr.rel (0) target = $region53
    $region52: #{distilbert_encoder_forward.1} parent=1 // pred_region
      _
    $region53: #{distilbert_encoder_forward.1} parent=1 // pred_fallthru
      _
    // Predicated region
    $region54: #{distilbert_encoder_forward.1} parent=1 // pred_check
      _
    $region55: #{distilbert_encoder_forward.1} parent=1 // pred_check_branch
      %2829 = sbr.rel (0) target = $region57
    $region56: #{distilbert_encoder_forward.1} parent=1 // pred_region
      _
    $region57: #{distilbert_encoder_forward.1} parent=1 // pred_fallthru
      _
    // Predicated region
    $region58: #{distilbert_encoder_forward.1} parent=1 // pred_check
      _
    $region59: #{distilbert_encoder_forward.1} parent=1 // pred_check_branch
      %2831 = sbr.rel (0) target = $region61
    $region60: #{distilbert_encoder_forward.1} parent=1 // pred_region
      _
    $region61: #{distilbert_encoder_forward.1} parent=1 // pred_fallthru
      _
    // Predicated region
    $region62: #{distilbert_encoder_forward.1} parent=1 // pred_check
      _
    $region63: #{distilbert_encoder_forward.1} parent=1 // pred_check_branch
      %2833 = sbr.rel (0) target = $region65
    $region64: #{distilbert_encoder_forward.1} parent=1 // pred_region
      %s2835 = ssub.s32 32, 32
      %2836 = vsyncadd [#allocation3], %s2835
      %s2838 = sshll.u32 [#allocation2], 4
      %s2839 = int_to_ptr.vmem [resolvable:$true] %s2838
      %2841 = dma.vmem_to_hbm [thread:$0]  %s2839, 32, %s15, [#allocation3]
    $region65: #{distilbert_encoder_forward.1} parent=1 // pred_fallthru
      _
    // Predicated region
    $region66: #{distilbert_encoder_forward.1} parent=1 // pred_check
      _
    $region67: #{distilbert_encoder_forward.1} parent=1 // pred_check_branch
      %2843 = sbr.rel (0) target = $region69
    $region68: #{distilbert_encoder_forward.1} parent=1 // pred_region
      _
    $region69: #{distilbert_encoder_forward.1} parent=1 // pred_fallthru
      _
    // Predicated region
    $region70: #{distilbert_encoder_forward.1} parent=1 // pred_check
      _
    $region71: #{distilbert_encoder_forward.1} parent=1 // pred_check_branch
      %2845 = sbr.rel (0) target = $region73
    $region72: #{distilbert_encoder_forward.1} parent=1 // pred_region
      _
    $region73: #{distilbert_encoder_forward.1} parent=1 // pred_fallthru
      _
    // Predicated region
    $region74: #{distilbert_encoder_forward.1} parent=1 // pred_check
      _
    $region75: #{distilbert_encoder_forward.1} parent=1 // pred_check_branch
      %2847 = sbr.rel (0) target = $region77
    $region76: #{distilbert_encoder_forward.1} parent=1 // pred_region
      _
    $region77: #{distilbert_encoder_forward.1} parent=1 // pred_fallthru
      _
    // Predicated region
    $region78: #{distilbert_encoder_forward.1} parent=1 // pred_check
      _
    $region79: #{distilbert_encoder_forward.1} parent=1 // pred_check_branch
      %2849 = sbr.rel (0) target = $region81
    $region80: #{distilbert_encoder_forward.1} parent=1 // pred_region
      %2850 = dma.done [#allocation3], 32
    $region81: #{distilbert_encoder_forward.1} parent=1 // pred_fallthru
      _
    %2851 = vsyncpa [#allocation3], 1

</llo_original>
